<compile_context>
chip_gen: v6e
topology: v6e:2x2x1
jax: 0.10.0
libtpu: 0.0.40
codegen_flags: <defaults>
</compile_context>

<pallas_src>
import functools

import jax
import jax.numpy as jnp
from jax import lax
from jax.experimental import pallas as pl
from jax.experimental.pallas import tpu as pltpu


def _round_up(x, m):
    return ((x + m - 1) // m) * m


# ----------------------------- Pallas kernel --------------------------------

def _sss_kernel(frames_ref, basis_ref, out_ref, *, eps, half, tile_f):
    """One tile of frames -> per-bin partial L1 sums (bins 0..half-1).

    frames_ref : (2, TILE_F, n_fft) bf16; [0] = pred frames, [1] = true frames
    basis_ref  : (n_fft, n_fft)     bf16 windowed real-DFT basis
                 [cos(bins 0..half-1) | -sin(bins 0..half-1)]  (sin DC col == 0)
    out_ref    : (1, 2, half) f32; row 0 = per-bin sum |S_p - S_t|,
                 row 1 = per-bin sum |log2((S_t+eps)/(S_p+eps))|.
    """
    fr = frames_ref[...]
    n_fft = fr.shape[-1]

    # Pred and true stacked along M: a single MXU matmul per tile, the shared
    # RHS (basis) stays pushed for the whole tile.  (2, TILE_F, n) ->
    # (2*TILE_F, n) is a layout-preserving collapse (TILE_F is a multiple of 8).
    lhs = fr.reshape(2 * tile_f, n_fft)
    spec = jnp.dot(lhs, basis_ref[...], preferred_element_type=jnp.float32)

    # Power spectrogram (torchaudio power=2.0) for bins 0..half-1 of both
    # signals at once; the Nyquist bin (bin `half`) is handled outside the
    # kernel.  The sin-DC basis column is zero, so the DC bin is exact.
    sq = spec * spec                              # (2*TILE_F, n_fft) f32
    s_all = sq[:, :half] + sq[:, half:]           # re^2 + im^2
    s_p = s_all[:tile_f]                          # (TILE_F, half)
    s_t = s_all[tile_f:]

    # Zero-padded frame rows give s_p == s_t == 0 -> ~0 contribution to both
    # sums (exactly 0 for the linear term, log2(eps/eps) ~= 0 for the log term).
    lin = jnp.sum(jnp.abs(s_p - s_t), axis=0, keepdims=True)          # (1, half)
    # One log2 per element; the approx reciprocal runs on the EUP, off the
    # (binding) VPU path.
    ratio = (s_t + eps) * pl.reciprocal(s_p + eps, approx=True)
    logd = jnp.sum(jnp.abs(jnp.log2(ratio)), axis=0, keepdims=True)   # (1, half)

    out_ref[...] = jnp.concatenate([lin, logd], axis=0)[None, :, :]


# ------------------------------ JAX glue -------------------------------------

def _dft_basis(n_fft, dtype):
    """(n_fft, n_fft) windowed real-DFT basis: [cos | -sin] for bins 0..n_fft/2-1."""
    half = n_fft // 2
    n = jnp.arange(n_fft, dtype=jnp.float32)
    # periodic Hann window (torch.hann_window default).
    window = 0.5 * (1.0 - jnp.cos(2.0 * jnp.pi * n / n_fft))
    # Reduce angle mod n_fft in exact int arithmetic before the f32 trig.
    nk = (jnp.arange(n_fft, dtype=jnp.int32)[:, None]
          * jnp.arange(half, dtype=jnp.int32)[None, :]) % n_fft
    ang = (2.0 * jnp.pi / n_fft) * nk.astype(jnp.float32)
    cos_m = jnp.cos(ang) * window[:, None]
    sin_m = -jnp.sin(ang) * window[:, None]       # column 0 (DC) is exactly 0
    return jnp.concatenate([cos_m, sin_m], axis=1).astype(dtype)


def _nyquist_coeffs(xp_f32, n_fft, hop):
    """Real Nyquist-bin STFT coefficients via a tiny strided conv.

    xp_f32 : (S, B, T_pad) reflect-padded f32 waveforms.
    returns: (S, B, n_frames) f32.
    """
    s, b, t_pad = xp_f32.shape
    n = jnp.arange(n_fft, dtype=jnp.float32)
    window = 0.5 * (1.0 - jnp.cos(2.0 * jnp.pi * n / n_fft))
    v = window * jnp.where(n % 2 == 0, jnp.float32(1.0), jnp.float32(-1.0))
    lhs = xp_f32.reshape(s * b, 1, t_pad)
    rhs = v.reshape(1, 1, n_fft)
    out = lax.conv_general_dilated(
        lhs, rhs, window_strides=(hop,), padding="VALID",
        dimension_numbers=("NCH", "OIH", "NCH"),
        precision=lax.Precision.HIGHEST)
    return out.reshape(s, b, -1)


def _choose_tiling(f_rows):
    """Generation-aware frame tile / grid / vmem-limit selection."""
    try:
        vmem_cap = int(pltpu.get_tpu_info().vmem_capacity_bytes)
    except Exception:
        vmem_cap = 64 << 20                      # conservative (v7x-safe) fallback
    if vmem_cap > (64 << 20):                    # v5e / v6e: 128 MiB VMEM
        max_tile_f, vmem_limit = 2048, 96 << 20
    else:                                        # v7x-class: 64 MiB VMEM
        max_tile_f, vmem_limit = 1024, 48 << 20

    num_tiles = max(1, -(-f_rows // max_tile_f))
    # >=2 (even) tiles so both v7x TensorCores get work; on single-TC parts the
    # extra grid step costs ~0.35 us, negligible.
    if f_rows >= 16:
        num_tiles = max(2, num_tiles)
        num_tiles += num_tiles % 2
    tile_f = _round_up(-(-f_rows // num_tiles), 8)
    return tile_f, num_tiles, vmem_limit


def sss_loss(x_pred, x_true, n_fft, alpha=1.0, overlap=0.75, eps=1e-7,
             compute_dtype=jnp.bfloat16):
    """Single-scale spectral loss (SSSLoss.forward)."""
    hop = int(n_fft * (1 - overlap))
    b, t = x_true.shape
    half = n_fft // 2
    n_bins = half + 1
    n_frames = 1 + t // hop
    pad = n_fft // 2

    xs = jnp.stack([x_pred, x_true], axis=0).astype(jnp.float32)      # (2, B, T)
    xp = jnp.pad(xs, ((0, 0), (0, 0), (pad, pad)), mode="reflect")    # (2, B, T+n_fft)

    # Nyquist bin (imag == 0) via a tiny strided conv on the (small) waveform;
    # keeping it out of the kernel lets the kernel's RHS width be exactly n_fft.
    nyq = _nyquist_coeffs(xp, n_fft, hop)                             # (2, B, n_frames)

    # TODO(synk): frame inside the kernel from the padded waveform (hop-strided
    # reads) to avoid materializing the ~4x-expanded frame matrices in HBM.
    idx = jnp.arange(n_frames)[:, None] * hop + jnp.arange(n_fft)[None, :]
    frames = xp.astype(compute_dtype)[:, :, idx]                      # (2, B, n_frames, n_fft)
    frames = frames.reshape(2, b * n_frames, n_fft)
    f_rows = b * n_frames

    tile_f, num_tiles, vmem_limit = _choose_tiling(f_rows)
    f_pad = tile_f * num_tiles
    if f_pad > f_rows:
        frames = jnp.pad(frames, ((0, 0), (0, f_pad - f_rows), (0, 0)))

    basis = _dft_basis(n_fft, compute_dtype)
    kernel = functools.partial(_sss_kernel, eps=float(eps), half=half,
                               tile_f=tile_f)

    itemsize = jnp.dtype(compute_dtype).itemsize
    cost = pl.CostEstimate(
        flops=int(2 * 2 * f_pad * n_fft * n_fft),
        transcendentals=int(2 * f_pad * half),
        bytes_accessed=int(2 * f_pad * n_fft * itemsize
                           + n_fft * n_fft * itemsize
                           + num_tiles * 2 * half * 4),
    )

    partials = pl.pallas_call(
        kernel,
        out_shape=jax.ShapeDtypeStruct((num_tiles, 2, half), jnp.float32),
        grid=(num_tiles,),
        in_specs=[
            pl.BlockSpec((2, tile_f, n_fft), lambda i: (0, i, 0)),
            pl.BlockSpec((n_fft, n_fft), lambda i: (0, 0)),    # VMEM-resident
        ],
        out_specs=pl.BlockSpec((1, 2, half), lambda i: (i, 0, 0)),
        compiler_params=pltpu.CompilerParams(
            dimension_semantics=("parallel",),
            vmem_limit_bytes=vmem_limit,
        ),
        cost_estimate=cost,
    )(frames, basis)

    main = jnp.sum(partials, axis=(0, 2))                             # [lin, log]

    # Nyquist bin contribution (tiny, f32, in XLA).
    s_nyq_p = nyq[0] * nyq[0]
    s_nyq_t = nyq[1] * nyq[1]
    lin_total = main[0] + jnp.sum(jnp.abs(s_nyq_p - s_nyq_t))
    log_total = main[1] + jnp.sum(
        jnp.abs(jnp.log2((s_nyq_t + eps) / (s_nyq_p + eps))))

    # F.l1_loss(reduction='mean') over the (B, n_bins, n_frames) spectrogram.
    count = jnp.float32(b * n_bins * n_frames)
    return lin_total / count + alpha * (log_total / count)


def mss_loss(x_pred, x_true, n_ffts, alpha=1.0, overlap=0.75, eps=1e-7):
    """MSSLoss.forward (dict-key selection omitted; plain arrays in, scalar out)."""
    # TODO(synk): fuse the per-scale pallas_calls into one kernel; they execute
    # back-to-back on the same TensorCore.
    x_pred = x_pred[..., : x_true.shape[-1]]
    total = jnp.float32(0.0)
    for n_fft in n_ffts:
        total = total + sss_loss(x_pred, x_true, n_fft, alpha, overlap, eps)
    # PyTorch does `sum(losses).sum()` — a no-op on a scalar.
    return total


# ------------------------------- main ----------------------------------------

if __name__ == "__main__":
    key = jax.random.PRNGKey(0)
    k1, k2 = jax.random.split(key)

    batch, wave_len = 2, 4096
    n_ffts = (512, 256, 128)   # overlap=0.75 -> hops 128 / 64 / 32

    x_pred = jax.random.normal(k1, (batch, wave_len), dtype=jnp.float32)
    x_true = jax.random.normal(k2, (batch, wave_len), dtype=jnp.float32)

    loss_fn = jax.jit(functools.partial(
        mss_loss, n_ffts=n_ffts, alpha=1.0, overlap=0.75, eps=1e-7))

    loss = jax.block_until_ready(loss_fn(x_pred, x_true))
    assert loss.shape == () and bool(jnp.isfinite(loss))
    print("KERNEL_OK")
</pallas_src>

<mosaic_0001>
module attributes {stable_mosaic.version = 11 : i64} {
  func.func @_sss_kernel(%arg0: i32, %arg1: memref<2x136x128xbf16, #tpu.memory_space<vmem>>, %arg2: memref<128x128xbf16, #tpu.memory_space<vmem>>, %arg3: memref<1x2x64xf32, #tpu.memory_space<vmem>>) attributes {dimension_semantics = [#tpu.dimension_semantics<parallel>], iteration_bounds = array<i64: 2>, scalar_prefetch = 0 : i64, scratch_operands = 0 : i64, tpu.core_type = #tpu.core_type<tc>, window_params = [{transform_indices = @transform_0, window_bounds = array<i64: 2, 136, 128>}, {pipeline_mode = #tpu.pipeline_mode<synchronous>, transform_indices = @transform_1, window_bounds = array<i64: 128, 128>}, {transform_indices = @transform_2, window_bounds = array<i64: 1, 2, 64>}]} {
    %c0 = arith.constant 0 : index
    %c0_0 = arith.constant 0 : index
    %c0_1 = arith.constant 0 : index
    %0 = vector.load %arg1[%c0, %c0_0, %c0_1] : memref<2x136x128xbf16, #tpu.memory_space<vmem>>, vector<2x136x128xbf16>
    %1 = vector.shape_cast %0 : vector<2x136x128xbf16> to vector<272x128xbf16>
    %c0_2 = arith.constant 0 : index
    %c0_3 = arith.constant 0 : index
    %2 = vector.load %arg2[%c0_2, %c0_3] : memref<128x128xbf16, #tpu.memory_space<vmem>>, vector<128x128xbf16>
    %cst = arith.constant dense<0.000000e+00> : vector<272x128xf32>
    %3 = tpu.matmul %1, %2, %cst {dimension_numbers = #tpu.dot_dimension_numbers<[1], [0], [0], [1], [0, 0, 1, 1], [], []>} : vector<272x128xbf16>, vector<128x128xbf16>, vector<272x128xf32> -> vector<272x128xf32>
    %4 = arith.mulf %3, %3 : vector<272x128xf32>
    %5 = vector.extract_strided_slice %4 {offsets = [0, 0], sizes = [272, 64], strides = [1, 1]} : vector<272x128xf32> to vector<272x64xf32>
    %6 = vector.extract_strided_slice %4 {offsets = [0, 64], sizes = [272, 64], strides = [1, 1]} : vector<272x128xf32> to vector<272x64xf32>
    %7 = arith.addf %5, %6 : vector<272x64xf32>
    %8 = vector.extract_strided_slice %7 {offsets = [0, 0], sizes = [136, 64], strides = [1, 1]} : vector<272x64xf32> to vector<136x64xf32>
    %9 = vector.extract_strided_slice %7 {offsets = [136, 0], sizes = [136, 64], strides = [1, 1]} : vector<272x64xf32> to vector<136x64xf32>
    %10 = arith.subf %8, %9 : vector<136x64xf32>
    %11 = math.absf %10 : vector<136x64xf32>
    %cst_4 = arith.constant dense<0.000000e+00> : vector<64xf32>
    %12 = vector.multi_reduction <add>, %11, %cst_4 [0] : vector<136x64xf32> to vector<64xf32>
    %13 = vector.shape_cast %12 : vector<64xf32> to vector<1x64xf32>
    %cst_5 = arith.constant 1.000000e-07 : f32
    %14 = vector.broadcast %cst_5 : f32 to vector<136x64xf32>
    %15 = arith.addf %9, %14 : vector<136x64xf32>
    %cst_6 = arith.constant 1.000000e-07 : f32
    %16 = vector.broadcast %cst_6 : f32 to vector<136x64xf32>
    %17 = arith.addf %8, %16 : vector<136x64xf32>
    %18 = tpu.reciprocal %17 {approx = true} : vector<136x64xf32> -> vector<136x64xf32>
    %19 = arith.mulf %15, %18 : vector<136x64xf32>
    %20 = math.log %19 : vector<136x64xf32>
    %cst_7 = arith.constant 2.000000e+00 : f32
    %21 = math.log %cst_7 : f32
    %22 = vector.broadcast %21 : f32 to vector<136x64xf32>
    %23 = arith.divf %20, %22 : vector<136x64xf32>
    %24 = math.absf %23 : vector<136x64xf32>
    %cst_8 = arith.constant dense<0.000000e+00> : vector<64xf32>
    %25 = vector.multi_reduction <add>, %24, %cst_8 [0] : vector<136x64xf32> to vector<64xf32>
    %26 = vector.shape_cast %25 : vector<64xf32> to vector<1x64xf32>
    %27 = tpu.concatenate %13, %26 in 0 : vector<1x64xf32>, vector<1x64xf32> -> vector<2x64xf32>
    %28 = vector.shape_cast %27 : vector<2x64xf32> to vector<1x2x64xf32>
    %c0_9 = arith.constant 0 : index
    %c0_10 = arith.constant 0 : index
    %c0_11 = arith.constant 0 : index
    %29 = vector.load %arg3[%c0_9, %c0_10, %c0_11] : memref<1x2x64xf32, #tpu.memory_space<vmem>>, vector<1x2x64xf32>
    tpu.vector_store %arg3[%c0_9, %c0_10, %c0_11], %28 {strides = array<i32>} : memref<1x2x64xf32, #tpu.memory_space<vmem>>, vector<1x2x64xf32>,
    return
  }
  func.func @transform_0(%arg0: i32) -> (i32, i32, i32) {
    %c0_i32 = arith.constant 0 : i32
    %c0_i32_0 = arith.constant 0 : i32
    %c0_i32_1 = arith.constant 0 : i32
    return %c0_i32, %arg0, %c0_i32_0 : i32, i32, i32
  }
  func.func @transform_1(%arg0: i32) -> (i32, i32) {
    %c0_i32 = arith.constant 0 : i32
    %c0_i32_0 = arith.constant 0 : i32
    %c0_i32_1 = arith.constant 0 : i32
    return %c0_i32, %c0_i32_0 : i32, i32
  }
  func.func @transform_2(%arg0: i32) -> (i32, i32, i32) {
    %c0_i32 = arith.constant 0 : i32
    %c0_i32_0 = arith.constant 0 : i32
    %c0_i32_1 = arith.constant 0 : i32
    return %arg0, %c0_i32, %c0_i32_0 : i32, i32, i32
  }
}

module attributes {stable_mosaic.version = 11 : i64} {
  func.func @_sss_kernel(%arg0: i32, %arg1: memref<2x72x256xbf16, #tpu.memory_space<vmem>>, %arg2: memref<256x256xbf16, #tpu.memory_space<vmem>>, %arg3: memref<1x2x128xf32, #tpu.memory_space<vmem>>) attributes {dimension_semantics = [#tpu.dimension_semantics<parallel>], iteration_bounds = array<i64: 2>, scalar_prefetch = 0 : i64, scratch_operands = 0 : i64, tpu.core_type = #tpu.core_type<tc>, window_params = [{transform_indices = @transform_0, window_bounds = array<i64: 2, 72, 256>}, {pipeline_mode = #tpu.pipeline_mode<synchronous>, transform_indices = @transform_1, window_bounds = array<i64: 256, 256>}, {transform_indices = @transform_2, window_bounds = array<i64: 1, 2, 128>}]} {
    %c0 = arith.constant 0 : index
    %c0_0 = arith.constant 0 : index
    %c0_1 = arith.constant 0 : index
    %0 = vector.load %arg1[%c0, %c0_0, %c0_1] : memref<2x72x256xbf16, #tpu.memory_space<vmem>>, vector<2x72x256xbf16>
    %1 = vector.shape_cast %0 : vector<2x72x256xbf16> to vector<144x256xbf16>
    %c0_2 = arith.constant 0 : index
    %c0_3 = arith.constant 0 : index
    %2 = vector.load %arg2[%c0_2, %c0_3] : memref<256x256xbf16, #tpu.memory_space<vmem>>, vector<256x256xbf16>
    %cst = arith.constant dense<0.000000e+00> : vector<144x256xf32>
    %3 = tpu.matmul %1, %2, %cst {dimension_numbers = #tpu.dot_dimension_numbers<[1], [0], [0], [1], [0, 0, 1, 1], [], []>} : vector<144x256xbf16>, vector<256x256xbf16>, vector<144x256xf32> -> vector<144x256xf32>
    %4 = arith.mulf %3, %3 : vector<144x256xf32>
    %5 = vector.extract_strided_slice %4 {offsets = [0, 0], sizes = [144, 128], strides = [1, 1]} : vector<144x256xf32> to vector<144x128xf32>
    %6 = vector.extract_strided_slice %4 {offsets = [0, 128], sizes = [144, 128], strides = [1, 1]} : vector<144x256xf32> to vector<144x128xf32>
    %7 = arith.addf %5, %6 : vector<144x128xf32>
    %8 = vector.extract_strided_slice %7 {offsets = [0, 0], sizes = [72, 128], strides = [1, 1]} : vector<144x128xf32> to vector<72x128xf32>
    %9 = vector.extract_strided_slice %7 {offsets = [72, 0], sizes = [72, 128], strides = [1, 1]} : vector<144x128xf32> to vector<72x128xf32>
    %10 = arith.subf %8, %9 : vector<72x128xf32>
    %11 = math.absf %10 : vector<72x128xf32>
    %cst_4 = arith.constant dense<0.000000e+00> : vector<128xf32>
    %12 = vector.multi_reduction <add>, %11, %cst_4 [0] : vector<72x128xf32> to vector<128xf32>
    %13 = vector.shape_cast %12 : vector<128xf32> to vector<1x128xf32>
    %cst_5 = arith.constant 1.000000e-07 : f32
    %14 = vector.broadcast %cst_5 : f32 to vector<72x128xf32>
    %15 = arith.addf %9, %14 : vector<72x128xf32>
    %cst_6 = arith.constant 1.000000e-07 : f32
    %16 = vector.broadcast %cst_6 : f32 to vector<72x128xf32>
    %17 = arith.addf %8, %16 : vector<72x128xf32>
    %18 = tpu.reciprocal %17 {approx = true} : vector<72x128xf32> -> vector<72x128xf32>
    %19 = arith.mulf %15, %18 : vector<72x128xf32>
    %20 = math.log %19 : vector<72x128xf32>
    %cst_7 = arith.constant 2.000000e+00 : f32
    %21 = math.log %cst_7 : f32
    %22 = vector.broadcast %21 : f32 to vector<72x128xf32>
    %23 = arith.divf %20, %22 : vector<72x128xf32>
    %24 = math.absf %23 : vector<72x128xf32>
    %cst_8 = arith.constant dense<0.000000e+00> : vector<128xf32>
    %25 = vector.multi_reduction <add>, %24, %cst_8 [0] : vector<72x128xf32> to vector<128xf32>
    %26 = vector.shape_cast %25 : vector<128xf32> to vector<1x128xf32>
    %27 = tpu.concatenate %13, %26 in 0 : vector<1x128xf32>, vector<1x128xf32> -> vector<2x128xf32>
    %28 = vector.shape_cast %27 : vector<2x128xf32> to vector<1x2x128xf32>
    %c0_9 = arith.constant 0 : index
    %c0_10 = arith.constant 0 : index
    %c0_11 = arith.constant 0 : index
    %29 = vector.load %arg3[%c0_9, %c0_10, %c0_11] : memref<1x2x128xf32, #tpu.memory_space<vmem>>, vector<1x2x128xf32>
    tpu.vector_store %arg3[%c0_9, %c0_10, %c0_11], %28 {strides = array<i32>} : memref<1x2x128xf32, #tpu.memory_space<vmem>>, vector<1x2x128xf32>,
    return
  }
  func.func @transform_0(%arg0: i32) -> (i32, i32, i32) {
    %c0_i32 = arith.constant 0 : i32
    %c0_i32_0 = arith.constant 0 : i32
    %c0_i32_1 = arith.constant 0 : i32
    return %c0_i32, %arg0, %c0_i32_0 : i32, i32, i32
  }
  func.func @transform_1(%arg0: i32) -> (i32, i32) {
    %c0_i32 = arith.constant 0 : i32
    %c0_i32_0 = arith.constant 0 : i32
    %c0_i32_1 = arith.constant 0 : i32
    return %c0_i32, %c0_i32_0 : i32, i32
  }
  func.func @transform_2(%arg0: i32) -> (i32, i32, i32) {
    %c0_i32 = arith.constant 0 : i32
    %c0_i32_0 = arith.constant 0 : i32
    %c0_i32_1 = arith.constant 0 : i32
    return %arg0, %c0_i32, %c0_i32_0 : i32, i32, i32
  }
}

module attributes {stable_mosaic.version = 11 : i64} {
  func.func @_sss_kernel(%arg0: i32, %arg1: memref<2x40x512xbf16, #tpu.memory_space<vmem>>, %arg2: memref<512x512xbf16, #tpu.memory_space<vmem>>, %arg3: memref<1x2x256xf32, #tpu.memory_space<vmem>>) attributes {dimension_semantics = [#tpu.dimension_semantics<parallel>], iteration_bounds = array<i64: 2>, scalar_prefetch = 0 : i64, scratch_operands = 0 : i64, tpu.core_type = #tpu.core_type<tc>, window_params = [{transform_indices = @transform_0, window_bounds = array<i64: 2, 40, 512>}, {pipeline_mode = #tpu.pipeline_mode<synchronous>, transform_indices = @transform_1, window_bounds = array<i64: 512, 512>}, {transform_indices = @transform_2, window_bounds = array<i64: 1, 2, 256>}]} {
    %c0 = arith.constant 0 : index
    %c0_0 = arith.constant 0 : index
    %c0_1 = arith.constant 0 : index
    %0 = vector.load %arg1[%c0, %c0_0, %c0_1] : memref<2x40x512xbf16, #tpu.memory_space<vmem>>, vector<2x40x512xbf16>
    %1 = vector.shape_cast %0 : vector<2x40x512xbf16> to vector<80x512xbf16>
    %c0_2 = arith.constant 0 : index
    %c0_3 = arith.constant 0 : index
    %2 = vector.load %arg2[%c0_2, %c0_3] : memref<512x512xbf16, #tpu.memory_space<vmem>>, vector<512x512xbf16>
    %cst = arith.constant dense<0.000000e+00> : vector<80x512xf32>
    %3 = tpu.matmul %1, %2, %cst {dimension_numbers = #tpu.dot_dimension_numbers<[1], [0], [0], [1], [0, 0, 1, 1], [], []>} : vector<80x512xbf16>, vector<512x512xbf16>, vector<80x512xf32> -> vector<80x512xf32>
    %4 = arith.mulf %3, %3 : vector<80x512xf32>
    %5 = vector.extract_strided_slice %4 {offsets = [0, 0], sizes = [80, 256], strides = [1, 1]} : vector<80x512xf32> to vector<80x256xf32>
    %6 = vector.extract_strided_slice %4 {offsets = [0, 256], sizes = [80, 256], strides = [1, 1]} : vector<80x512xf32> to vector<80x256xf32>
    %7 = arith.addf %5, %6 : vector<80x256xf32>
    %8 = vector.extract_strided_slice %7 {offsets = [0, 0], sizes = [40, 256], strides = [1, 1]} : vector<80x256xf32> to vector<40x256xf32>
    %9 = vector.extract_strided_slice %7 {offsets = [40, 0], sizes = [40, 256], strides = [1, 1]} : vector<80x256xf32> to vector<40x256xf32>
    %10 = arith.subf %8, %9 : vector<40x256xf32>
    %11 = math.absf %10 : vector<40x256xf32>
    %cst_4 = arith.constant dense<0.000000e+00> : vector<256xf32>
    %12 = vector.multi_reduction <add>, %11, %cst_4 [0] : vector<40x256xf32> to vector<256xf32>
    %13 = vector.shape_cast %12 : vector<256xf32> to vector<1x256xf32>
    %cst_5 = arith.constant 1.000000e-07 : f32
    %14 = vector.broadcast %cst_5 : f32 to vector<40x256xf32>
    %15 = arith.addf %9, %14 : vector<40x256xf32>
    %cst_6 = arith.constant 1.000000e-07 : f32
    %16 = vector.broadcast %cst_6 : f32 to vector<40x256xf32>
    %17 = arith.addf %8, %16 : vector<40x256xf32>
    %18 = tpu.reciprocal %17 {approx = true} : vector<40x256xf32> -> vector<40x256xf32>
    %19 = arith.mulf %15, %18 : vector<40x256xf32>
    %20 = math.log %19 : vector<40x256xf32>
    %cst_7 = arith.constant 2.000000e+00 : f32
    %21 = math.log %cst_7 : f32
    %22 = vector.broadcast %21 : f32 to vector<40x256xf32>
    %23 = arith.divf %20, %22 : vector<40x256xf32>
    %24 = math.absf %23 : vector<40x256xf32>
    %cst_8 = arith.constant dense<0.000000e+00> : vector<256xf32>
    %25 = vector.multi_reduction <add>, %24, %cst_8 [0] : vector<40x256xf32> to vector<256xf32>
    %26 = vector.shape_cast %25 : vector<256xf32> to vector<1x256xf32>
    %27 = tpu.concatenate %13, %26 in 0 : vector<1x256xf32>, vector<1x256xf32> -> vector<2x256xf32>
    %28 = vector.shape_cast %27 : vector<2x256xf32> to vector<1x2x256xf32>
    %c0_9 = arith.constant 0 : index
    %c0_10 = arith.constant 0 : index
    %c0_11 = arith.constant 0 : index
    %29 = vector.load %arg3[%c0_9, %c0_10, %c0_11] : memref<1x2x256xf32, #tpu.memory_space<vmem>>, vector<1x2x256xf32>
    tpu.vector_store %arg3[%c0_9, %c0_10, %c0_11], %28 {strides = array<i32>} : memref<1x2x256xf32, #tpu.memory_space<vmem>>, vector<1x2x256xf32>,
    return
  }
  func.func @transform_0(%arg0: i32) -> (i32, i32, i32) {
    %c0_i32 = arith.constant 0 : i32
    %c0_i32_0 = arith.constant 0 : i32
    %c0_i32_1 = arith.constant 0 : i32
    return %c0_i32, %arg0, %c0_i32_0 : i32, i32, i32
  }
  func.func @transform_1(%arg0: i32) -> (i32, i32) {
    %c0_i32 = arith.constant 0 : i32
    %c0_i32_0 = arith.constant 0 : i32
    %c0_i32_1 = arith.constant 0 : i32
    return %c0_i32, %c0_i32_0 : i32, i32
  }
  func.func @transform_2(%arg0: i32) -> (i32, i32, i32) {
    %c0_i32 = arith.constant 0 : i32
    %c0_i32_0 = arith.constant 0 : i32
    %c0_i32_1 = arith.constant 0 : i32
    return %arg0, %c0_i32, %c0_i32_0 : i32, i32, i32
  }
}

</mosaic_0001>

<llo_original>
// kernel: mss_loss.5
$region0: #{mss_loss.5}
  #allocation0 [shape = 'u32[]', space=smem, size = 0x4, offset = 0x4, fixed_abs, tag = 'smem constant byte address 0x4 - core index']
  #allocation1 [shape = 'u32[144,128]{1,0:T(1,128)}', space=vmem, size = 0x12000, scoped, tag = 'internal scratch']
  %s0 = inlined_call_operand.vmem [shape: bf16[2,272,128], index: 0, kind: input, shape index: {}]
  %s1 = inlined_call_operand.vmem [shape: bf16[128,128], index: 1, kind: input, shape index: {}]
  %s2 = inlined_call_operand.vmem [shape: f32[2,2,64], index: 2, kind: output, shape index: {}]
  %s3 = sld [smem:[#allocation0]]
  $region82: #{mss_loss.5} parent=0
    _
  %s5 = ssub.s32 1, %s3
  %s6 = scalar_select 0, %s5, %s3
  $region1: #{mss_loss.5} parent=0
    #allocation2 [shape = 'u8[139264]{0}', space=vmem, size = 0x22000, scoped, tag = 'input window, operand 0']
    loop: start=0, step=1, limit=4
    $region2: #{mss_loss.5} parent=1 // loop_pre_header
      _
    $region3: #{mss_loss.5} parent=1 // loop_header
      %s8 = sphi 0, %s12
      %p9 = scmp.ge.s32.totalorder %s8, 4
      %s18 = sphi 0, %s20
      %s21 = sphi 0, %s18
      %s22 = sphi 0, %s21
      %s38 = sphi 0, %s22
      %s42 = sphi 0, %s42
      %s44 = sphi 0, %s42
      %s45 = sphi 0, %s44
      %s59 = sphi 0, %s45
      %s65 = sphi 0, %s67
      %s68 = sphi 0, %s65
      %s69 = sphi 0, %s68
      %s85 = sphi 0, %s69
    $region4: #{mss_loss.5} parent=1 // loop_header_branch
      %11 = sbr.rel (%p9) target = $region8
    $region5: #{mss_loss.5} parent=1 // loop_body
      %s13 = ssub.s32 %s8, 1
      %s14 = ssub.s32 %s8, 2
      %s15 = sadd.s32 %s8, 1
      %s16 = ssub.s32 %s8, %s15
      %p17 = scmp.eq.s32.totalorder %s16, 0
      %s19 = sadd.s32 %s18, 1
      %s20 = scalar_select %p17, %s18, %s19
      %p23 = pneg %p17
      %p24 = scmp.eq.s32.totalorder %s8, 1
      %p25 = por %p23, %p24
      %p26 = scmp.ne.s32.totalorder %s18, %s21
      %p27 = scmp.eq.s32.totalorder %s8, 0
      %p28 = por %p26, %p27
      %p29 = scmp.ne.s32.totalorder %s18, %s21
      %p30 = scmp.eq.s32.totalorder %s13, 1
      %p31 = por %p29, %p30
      %p32 = scmp.ne.s32.totalorder %s21, %s22
      %p33 = scmp.eq.s32.totalorder %s13, 0
      %p34 = por %p32, %p33
      %p35 = scmp.ne.s32.totalorder %s21, %s22
      %p36 = scmp.eq.s32.totalorder %s14, 1
      %p37 = por %p35, %p36
      %p39 = scmp.ne.s32.totalorder %s22, %s38
      %p40 = scmp.eq.s32.totalorder %s14, 0
      %p41 = por %p39, %p40
      %s43 = sadd.s32 %s42, 1
      %p46 = scmp.eq.s32.totalorder %s8, 1
      %p47 = scmp.ne.s32.totalorder %s42, %s44
      %p48 = scmp.eq.s32.totalorder %s8, 0
      %p49 = por %p47, %p48
      %p50 = scmp.ne.s32.totalorder %s42, %s44
      %p51 = scmp.eq.s32.totalorder %s13, 1
      %p52 = por %p50, %p51
      %p53 = scmp.ne.s32.totalorder %s44, %s45
      %p54 = scmp.eq.s32.totalorder %s13, 0
      %p55 = por %p53, %p54
      %p56 = scmp.ne.s32.totalorder %s44, %s45
      %p57 = scmp.eq.s32.totalorder %s14, 1
      %p58 = por %p56, %p57
      %p60 = scmp.ne.s32.totalorder %s45, %s59
      %p61 = scmp.eq.s32.totalorder %s14, 0
      %p62 = por %p60, %p61
      %s63 = ssub.s32 %s8, %s15
      %p64 = scmp.eq.s32.totalorder %s63, 0
      %s66 = sadd.s32 %s65, 1
      %s67 = scalar_select %p64, %s65, %s66
      %p70 = pneg %p64
      %p71 = scmp.eq.s32.totalorder %s8, 1
      %p72 = por %p70, %p71
      %p73 = scmp.ne.s32.totalorder %s65, %s68
      %p74 = scmp.eq.s32.totalorder %s8, 0
      %p75 = por %p73, %p74
      %p76 = scmp.ne.s32.totalorder %s65, %s68
      %p77 = scmp.eq.s32.totalorder %s13, 1
      %p78 = por %p76, %p77
      %p79 = scmp.ne.s32.totalorder %s68, %s69
      %p80 = scmp.eq.s32.totalorder %s13, 0
      %p81 = por %p79, %p80
      %p82 = scmp.ne.s32.totalorder %s68, %s69
      %p83 = scmp.eq.s32.totalorder %s14, 1
      %p84 = por %p82, %p83
      %p86 = scmp.ne.s32.totalorder %s69, %s85
      %p87 = scmp.eq.s32.totalorder %s14, 0
      %p88 = por %p86, %p87
      %p89 = scmp.le.s32.totalorder 1, %s8
      %p90 = scmp.lt.s32.totalorder %s8, 3
      %p91 = pnand %p89, %p90
      %p92 = pneg %p91
      // Predicated region
      $region9: #{mss_loss.5} parent=5 // pred_check
        _
      $region10: #{mss_loss.5} parent=5 // pred_check_branch
        %94 = sbr.rel (%p91) target = $region12
      $region11: #{mss_loss.5} parent=5 // pred_region
        %s95 = ssub.s32 %s8, 1
        // Predicated region
        $region13: #{mss_loss.5} parent=11 // pred_check
          %p96 = pneg %p55
        $region14: #{mss_loss.5} parent=11 // pred_check_branch
          %98 = sbr.rel (%p96) target = $region16
        $region15: #{mss_loss.5} parent=11 // pred_region
          _
        $region16: #{mss_loss.5} parent=11 // pred_fallthru
          _
      $region12: #{mss_loss.5} parent=5 // pred_fallthru
        _
      %p99 = scmp.lt.s32.totalorder %s8, 2
      // Predicated region
      $region17: #{mss_loss.5} parent=5 // pred_check
        %p100 = pneg %p99
      $region18: #{mss_loss.5} parent=5 // pred_check_branch
        %102 = sbr.rel (%p100) target = $region20
      $region19: #{mss_loss.5} parent=5 // pred_region
        // Predicated region
        $region21: #{mss_loss.5} parent=19 // pred_check
          %p103 = pneg %p28
        $region22: #{mss_loss.5} parent=19 // pred_check_branch
          %105 = sbr.rel (%p103) target = $region24
        $region23: #{mss_loss.5} parent=19 // pred_region
          %s106 = sand.u32 %s18, 1
          %s107 = sand.u32 %s18, 1
          %s108 = smul.addr %s107, 136
          %s109 = scalar_lea.vmem [#allocation2], %s108
          %s110 = smul.u32 17, %s8
          %s111 = smul.addr %s110, 4
          %s112 = scalar_lea.vmem %s0, %s111
          // Predicated region
          $region25: #{mss_loss.5} parent=23 // pred_check
            _
          $region26: #{mss_loss.5} parent=23 // pred_check_branch
            %114 = sbr.rel (0) target = $region28
          $region27: #{mss_loss.5} parent=23 // pred_region
            // Predicated region
            $region29: #{mss_loss.5} parent=27 // pred_check
              _
            $region30: #{mss_loss.5} parent=27 // pred_check_branch
              %116 = sbr.rel target = $region32
            $region31: #{mss_loss.5} parent=27 // pred_region
              // Predicated region
              $region44: #{mss_loss.5} parent=31 // pred_check
                _
              $region45: #{mss_loss.5} parent=31 // pred_check_branch
                %198 = sbr.rel (0) target = $region47
              $region46: #{mss_loss.5} parent=31 // pred_region
                loop: start=0, step=1, limit=1
                $region48: #{mss_loss.5} parent=46 // loop_pre_header
                  _
                $region49: #{mss_loss.5} parent=46 // loop_header
                  %s200 = sphi 0, %s204
                  %p201 = scmp.ge.s32.totalorder %s200, 1
                  %s205 = sphi %s112, %s112
                  %s206 = sphi %s109, %s109
                $region50: #{mss_loss.5} parent=46 // loop_header_branch
                  %203 = sbr.rel (%p201) target = $region54
                $region51: #{mss_loss.5} parent=46 // loop_body
                  _
                $region52: #{mss_loss.5} parent=46 // loop_footer
                  %s204 = sadd.s32 1, %s200
                $region53: #{mss_loss.5} parent=46 // loop_footer_branch
                  %199 = sbr.rel target = $region49
                $region54: #{mss_loss.5} parent=46 // loop_exit
                  _
                %s208 = ssub.s32 16, 1
                loop: start=0, step=1, limit=1
                $region55: #{mss_loss.5} parent=46 // loop_pre_header
                  _
                $region56: #{mss_loss.5} parent=46 // loop_header
                  %s210 = sphi 0, %s214
                  %p211 = scmp.ge.s32.totalorder %s210, 1
                  %s215 = sphi %s112, %s112
                  %s216 = sphi %s109, %s109
                $region57: #{mss_loss.5} parent=46 // loop_header_branch
                  %213 = sbr.rel (%p211) target = $region61
                $region58: #{mss_loss.5} parent=46 // loop_body
                  %v217 = vld [vmem:[%s215] sm:%s208]
                  %218 = vst [vmem:[%s216] sm:%s208] %v217
                  %v219 = vld [vmem:[%s215 + $0x4] sm:%s208]
                  %220 = vst [vmem:[%s216 + $0x4] sm:%s208] %v219
                  %v221 = vld [vmem:[%s215 + $0x8] sm:%s208]
                  %222 = vst [vmem:[%s216 + $0x8] sm:%s208] %v221
                  %v223 = vld [vmem:[%s215 + $0xc] sm:%s208]
                  %224 = vst [vmem:[%s216 + $0xc] sm:%s208] %v223
                  %v225 = vld [vmem:[%s215 + $0x10] sm:%s208]
                  %226 = vst [vmem:[%s216 + $0x10] sm:%s208] %v225
                  %v227 = vld [vmem:[%s215 + $0x14] sm:%s208]
                  %228 = vst [vmem:[%s216 + $0x14] sm:%s208] %v227
                  %v229 = vld [vmem:[%s215 + $0x18] sm:%s208]
                  %230 = vst [vmem:[%s216 + $0x18] sm:%s208] %v229
                  %v231 = vld [vmem:[%s215 + $0x1c] sm:%s208]
                  %232 = vst [vmem:[%s216 + $0x1c] sm:%s208] %v231
                  %v233 = vld [vmem:[%s215 + $0x20] sm:%s208]
                  %234 = vst [vmem:[%s216 + $0x20] sm:%s208] %v233
                  %v235 = vld [vmem:[%s215 + $0x24] sm:%s208]
                  %236 = vst [vmem:[%s216 + $0x24] sm:%s208] %v235
                  %v237 = vld [vmem:[%s215 + $0x28] sm:%s208]
                  %238 = vst [vmem:[%s216 + $0x28] sm:%s208] %v237
                  %v239 = vld [vmem:[%s215 + $0x2c] sm:%s208]
                  %240 = vst [vmem:[%s216 + $0x2c] sm:%s208] %v239
                  %v241 = vld [vmem:[%s215 + $0x30] sm:%s208]
                  %242 = vst [vmem:[%s216 + $0x30] sm:%s208] %v241
                  %v243 = vld [vmem:[%s215 + $0x34] sm:%s208]
                  %244 = vst [vmem:[%s216 + $0x34] sm:%s208] %v243
                  %v245 = vld [vmem:[%s215 + $0x38] sm:%s208]
                  %246 = vst [vmem:[%s216 + $0x38] sm:%s208] %v245
                  %v247 = vld [vmem:[%s215 + $0x3c] sm:%s208]
                  %248 = vst [vmem:[%s216 + $0x3c] sm:%s208] %v247
                  %v249 = vld [vmem:[%s215 + $0x40] sm:%s208]
                  %250 = vst [vmem:[%s216 + $0x40] sm:%s208] %v249
                  %v251 = vld [vmem:[%s215 + $0x88] sm:%s208]
                  %252 = vst [vmem:[%s216 + $0x44] sm:%s208] %v251
                  %v253 = vld [vmem:[%s215 + $0x8c] sm:%s208]
                  %254 = vst [vmem:[%s216 + $0x48] sm:%s208] %v253
                  %v255 = vld [vmem:[%s215 + $0x90] sm:%s208]
                  %256 = vst [vmem:[%s216 + $0x4c] sm:%s208] %v255
                  %v257 = vld [vmem:[%s215 + $0x94] sm:%s208]
                  %258 = vst [vmem:[%s216 + $0x50] sm:%s208] %v257
                  %v259 = vld [vmem:[%s215 + $0x98] sm:%s208]
                  %260 = vst [vmem:[%s216 + $0x54] sm:%s208] %v259
                  %v261 = vld [vmem:[%s215 + $0x9c] sm:%s208]
                  %262 = vst [vmem:[%s216 + $0x58] sm:%s208] %v261
                  %v263 = vld [vmem:[%s215 + $0xa0] sm:%s208]
                  %264 = vst [vmem:[%s216 + $0x5c] sm:%s208] %v263
                  %v265 = vld [vmem:[%s215 + $0xa4] sm:%s208]
                  %266 = vst [vmem:[%s216 + $0x60] sm:%s208] %v265
                  %v267 = vld [vmem:[%s215 + $0xa8] sm:%s208]
                  %268 = vst [vmem:[%s216 + $0x64] sm:%s208] %v267
                  %v269 = vld [vmem:[%s215 + $0xac] sm:%s208]
                  %270 = vst [vmem:[%s216 + $0x68] sm:%s208] %v269
                  %v271 = vld [vmem:[%s215 + $0xb0] sm:%s208]
                  %272 = vst [vmem:[%s216 + $0x6c] sm:%s208] %v271
                  %v273 = vld [vmem:[%s215 + $0xb4] sm:%s208]
                  %274 = vst [vmem:[%s216 + $0x70] sm:%s208] %v273
                  %v275 = vld [vmem:[%s215 + $0xb8] sm:%s208]
                  %276 = vst [vmem:[%s216 + $0x74] sm:%s208] %v275
                  %v277 = vld [vmem:[%s215 + $0xbc] sm:%s208]
                  %278 = vst [vmem:[%s216 + $0x78] sm:%s208] %v277
                  %v279 = vld [vmem:[%s215 + $0xc0] sm:%s208]
                  %280 = vst [vmem:[%s216 + $0x7c] sm:%s208] %v279
                  %v281 = vld [vmem:[%s215 + $0xc4] sm:%s208]
                  %282 = vst [vmem:[%s216 + $0x80] sm:%s208] %v281
                  %v283 = vld [vmem:[%s215 + $0xc8] sm:%s208]
                  %284 = vst [vmem:[%s216 + $0x84] sm:%s208] %v283
                $region59: #{mss_loss.5} parent=46 // loop_footer
                  %s214 = sadd.s32 1, %s210
                $region60: #{mss_loss.5} parent=46 // loop_footer_branch
                  %209 = sbr.rel target = $region56
                $region61: #{mss_loss.5} parent=46 // loop_exit
                  _
              $region47: #{mss_loss.5} parent=31 // pred_fallthru
                _
            $region32: #{mss_loss.5} parent=27 // pred_fallthru
              _
            // Predicated region
            $region33: #{mss_loss.5} parent=27 // pred_check
              _
            $region34: #{mss_loss.5} parent=27 // pred_check_branch
              %118 = sbr.rel (0) target = $region36
            $region35: #{mss_loss.5} parent=27 // pred_region
              %s120 = ssub.s32 16, 1
              loop: start=0, step=1, limit=1
              $region37: #{mss_loss.5} parent=35 // loop_pre_header
                _
              $region38: #{mss_loss.5} parent=35 // loop_header
                %s122 = sphi 0, %s126
                %p123 = scmp.ge.s32.totalorder %s122, 1
                %s127 = sphi %s112, %s112
                %s128 = sphi %s109, %s109
              $region39: #{mss_loss.5} parent=35 // loop_header_branch
                %125 = sbr.rel (%p123) target = $region43
              $region40: #{mss_loss.5} parent=35 // loop_body
                %v129 = vld [vmem:[%s127] sm:%s120]
                %130 = vst [vmem:[%s128] sm:%s120] %v129
                %v131 = vld [vmem:[%s127 + $0x4] sm:%s120]
                %132 = vst [vmem:[%s128 + $0x4] sm:%s120] %v131
                %v133 = vld [vmem:[%s127 + $0x8] sm:%s120]
                %134 = vst [vmem:[%s128 + $0x8] sm:%s120] %v133
                %v135 = vld [vmem:[%s127 + $0xc] sm:%s120]
                %136 = vst [vmem:[%s128 + $0xc] sm:%s120] %v135
                %v137 = vld [vmem:[%s127 + $0x10] sm:%s120]
                %138 = vst [vmem:[%s128 + $0x10] sm:%s120] %v137
                %v139 = vld [vmem:[%s127 + $0x14] sm:%s120]
                %140 = vst [vmem:[%s128 + $0x14] sm:%s120] %v139
                %v141 = vld [vmem:[%s127 + $0x18] sm:%s120]
                %142 = vst [vmem:[%s128 + $0x18] sm:%s120] %v141
                %v143 = vld [vmem:[%s127 + $0x1c] sm:%s120]
                %144 = vst [vmem:[%s128 + $0x1c] sm:%s120] %v143
                %v145 = vld [vmem:[%s127 + $0x20] sm:%s120]
                %146 = vst [vmem:[%s128 + $0x20] sm:%s120] %v145
                %v147 = vld [vmem:[%s127 + $0x24] sm:%s120]
                %148 = vst [vmem:[%s128 + $0x24] sm:%s120] %v147
                %v149 = vld [vmem:[%s127 + $0x28] sm:%s120]
                %150 = vst [vmem:[%s128 + $0x28] sm:%s120] %v149
                %v151 = vld [vmem:[%s127 + $0x2c] sm:%s120]
                %152 = vst [vmem:[%s128 + $0x2c] sm:%s120] %v151
                %v153 = vld [vmem:[%s127 + $0x30] sm:%s120]
                %154 = vst [vmem:[%s128 + $0x30] sm:%s120] %v153
                %v155 = vld [vmem:[%s127 + $0x34] sm:%s120]
                %156 = vst [vmem:[%s128 + $0x34] sm:%s120] %v155
                %v157 = vld [vmem:[%s127 + $0x38] sm:%s120]
                %158 = vst [vmem:[%s128 + $0x38] sm:%s120] %v157
                %v159 = vld [vmem:[%s127 + $0x3c] sm:%s120]
                %160 = vst [vmem:[%s128 + $0x3c] sm:%s120] %v159
                %v161 = vld [vmem:[%s127 + $0x40] sm:%s120]
                %162 = vst [vmem:[%s128 + $0x40] sm:%s120] %v161
                %v163 = vld [vmem:[%s127 + $0x88] sm:%s120]
                %164 = vst [vmem:[%s128 + $0x44] sm:%s120] %v163
                %v165 = vld [vmem:[%s127 + $0x8c] sm:%s120]
                %166 = vst [vmem:[%s128 + $0x48] sm:%s120] %v165
                %v167 = vld [vmem:[%s127 + $0x90] sm:%s120]
                %168 = vst [vmem:[%s128 + $0x4c] sm:%s120] %v167
                %v169 = vld [vmem:[%s127 + $0x94] sm:%s120]
                %170 = vst [vmem:[%s128 + $0x50] sm:%s120] %v169
                %v171 = vld [vmem:[%s127 + $0x98] sm:%s120]
                %172 = vst [vmem:[%s128 + $0x54] sm:%s120] %v171
                %v173 = vld [vmem:[%s127 + $0x9c] sm:%s120]
                %174 = vst [vmem:[%s128 + $0x58] sm:%s120] %v173
                %v175 = vld [vmem:[%s127 + $0xa0] sm:%s120]
                %176 = vst [vmem:[%s128 + $0x5c] sm:%s120] %v175
                %v177 = vld [vmem:[%s127 + $0xa4] sm:%s120]
                %178 = vst [vmem:[%s128 + $0x60] sm:%s120] %v177
                %v179 = vld [vmem:[%s127 + $0xa8] sm:%s120]
                %180 = vst [vmem:[%s128 + $0x64] sm:%s120] %v179
                %v181 = vld [vmem:[%s127 + $0xac] sm:%s120]
                %182 = vst [vmem:[%s128 + $0x68] sm:%s120] %v181
                %v183 = vld [vmem:[%s127 + $0xb0] sm:%s120]
                %184 = vst [vmem:[%s128 + $0x6c] sm:%s120] %v183
                %v185 = vld [vmem:[%s127 + $0xb4] sm:%s120]
                %186 = vst [vmem:[%s128 + $0x70] sm:%s120] %v185
                %v187 = vld [vmem:[%s127 + $0xb8] sm:%s120]
                %188 = vst [vmem:[%s128 + $0x74] sm:%s120] %v187
                %v189 = vld [vmem:[%s127 + $0xbc] sm:%s120]
                %190 = vst [vmem:[%s128 + $0x78] sm:%s120] %v189
                %v191 = vld [vmem:[%s127 + $0xc0] sm:%s120]
                %192 = vst [vmem:[%s128 + $0x7c] sm:%s120] %v191
                %v193 = vld [vmem:[%s127 + $0xc4] sm:%s120]
                %194 = vst [vmem:[%s128 + $0x80] sm:%s120] %v193
                %v195 = vld [vmem:[%s127 + $0xc8] sm:%s120]
                %196 = vst [vmem:[%s128 + $0x84] sm:%s120] %v195
              $region41: #{mss_loss.5} parent=35 // loop_footer
                %s126 = sadd.s32 1, %s122
              $region42: #{mss_loss.5} parent=35 // loop_footer_branch
                %121 = sbr.rel target = $region38
              $region43: #{mss_loss.5} parent=35 // loop_exit
                _
            $region36: #{mss_loss.5} parent=27 // pred_fallthru
              _
          $region28: #{mss_loss.5} parent=23 // pred_fallthru
            _
          %285 = vnop
        $region24: #{mss_loss.5} parent=19 // pred_fallthru
          _
      $region20: #{mss_loss.5} parent=5 // pred_fallthru
        _
      %p286 = scmp.le.s32.totalorder 1, %s8
      %p287 = scmp.lt.s32.totalorder %s8, 3
      %p288 = pnand %p286, %p287
      %p289 = pneg %p288
      // Predicated region
      $region62: #{mss_loss.5} parent=5 // pred_check
        _
      $region63: #{mss_loss.5} parent=5 // pred_check_branch
        %291 = sbr.rel (%p288) target = $region65
      $region64: #{mss_loss.5} parent=5 // pred_region
        %s292 = ssub.s32 %s8, 1
        %s293 = sand.u32 %s21, 1
        %s294 = sand.u32 %s21, 1
        %s295 = smul.addr %s294, 136
        %s296 = scalar_lea.vmem [#allocation2], %s295
        // Predicated region
        $region66: #{mss_loss.5} parent=64 // pred_check
          %p297 = pneg %p34
        $region67: #{mss_loss.5} parent=64 // pred_check_branch
          %299 = sbr.rel (%p297) target = $region69
        $region68: #{mss_loss.5} parent=64 // pred_region
          _
        $region69: #{mss_loss.5} parent=64 // pred_fallthru
          _
        %s300 = sand.u32 %s21, 1
        %s301 = sand.u32 %s21, 1
        %s302 = smul.addr %s301, 136
        %s303 = scalar_lea.vmem [#allocation2], %s302
        %p304 = pneg %p34
        %p305 = pneg %p31
        %p306 = pneg %p55
        %p307 = pneg %p52
        %p308 = pneg %p81
        %p309 = pneg %p78
        %p310 = scmp.lt.s32.totalorder %s13, 1
        %s311 = scalar_select %p310, %s13, 1
        %s312 = smul.addr %s311, 2
        %s313 = scalar_lea.vmem %s2, %s312
        %s314 = smul.u32 17, %s13
        %p315 = scmp.lt.s32.totalorder %s13, 1
        %s316 = scalar_select %p315, %s13, 1
        %s317 = smul.addr %s316, 2
        %s318 = scalar_lea.vmem %s2, %s317
        %v320 = vld [vmem:[%s296] sm:$0xf]
        %v321 = vld [vmem:[%s296 + $0x4] sm:$0xf]
        %v322 = vld [vmem:[%s296 + $0x8] sm:$0xf]
        %v323 = vld [vmem:[%s296 + $0xc] sm:$0xf]
        %v324 = vld [vmem:[%s296 + $0x10] sm:$0xf]
        %v325 = vld [vmem:[%s296 + $0x14] sm:$0xf]
        %v326 = vld [vmem:[%s296 + $0x18] sm:$0xf]
        %v327 = vld [vmem:[%s296 + $0x1c] sm:$0xf]
        %v328 = vld [vmem:[%s296 + $0x20] sm:$0xf]
        %v329 = vld [vmem:[%s296 + $0x24] sm:$0xf]
        %v330 = vld [vmem:[%s296 + $0x28] sm:$0xf]
        %v331 = vld [vmem:[%s296 + $0x2c] sm:$0xf]
        %v332 = vld [vmem:[%s296 + $0x30] sm:$0xf]
        %v333 = vld [vmem:[%s296 + $0x34] sm:$0xf]
        %v334 = vld [vmem:[%s296 + $0x38] sm:$0xf]
        %v335 = vld [vmem:[%s296 + $0x3c] sm:$0xf]
        %v336 = vld [vmem:[%s296 + $0x40] sm:$0xf]
        %v337 = vld [vmem:[%s296 + $0x44] sm:$0xf]
        %v338 = vld [vmem:[%s296 + $0x48] sm:$0xf]
        %v339 = vld [vmem:[%s296 + $0x4c] sm:$0xf]
        %v340 = vld [vmem:[%s296 + $0x50] sm:$0xf]
        %v341 = vld [vmem:[%s296 + $0x54] sm:$0xf]
        %v342 = vld [vmem:[%s296 + $0x58] sm:$0xf]
        %v343 = vld [vmem:[%s296 + $0x5c] sm:$0xf]
        %v344 = vld [vmem:[%s296 + $0x60] sm:$0xf]
        %v345 = vld [vmem:[%s296 + $0x64] sm:$0xf]
        %v346 = vld [vmem:[%s296 + $0x68] sm:$0xf]
        %v347 = vld [vmem:[%s296 + $0x6c] sm:$0xf]
        %v348 = vld [vmem:[%s296 + $0x70] sm:$0xf]
        %v349 = vld [vmem:[%s296 + $0x74] sm:$0xf]
        %v350 = vld [vmem:[%s296 + $0x78] sm:$0xf]
        %v351 = vld [vmem:[%s296 + $0x7c] sm:$0xf]
        %v352 = vld [vmem:[%s296 + $0x80] sm:$0xf]
        %v353 = vld [vmem:[%s296 + $0x84] sm:$0xf]
        %v354 = vld [vmem:[%s1] sm:$0xf]
        %v355 = vld [vmem:[%s1 + $0x4] sm:$0xf]
        %v356 = vld [vmem:[%s1 + $0x8] sm:$0xf]
        %v357 = vld [vmem:[%s1 + $0xc] sm:$0xf]
        %v358 = vld [vmem:[%s1 + $0x10] sm:$0xf]
        %v359 = vld [vmem:[%s1 + $0x14] sm:$0xf]
        %v360 = vld [vmem:[%s1 + $0x18] sm:$0xf]
        %v361 = vld [vmem:[%s1 + $0x1c] sm:$0xf]
        %v362 = vld [vmem:[%s1 + $0x20] sm:$0xf]
        %v363 = vld [vmem:[%s1 + $0x24] sm:$0xf]
        %v364 = vld [vmem:[%s1 + $0x28] sm:$0xf]
        %v365 = vld [vmem:[%s1 + $0x2c] sm:$0xf]
        %v366 = vld [vmem:[%s1 + $0x30] sm:$0xf]
        %v367 = vld [vmem:[%s1 + $0x34] sm:$0xf]
        %v368 = vld [vmem:[%s1 + $0x38] sm:$0xf]
        %v369 = vld [vmem:[%s1 + $0x3c] sm:$0xf]
        %v404 = vunpack.c.l.b16 %v320
        %v405 = vunpack.c.l.b16 %v321
        %v406 = vunpack.c.l.b16 %v322
        %v407 = vunpack.c.l.b16 %v323
        %v408 = vunpack.c.l.b16 %v324
        %v409 = vunpack.c.l.b16 %v325
        %v410 = vunpack.c.l.b16 %v326
        %v411 = vunpack.c.l.b16 %v327
        %v412 = vunpack.c.l.b16 %v328
        %v413 = vunpack.c.l.b16 %v329
        %v414 = vunpack.c.l.b16 %v330
        %v415 = vunpack.c.l.b16 %v331
        %v416 = vunpack.c.l.b16 %v332
        %v417 = vunpack.c.l.b16 %v333
        %v418 = vunpack.c.l.b16 %v334
        %v419 = vunpack.c.l.b16 %v335
        %v420 = vunpack.c.l.b16 %v336
        %v421 = vunpack.c.l.b16 %v337
        %v422 = vunpack.c.l.b16 %v338
        %v423 = vunpack.c.l.b16 %v339
        %v424 = vunpack.c.l.b16 %v340
        %v425 = vunpack.c.l.b16 %v341
        %v426 = vunpack.c.l.b16 %v342
        %v427 = vunpack.c.l.b16 %v343
        %v428 = vunpack.c.l.b16 %v344
        %v429 = vunpack.c.l.b16 %v345
        %v430 = vunpack.c.l.b16 %v346
        %v431 = vunpack.c.l.b16 %v347
        %v432 = vunpack.c.l.b16 %v348
        %v433 = vunpack.c.l.b16 %v349
        %v434 = vunpack.c.l.b16 %v350
        %v435 = vunpack.c.l.b16 %v351
        %v436 = vunpack.c.l.b16 %v352
        %v437 = vunpack.c.l.b16 %v353
        %v438 = vpack.c.b16 %v405, %v404
        %v439 = vpack.c.b16 %v407, %v406
        %v440 = vpack.c.b16 %v409, %v408
        %v441 = vpack.c.b16 %v411, %v410
        %v442 = vpack.c.b16 %v413, %v412
        %v443 = vpack.c.b16 %v415, %v414
        %v444 = vpack.c.b16 %v417, %v416
        %v445 = vpack.c.b16 %v419, %v418
        %v446 = vpack.c.b16 %v421, %v420
        %v447 = vpack.c.b16 %v423, %v422
        %v448 = vpack.c.b16 %v425, %v424
        %v449 = vpack.c.b16 %v427, %v426
        %v450 = vpack.c.b16 %v429, %v428
        %v451 = vpack.c.b16 %v431, %v430
        %v452 = vpack.c.b16 %v433, %v432
        %v453 = vpack.c.b16 %v435, %v434
        %v454 = vpack.c.b16 %v437, %v436
        %v488 = vunpack.c.l.b16 %v354
        %v489 = vunpack.c.l.b16 %v355
        %v490 = vunpack.c.l.b16 %v356
        %v491 = vunpack.c.l.b16 %v357
        %v492 = vunpack.c.l.b16 %v358
        %v493 = vunpack.c.l.b16 %v359
        %v494 = vunpack.c.l.b16 %v360
        %v495 = vunpack.c.l.b16 %v361
        %v496 = vunpack.c.l.b16 %v362
        %v497 = vunpack.c.l.b16 %v363
        %v498 = vunpack.c.l.b16 %v364
        %v499 = vunpack.c.l.b16 %v365
        %v500 = vunpack.c.l.b16 %v366
        %v501 = vunpack.c.l.b16 %v367
        %v502 = vunpack.c.l.b16 %v368
        %v503 = vunpack.c.l.b16 %v369
        %v504 = vpack.c.b16 %v489, %v488
        %v505 = vpack.c.b16 %v491, %v490
        %v506 = vpack.c.b16 %v493, %v492
        %v507 = vpack.c.b16 %v495, %v494
        %v508 = vpack.c.b16 %v497, %v496
        %v509 = vpack.c.b16 %v499, %v498
        %v510 = vpack.c.b16 %v501, %v500
        %v511 = vpack.c.b16 %v503, %v502
        %520 = vmatprep.subr.bf16.mxu0 0
        %521 = vmatpush1.bf16.msra.mxu0 %v511
        %522 = vmatprep.subr.bf16.mxu0 0
        %523 = vmatpush1.bf16.msra.mxu0 %v510
        %524 = vmatprep.subr.bf16.mxu0 0
        %525 = vmatpush1.bf16.msra.mxu0 %v509
        %526 = vmatprep.subr.bf16.mxu0 0
        %527 = vmatpush1.bf16.msra.mxu0 %v508
        %528 = vmatprep.subr.bf16.mxu0 0
        %529 = vmatpush1.bf16.msra.mxu0 %v507
        %530 = vmatprep.subr.bf16.mxu0 0
        %531 = vmatpush1.bf16.msra.mxu0 %v506
        %532 = vmatprep.subr.bf16.mxu0 0
        %533 = vmatpush1.bf16.msra.mxu0 %v505
        %534 = vmatprep.subr.bf16.mxu0 0
        %535 = vmatpush1.bf16.msra.mxu0 %v504
        %536 = vmatprep.subr.bf16.mxu0 0
        %537 = vmatpush2.bf16.msra.mxu0 0
        %538 = vmatprep.subr.bf16.mxu0 0
        %539 = vmatpush2.bf16.msra.mxu0 0
        %540 = vmatprep.subr.bf16.mxu0 0
        %541 = vmatpush2.bf16.msra.mxu0 0
        %542 = vmatprep.subr.bf16.mxu0 0
        %543 = vmatpush2.bf16.msra.mxu0 0
        %544 = vmatprep.subr.bf16.mxu0 0
        %545 = vmatpush2.bf16.msra.mxu0 0
        %546 = vmatprep.subr.bf16.mxu0 0
        %547 = vmatpush2.bf16.msra.mxu0 0
        %548 = vmatprep.subr.bf16.mxu0 0
        %549 = vmatpush2.bf16.msra.mxu0 0
        %550 = vmatprep.subr.bf16.mxu0 0
        %551 = vmatpush2.bf16.msra.mxu0 0
        %552 = vmatprep.mubr.bf16.mxu0 0
        %553 = vmatmul.mubr.bf16.gmra.mxu0 %v438
        %v554 = vpop.f32.mrf.mxu0
        %v555 = vadd.f32 0.0, %v554
        %v556 = vpop.f32.mrf.mxu0
        %v557 = vpop.f32.mrf.mxu0
        %v558 = vadd.f32 0.0, %v557
        %v559 = vpop.f32.mrf.mxu0
        %560 = vmatprep.mubr.bf16.mxu0 0
        %561 = vmatmul.mubr.bf16.gmra.mxu0 %v439
        %v562 = vpop.f32.mrf.mxu0
        %v563 = vadd.f32 0.0, %v562
        %v564 = vpop.f32.mrf.mxu0
        %v565 = vpop.f32.mrf.mxu0
        %v566 = vadd.f32 0.0, %v565
        %v567 = vpop.f32.mrf.mxu0
        %568 = vmatprep.mubr.bf16.mxu0 0
        %569 = vmatmul.mubr.bf16.gmra.mxu0 %v440
        %v570 = vpop.f32.mrf.mxu0
        %v571 = vadd.f32 0.0, %v570
        %v572 = vpop.f32.mrf.mxu0
        %v573 = vpop.f32.mrf.mxu0
        %v574 = vadd.f32 0.0, %v573
        %v575 = vpop.f32.mrf.mxu0
        %576 = vmatprep.mubr.bf16.mxu0 0
        %577 = vmatmul.mubr.bf16.gmra.mxu0 %v441
        %v578 = vpop.f32.mrf.mxu0
        %v579 = vadd.f32 0.0, %v578
        %v580 = vpop.f32.mrf.mxu0
        %v581 = vpop.f32.mrf.mxu0
        %v582 = vadd.f32 0.0, %v581
        %v583 = vpop.f32.mrf.mxu0
        %584 = vmatprep.mubr.bf16.mxu0 0
        %585 = vmatmul.mubr.bf16.gmra.mxu0 %v442
        %v586 = vpop.f32.mrf.mxu0
        %v587 = vadd.f32 0.0, %v586
        %v588 = vpop.f32.mrf.mxu0
        %v589 = vpop.f32.mrf.mxu0
        %v590 = vadd.f32 0.0, %v589
        %v591 = vpop.f32.mrf.mxu0
        %592 = vmatprep.mubr.bf16.mxu0 0
        %593 = vmatmul.mubr.bf16.gmra.mxu0 %v443
        %v594 = vpop.f32.mrf.mxu0
        %v595 = vadd.f32 0.0, %v594
        %v596 = vpop.f32.mrf.mxu0
        %v597 = vpop.f32.mrf.mxu0
        %v598 = vadd.f32 0.0, %v597
        %v599 = vpop.f32.mrf.mxu0
        %600 = vmatprep.mubr.bf16.mxu0 0
        %601 = vmatmul.mubr.bf16.gmra.mxu0 %v444
        %v602 = vpop.f32.mrf.mxu0
        %v603 = vadd.f32 0.0, %v602
        %v604 = vpop.f32.mrf.mxu0
        %v605 = vpop.f32.mrf.mxu0
        %v606 = vadd.f32 0.0, %v605
        %v607 = vpop.f32.mrf.mxu0
        %608 = vmatprep.mubr.bf16.mxu0 0
        %609 = vmatmul.mubr.bf16.gmra.mxu0 %v445
        %v610 = vpop.f32.mrf.mxu0
        %v611 = vadd.f32 0.0, %v610
        %v612 = vpop.f32.mrf.mxu0
        %v613 = vpop.f32.mrf.mxu0
        %v614 = vadd.f32 0.0, %v613
        %v615 = vpop.f32.mrf.mxu0
        %616 = vmatprep.mubr.bf16.mxu0 0
        %617 = vmatmul.mubr.bf16.gmra.mxu0 %v446
        %v618 = vpop.f32.mrf.mxu0
        %v619 = vadd.f32 0.0, %v618
        %v620 = vpop.f32.mrf.mxu0
        %v621 = vpop.f32.mrf.mxu0
        %v622 = vadd.f32 0.0, %v621
        %v623 = vpop.f32.mrf.mxu0
        %624 = vmatprep.mubr.bf16.mxu0 0
        %625 = vmatmul.mubr.bf16.gmra.mxu0 %v447
        %v626 = vpop.f32.mrf.mxu0
        %v627 = vadd.f32 0.0, %v626
        %v628 = vpop.f32.mrf.mxu0
        %v629 = vpop.f32.mrf.mxu0
        %v630 = vadd.f32 0.0, %v629
        %v631 = vpop.f32.mrf.mxu0
        %632 = vmatprep.mubr.bf16.mxu0 0
        %633 = vmatmul.mubr.bf16.gmra.mxu0 %v448
        %v634 = vpop.f32.mrf.mxu0
        %v635 = vadd.f32 0.0, %v634
        %v636 = vpop.f32.mrf.mxu0
        %v637 = vpop.f32.mrf.mxu0
        %v638 = vadd.f32 0.0, %v637
        %v639 = vpop.f32.mrf.mxu0
        %640 = vmatprep.mubr.bf16.mxu0 0
        %641 = vmatmul.mubr.bf16.gmra.mxu0 %v449
        %v642 = vpop.f32.mrf.mxu0
        %v643 = vadd.f32 0.0, %v642
        %v644 = vpop.f32.mrf.mxu0
        %v645 = vpop.f32.mrf.mxu0
        %v646 = vadd.f32 0.0, %v645
        %v647 = vpop.f32.mrf.mxu0
        %648 = vmatprep.mubr.bf16.mxu0 0
        %649 = vmatmul.mubr.bf16.gmra.mxu0 %v450
        %v650 = vpop.f32.mrf.mxu0
        %v651 = vadd.f32 0.0, %v650
        %v652 = vpop.f32.mrf.mxu0
        %v653 = vpop.f32.mrf.mxu0
        %v654 = vadd.f32 0.0, %v653
        %v655 = vpop.f32.mrf.mxu0
        %656 = vmatprep.mubr.bf16.mxu0 0
        %657 = vmatmul.mubr.bf16.gmra.mxu0 %v451
        %v658 = vpop.f32.mrf.mxu0
        %v659 = vadd.f32 0.0, %v658
        %v660 = vpop.f32.mrf.mxu0
        %v661 = vpop.f32.mrf.mxu0
        %v662 = vadd.f32 0.0, %v661
        %v663 = vpop.f32.mrf.mxu0
        %664 = vmatprep.mubr.bf16.mxu0 0
        %665 = vmatmul.mubr.bf16.gmra.mxu0 %v452
        %v666 = vpop.f32.mrf.mxu0
        %v667 = vadd.f32 0.0, %v666
        %v668 = vpop.f32.mrf.mxu0
        %v669 = vpop.f32.mrf.mxu0
        %v670 = vadd.f32 0.0, %v669
        %v671 = vpop.f32.mrf.mxu0
        %672 = vmatprep.mubr.bf16.mxu0 0
        %673 = vmatmul.mubr.bf16.gmra.mxu0 %v453
        %v674 = vpop.f32.mrf.mxu0
        %v675 = vadd.f32 0.0, %v674
        %v676 = vpop.f32.mrf.mxu0
        %v677 = vpop.f32.mrf.mxu0
        %v678 = vadd.f32 0.0, %v677
        %v679 = vpop.f32.mrf.mxu0
        %680 = vmatprep.mubr.bf16.mxu0 0
        %681 = vmatmul.mubr.bf16.gmra.mxu0 %v454
        %v682 = vpop.f32.mrf.mxu0
        %v683 = vadd.f32 0.0, %v682
        %v684 = vpop.f32.mrf.mxu0
        %v685 = vpop.f32.mrf.mxu0
        %v686 = vadd.f32 0.0, %v685
        %v687 = vpop.f32.mrf.mxu0
        %688 = vdwg.mxu0
        %v689 = vmul.f32 %v555, %v555
        %v690 = vmul.f32 %v558, %v558
        %v691 = vmul.f32 %v563, %v563
        %v692 = vmul.f32 %v566, %v566
        %v693 = vmul.f32 %v571, %v571
        %v694 = vmul.f32 %v574, %v574
        %v695 = vmul.f32 %v579, %v579
        %v696 = vmul.f32 %v582, %v582
        %v697 = vmul.f32 %v587, %v587
        %v698 = vmul.f32 %v590, %v590
        %v699 = vmul.f32 %v595, %v595
        %v700 = vmul.f32 %v598, %v598
        %v701 = vmul.f32 %v603, %v603
        %v702 = vmul.f32 %v606, %v606
        %v703 = vmul.f32 %v611, %v611
        %v704 = vmul.f32 %v614, %v614
        %v705 = vmul.f32 %v619, %v619
        %v706 = vmul.f32 %v622, %v622
        %v707 = vmul.f32 %v627, %v627
        %v708 = vmul.f32 %v630, %v630
        %v709 = vmul.f32 %v635, %v635
        %v710 = vmul.f32 %v638, %v638
        %v711 = vmul.f32 %v643, %v643
        %v712 = vmul.f32 %v646, %v646
        %v713 = vmul.f32 %v651, %v651
        %v714 = vmul.f32 %v654, %v654
        %v715 = vmul.f32 %v659, %v659
        %v716 = vmul.f32 %v662, %v662
        %v717 = vmul.f32 %v667, %v667
        %v718 = vmul.f32 %v670, %v670
        %v719 = vmul.f32 %v675, %v675
        %v720 = vmul.f32 %v678, %v678
        %v721 = vmul.f32 %v683, %v683
        %v722 = vmul.f32 %v686, %v686
        %757 = vrot.lane.b32.xlu0 %v689, 64
        %v758 = vpop.permute.xlu0 %757
        %759 = vrot.lane.b32.xlu0 %v690, 64
        %v760 = vpop.permute.xlu0 %759
        %761 = vrot.lane.b32.xlu0 %v691, 64
        %v762 = vpop.permute.xlu0 %761
        %763 = vrot.lane.b32.xlu0 %v692, 64
        %v764 = vpop.permute.xlu0 %763
        %765 = vrot.lane.b32.xlu0 %v693, 64
        %v766 = vpop.permute.xlu0 %765
        %767 = vrot.lane.b32.xlu0 %v694, 64
        %v768 = vpop.permute.xlu0 %767
        %769 = vrot.lane.b32.xlu0 %v695, 64
        %v770 = vpop.permute.xlu0 %769
        %771 = vrot.lane.b32.xlu0 %v696, 64
        %v772 = vpop.permute.xlu0 %771
        %773 = vrot.lane.b32.xlu0 %v697, 64
        %v774 = vpop.permute.xlu0 %773
        %775 = vrot.lane.b32.xlu0 %v698, 64
        %v776 = vpop.permute.xlu0 %775
        %777 = vrot.lane.b32.xlu0 %v699, 64
        %v778 = vpop.permute.xlu0 %777
        %779 = vrot.lane.b32.xlu0 %v700, 64
        %v780 = vpop.permute.xlu0 %779
        %781 = vrot.lane.b32.xlu0 %v701, 64
        %v782 = vpop.permute.xlu0 %781
        %783 = vrot.lane.b32.xlu0 %v702, 64
        %v784 = vpop.permute.xlu0 %783
        %785 = vrot.lane.b32.xlu0 %v703, 64
        %v786 = vpop.permute.xlu0 %785
        %787 = vrot.lane.b32.xlu0 %v704, 64
        %v788 = vpop.permute.xlu0 %787
        %789 = vrot.lane.b32.xlu0 %v705, 64
        %v790 = vpop.permute.xlu0 %789
        %791 = vrot.lane.b32.xlu0 %v706, 64
        %v792 = vpop.permute.xlu0 %791
        %793 = vrot.lane.b32.xlu0 %v707, 64
        %v794 = vpop.permute.xlu0 %793
        %795 = vrot.lane.b32.xlu0 %v708, 64
        %v796 = vpop.permute.xlu0 %795
        %797 = vrot.lane.b32.xlu0 %v709, 64
        %v798 = vpop.permute.xlu0 %797
        %799 = vrot.lane.b32.xlu0 %v710, 64
        %v800 = vpop.permute.xlu0 %799
        %801 = vrot.lane.b32.xlu0 %v711, 64
        %v802 = vpop.permute.xlu0 %801
        %803 = vrot.lane.b32.xlu0 %v712, 64
        %v804 = vpop.permute.xlu0 %803
        %805 = vrot.lane.b32.xlu0 %v713, 64
        %v806 = vpop.permute.xlu0 %805
        %807 = vrot.lane.b32.xlu0 %v714, 64
        %v808 = vpop.permute.xlu0 %807
        %809 = vrot.lane.b32.xlu0 %v715, 64
        %v810 = vpop.permute.xlu0 %809
        %811 = vrot.lane.b32.xlu0 %v716, 64
        %v812 = vpop.permute.xlu0 %811
        %813 = vrot.lane.b32.xlu0 %v717, 64
        %v814 = vpop.permute.xlu0 %813
        %815 = vrot.lane.b32.xlu0 %v718, 64
        %v816 = vpop.permute.xlu0 %815
        %817 = vrot.lane.b32.xlu0 %v719, 64
        %v818 = vpop.permute.xlu0 %817
        %819 = vrot.lane.b32.xlu0 %v720, 64
        %v820 = vpop.permute.xlu0 %819
        %821 = vrot.lane.b32.xlu0 %v721, 64
        %v822 = vpop.permute.xlu0 %821
        %823 = vrot.lane.b32.xlu0 %v722, 64
        %v824 = vpop.permute.xlu0 %823
        %v859 = vadd.f32 %v689, %v758
        %v860 = vadd.f32 %v690, %v760
        %v861 = vadd.f32 %v691, %v762
        %v862 = vadd.f32 %v692, %v764
        %v863 = vadd.f32 %v693, %v766
        %v864 = vadd.f32 %v694, %v768
        %v865 = vadd.f32 %v695, %v770
        %v866 = vadd.f32 %v696, %v772
        %v867 = vadd.f32 %v697, %v774
        %v868 = vadd.f32 %v698, %v776
        %v869 = vadd.f32 %v699, %v778
        %v870 = vadd.f32 %v700, %v780
        %v871 = vadd.f32 %v701, %v782
        %v872 = vadd.f32 %v702, %v784
        %v873 = vadd.f32 %v703, %v786
        %v874 = vadd.f32 %v704, %v788
        %v875 = vadd.f32 %v705, %v790
        %v876 = vadd.f32 %v706, %v792
        %v877 = vadd.f32 %v707, %v794
        %v878 = vadd.f32 %v708, %v796
        %v879 = vadd.f32 %v709, %v798
        %v880 = vadd.f32 %v710, %v800
        %v881 = vadd.f32 %v711, %v802
        %v882 = vadd.f32 %v712, %v804
        %v883 = vadd.f32 %v713, %v806
        %v884 = vadd.f32 %v714, %v808
        %v885 = vadd.f32 %v715, %v810
        %v886 = vadd.f32 %v716, %v812
        %v887 = vadd.f32 %v717, %v814
        %v888 = vadd.f32 %v718, %v816
        %v889 = vadd.f32 %v719, %v818
        %v890 = vadd.f32 %v720, %v820
        %v891 = vadd.f32 %v721, %v822
        %v892 = vadd.f32 %v722, %v824
        %v893 = vsub.f32 %v859, %v876
        %v894 = vsub.f32 %v860, %v877
        %v895 = vsub.f32 %v861, %v878
        %v896 = vsub.f32 %v862, %v879
        %v897 = vsub.f32 %v863, %v880
        %v898 = vsub.f32 %v864, %v881
        %v899 = vsub.f32 %v865, %v882
        %v900 = vsub.f32 %v866, %v883
        %v901 = vsub.f32 %v867, %v884
        %v902 = vsub.f32 %v868, %v885
        %v903 = vsub.f32 %v869, %v886
        %v904 = vsub.f32 %v870, %v887
        %v905 = vsub.f32 %v871, %v888
        %v906 = vsub.f32 %v872, %v889
        %v907 = vsub.f32 %v873, %v890
        %v908 = vsub.f32 %v874, %v891
        %v909 = vsub.f32 %v875, %v892
        %v910 = vand.u32 2147483647, %v893
        %v911 = vand.u32 2147483647, %v894
        %v912 = vand.u32 2147483647, %v895
        %v913 = vand.u32 2147483647, %v896
        %v914 = vand.u32 2147483647, %v897
        %v915 = vand.u32 2147483647, %v898
        %v916 = vand.u32 2147483647, %v899
        %v917 = vand.u32 2147483647, %v900
        %v918 = vand.u32 2147483647, %v901
        %v919 = vand.u32 2147483647, %v902
        %v920 = vand.u32 2147483647, %v903
        %v921 = vand.u32 2147483647, %v904
        %v922 = vand.u32 2147483647, %v905
        %v923 = vand.u32 2147483647, %v906
        %v924 = vand.u32 2147483647, %v907
        %v925 = vand.u32 2147483647, %v908
        %v926 = vand.u32 2147483647, %v909
        %vm927 = vcmask 523264
        %v928 = vsel %vm927, %v910, 0.0
        %v929 = vsel %vm927, %v911, 0.0
        %v930 = vadd.f32 %v928, %v929
        %v931 = vsel %vm927, %v912, 0.0
        %v932 = vadd.f32 %v930, %v931
        %v933 = vsel %vm927, %v913, 0.0
        %v934 = vadd.f32 %v932, %v933
        %v935 = vsel %vm927, %v914, 0.0
        %v936 = vadd.f32 %v934, %v935
        %v937 = vsel %vm927, %v915, 0.0
        %v938 = vadd.f32 %v936, %v937
        %v939 = vsel %vm927, %v916, 0.0
        %v940 = vadd.f32 %v938, %v939
        %v941 = vsel %vm927, %v917, 0.0
        %v942 = vadd.f32 %v940, %v941
        %v943 = vsel %vm927, %v918, 0.0
        %v944 = vadd.f32 %v942, %v943
        %v945 = vsel %vm927, %v919, 0.0
        %v946 = vadd.f32 %v944, %v945
        %v947 = vsel %vm927, %v920, 0.0
        %v948 = vadd.f32 %v946, %v947
        %v949 = vsel %vm927, %v921, 0.0
        %v950 = vadd.f32 %v948, %v949
        %v951 = vsel %vm927, %v922, 0.0
        %v952 = vadd.f32 %v950, %v951
        %v953 = vsel %vm927, %v923, 0.0
        %v954 = vadd.f32 %v952, %v953
        %v955 = vsel %vm927, %v924, 0.0
        %v956 = vadd.f32 %v954, %v955
        %v957 = vsel %vm927, %v925, 0.0
        %v958 = vadd.f32 %v956, %v957
        %v959 = vsel %vm927, %v926, 0.0
        %v960 = vadd.f32 %v958, %v959
        %v961 = vrot.slane %v960, 4
        %v962 = vadd.f32 %v960, %v961
        %v963 = vrot.slane %v962, 2
        %v964 = vadd.f32 %v962, %v963
        %v965 = vrot.slane %v964, 1
        %v966 = vadd.f32 %v964, %v965
        %v967 = vadd.f32 %v876, 1e-07
        %v968 = vadd.f32 %v877, 1e-07
        %v969 = vadd.f32 %v878, 1e-07
        %v970 = vadd.f32 %v879, 1e-07
        %v971 = vadd.f32 %v880, 1e-07
        %v972 = vadd.f32 %v881, 1e-07
        %v973 = vadd.f32 %v882, 1e-07
        %v974 = vadd.f32 %v883, 1e-07
        %v975 = vadd.f32 %v884, 1e-07
        %v976 = vadd.f32 %v885, 1e-07
        %v977 = vadd.f32 %v886, 1e-07
        %v978 = vadd.f32 %v887, 1e-07
        %v979 = vadd.f32 %v888, 1e-07
        %v980 = vadd.f32 %v889, 1e-07
        %v981 = vadd.f32 %v890, 1e-07
        %v982 = vadd.f32 %v891, 1e-07
        %v983 = vadd.f32 %v892, 1e-07
        %v984 = vadd.f32 %v859, 1e-07
        %v985 = vadd.f32 %v860, 1e-07
        %v986 = vadd.f32 %v861, 1e-07
        %v987 = vadd.f32 %v862, 1e-07
        %v988 = vadd.f32 %v863, 1e-07
        %v989 = vadd.f32 %v864, 1e-07
        %v990 = vadd.f32 %v865, 1e-07
        %v991 = vadd.f32 %v866, 1e-07
        %v992 = vadd.f32 %v867, 1e-07
        %v993 = vadd.f32 %v868, 1e-07
        %v994 = vadd.f32 %v869, 1e-07
        %v995 = vadd.f32 %v870, 1e-07
        %v996 = vadd.f32 %v871, 1e-07
        %v997 = vadd.f32 %v872, 1e-07
        %v998 = vadd.f32 %v873, 1e-07
        %v999 = vadd.f32 %v874, 1e-07
        %v1000 = vadd.f32 %v875, 1e-07
        %v1001 = vrcp.pop %v984
        %v1002 = vrcp.pop %v985
        %v1003 = vrcp.pop %v986
        %v1004 = vrcp.pop %v987
        %v1005 = vrcp.pop %v988
        %v1006 = vrcp.pop %v989
        %v1007 = vrcp.pop %v990
        %v1008 = vrcp.pop %v991
        %v1009 = vrcp.pop %v992
        %v1010 = vrcp.pop %v993
        %v1011 = vrcp.pop %v994
        %v1012 = vrcp.pop %v995
        %v1013 = vrcp.pop %v996
        %v1014 = vrcp.pop %v997
        %v1015 = vrcp.pop %v998
        %v1016 = vrcp.pop %v999
        %v1017 = vrcp.pop %v1000
        %v1018 = vmul.f32 %v967, %v1001
        %v1019 = vmul.f32 %v968, %v1002
        %v1020 = vmul.f32 %v969, %v1003
        %v1021 = vmul.f32 %v970, %v1004
        %v1022 = vmul.f32 %v971, %v1005
        %v1023 = vmul.f32 %v972, %v1006
        %v1024 = vmul.f32 %v973, %v1007
        %v1025 = vmul.f32 %v974, %v1008
        %v1026 = vmul.f32 %v975, %v1009
        %v1027 = vmul.f32 %v976, %v1010
        %v1028 = vmul.f32 %v977, %v1011
        %v1029 = vmul.f32 %v978, %v1012
        %v1030 = vmul.f32 %v979, %v1013
        %v1031 = vmul.f32 %v980, %v1014
        %v1032 = vmul.f32 %v981, %v1015
        %v1033 = vmul.f32 %v982, %v1016
        %v1034 = vmul.f32 %v983, %v1017
        %v1035 = vlog2.pop %v1018
        %v1036 = vmul.f32 %v1035, 0.6931472
        %v1037 = vlog2.pop %v1019
        %v1038 = vmul.f32 %v1037, 0.6931472
        %v1039 = vlog2.pop %v1020
        %v1040 = vmul.f32 %v1039, 0.6931472
        %v1041 = vlog2.pop %v1021
        %v1042 = vmul.f32 %v1041, 0.6931472
        %v1043 = vlog2.pop %v1022
        %v1044 = vmul.f32 %v1043, 0.6931472
        %v1045 = vlog2.pop %v1023
        %v1046 = vmul.f32 %v1045, 0.6931472
        %v1047 = vlog2.pop %v1024
        %v1048 = vmul.f32 %v1047, 0.6931472
        %v1049 = vlog2.pop %v1025
        %v1050 = vmul.f32 %v1049, 0.6931472
        %v1051 = vlog2.pop %v1026
        %v1052 = vmul.f32 %v1051, 0.6931472
        %v1053 = vlog2.pop %v1027
        %v1054 = vmul.f32 %v1053, 0.6931472
        %v1055 = vlog2.pop %v1028
        %v1056 = vmul.f32 %v1055, 0.6931472
        %v1057 = vlog2.pop %v1029
        %v1058 = vmul.f32 %v1057, 0.6931472
        %v1059 = vlog2.pop %v1030
        %v1060 = vmul.f32 %v1059, 0.6931472
        %v1061 = vlog2.pop %v1031
        %v1062 = vmul.f32 %v1061, 0.6931472
        %v1063 = vlog2.pop %v1032
        %v1064 = vmul.f32 %v1063, 0.6931472
        %v1065 = vlog2.pop %v1033
        %v1066 = vmul.f32 %v1065, 0.6931472
        %v1067 = vlog2.pop %v1034
        %v1068 = vmul.f32 %v1067, 0.6931472
        %v1069 = vrcp.pop 0.6931472
        %v1070 = vmul.f32 %v1036, %v1069
        %v1071 = vmul.f32 %v1038, %v1069
        %v1072 = vmul.f32 %v1040, %v1069
        %v1073 = vmul.f32 %v1042, %v1069
        %v1074 = vmul.f32 %v1044, %v1069
        %v1075 = vmul.f32 %v1046, %v1069
        %v1076 = vmul.f32 %v1048, %v1069
        %v1077 = vmul.f32 %v1050, %v1069
        %v1078 = vmul.f32 %v1052, %v1069
        %v1079 = vmul.f32 %v1054, %v1069
        %v1080 = vmul.f32 %v1056, %v1069
        %v1081 = vmul.f32 %v1058, %v1069
        %v1082 = vmul.f32 %v1060, %v1069
        %v1083 = vmul.f32 %v1062, %v1069
        %v1084 = vmul.f32 %v1064, %v1069
        %v1085 = vmul.f32 %v1066, %v1069
        %v1086 = vmul.f32 %v1068, %v1069
        %v1087 = vand.u32 2147483647, %v1070
        %v1088 = vand.u32 2147483647, %v1071
        %v1089 = vand.u32 2147483647, %v1072
        %v1090 = vand.u32 2147483647, %v1073
        %v1091 = vand.u32 2147483647, %v1074
        %v1092 = vand.u32 2147483647, %v1075
        %v1093 = vand.u32 2147483647, %v1076
        %v1094 = vand.u32 2147483647, %v1077
        %v1095 = vand.u32 2147483647, %v1078
        %v1096 = vand.u32 2147483647, %v1079
        %v1097 = vand.u32 2147483647, %v1080
        %v1098 = vand.u32 2147483647, %v1081
        %v1099 = vand.u32 2147483647, %v1082
        %v1100 = vand.u32 2147483647, %v1083
        %v1101 = vand.u32 2147483647, %v1084
        %v1102 = vand.u32 2147483647, %v1085
        %v1103 = vand.u32 2147483647, %v1086
        %v1104 = vsel %vm927, %v1087, 0.0
        %v1105 = vsel %vm927, %v1088, 0.0
        %v1106 = vadd.f32 %v1104, %v1105
        %v1107 = vsel %vm927, %v1089, 0.0
        %v1108 = vadd.f32 %v1106, %v1107
        %v1109 = vsel %vm927, %v1090, 0.0
        %v1110 = vadd.f32 %v1108, %v1109
        %v1111 = vsel %vm927, %v1091, 0.0
        %v1112 = vadd.f32 %v1110, %v1111
        %v1113 = vsel %vm927, %v1092, 0.0
        %v1114 = vadd.f32 %v1112, %v1113
        %v1115 = vsel %vm927, %v1093, 0.0
        %v1116 = vadd.f32 %v1114, %v1115
        %v1117 = vsel %vm927, %v1094, 0.0
        %v1118 = vadd.f32 %v1116, %v1117
        %v1119 = vsel %vm927, %v1095, 0.0
        %v1120 = vadd.f32 %v1118, %v1119
        %v1121 = vsel %vm927, %v1096, 0.0
        %v1122 = vadd.f32 %v1120, %v1121
        %v1123 = vsel %vm927, %v1097, 0.0
        %v1124 = vadd.f32 %v1122, %v1123
        %v1125 = vsel %vm927, %v1098, 0.0
        %v1126 = vadd.f32 %v1124, %v1125
        %v1127 = vsel %vm927, %v1099, 0.0
        %v1128 = vadd.f32 %v1126, %v1127
        %v1129 = vsel %vm927, %v1100, 0.0
        %v1130 = vadd.f32 %v1128, %v1129
        %v1131 = vsel %vm927, %v1101, 0.0
        %v1132 = vadd.f32 %v1130, %v1131
        %v1133 = vsel %vm927, %v1102, 0.0
        %v1134 = vadd.f32 %v1132, %v1133
        %v1135 = vsel %vm927, %v1103, 0.0
        %v1136 = vadd.f32 %v1134, %v1135
        %v1137 = vrot.slane %v1136, 4
        %v1138 = vadd.f32 %v1136, %v1137
        %v1139 = vrot.slane %v1138, 2
        %v1140 = vadd.f32 %v1138, %v1139
        %v1141 = vrot.slane %v1140, 1
        %v1142 = vadd.f32 %v1140, %v1141
        %vm1143 = vcmask 1040384
        %v1144 = vsel %vm1143, %v966, %v1142
        %vm1145 = vcmask 517120
        %1146 = vst.msk [vmem:[%s318] sm:$0x3] %vm1145, %v1144
        %p1147 = scmp.lt.s32.totalorder %s13, 1
        %s1148 = scalar_select %p1147, %s13, 1
        %s1149 = smul.addr %s1148, 2
        %s1150 = scalar_lea.vmem %s2, %s1149
        // Predicated region
        $region70: #{mss_loss.5} parent=64 // pred_check
          %p1151 = pneg %p78
        $region71: #{mss_loss.5} parent=64 // pred_check_branch
          %1153 = sbr.rel (%p1151) target = $region73
        $region72: #{mss_loss.5} parent=64 // pred_region
          _
        $region73: #{mss_loss.5} parent=64 // pred_fallthru
          _
      $region65: #{mss_loss.5} parent=5 // pred_fallthru
        _
      %p1154 = scmp.le.s32.totalorder 2, %s8
      // Predicated region
      $region74: #{mss_loss.5} parent=5 // pred_check
        %p1155 = pneg %p1154
      $region75: #{mss_loss.5} parent=5 // pred_check_branch
        %1157 = sbr.rel (%p1155) target = $region77
      $region76: #{mss_loss.5} parent=5 // pred_region
        %s1158 = ssub.s32 %s8, 2
        // Predicated region
        $region78: #{mss_loss.5} parent=76 // pred_check
          %p1159 = pneg %p84
        $region79: #{mss_loss.5} parent=76 // pred_check_branch
          %1161 = sbr.rel (%p1159) target = $region81
        $region80: #{mss_loss.5} parent=76 // pred_region
          %p1162 = scmp.lt.s32.totalorder %s14, 1
          %s1163 = scalar_select %p1162, %s14, 1
          %s1164 = smul.addr %s1163, 2
          %s1165 = scalar_lea.vmem %s2, %s1164
        $region81: #{mss_loss.5} parent=76 // pred_fallthru
          _
      $region77: #{mss_loss.5} parent=5 // pred_fallthru
        _
    $region6: #{mss_loss.5} parent=1 // loop_footer
      %s12 = sadd.s32 1, %s8
    $region7: #{mss_loss.5} parent=1 // loop_footer_branch
      %7 = sbr.rel target = $region3
    $region8: #{mss_loss.5} parent=1 // loop_exit
      _

// kernel: mss_loss.4
$region0: #{mss_loss.4}
  #allocation0 [shape = 'u32[]', space=smem, size = 0x4, offset = 0x4, fixed_abs, tag = 'smem constant byte address 0x4 - core index']
  #allocation1 [shape = 'u32[144,128]{1,0:T(1,128)}', space=vmem, size = 0x12000, scoped, tag = 'internal scratch']
  %s0 = inlined_call_operand.vmem [shape: bf16[2,144,256], index: 0, kind: input, shape index: {}]
  %s1 = inlined_call_operand.vmem [shape: bf16[256,256], index: 1, kind: input, shape index: {}]
  %s2 = inlined_call_operand.vmem [shape: f32[2,2,128], index: 2, kind: output, shape index: {}]
  %s3 = sld [smem:[#allocation0]]
  $region79: #{mss_loss.4} parent=0
    _
  %s5 = ssub.s32 1, %s3
  %s6 = scalar_select 0, %s5, %s3
  $region1: #{mss_loss.4} parent=0
    #allocation2 [shape = 'u8[147456]{0}', space=vmem, size = 0x24000, scoped, tag = 'input window, operand 0']
    loop: start=0, step=1, limit=4
    $region2: #{mss_loss.4} parent=1 // loop_pre_header
      _
    $region3: #{mss_loss.4} parent=1 // loop_header
      %s8 = sphi 0, %s12
      %p9 = scmp.ge.s32.totalorder %s8, 4
      %s18 = sphi 0, %s20
      %s21 = sphi 0, %s18
      %s22 = sphi 0, %s21
      %s38 = sphi 0, %s22
      %s42 = sphi 0, %s42
      %s44 = sphi 0, %s42
      %s45 = sphi 0, %s44
      %s59 = sphi 0, %s45
      %s65 = sphi 0, %s67
      %s68 = sphi 0, %s65
      %s69 = sphi 0, %s68
      %s85 = sphi 0, %s69
    $region4: #{mss_loss.4} parent=1 // loop_header_branch
      %11 = sbr.rel (%p9) target = $region8
    $region5: #{mss_loss.4} parent=1 // loop_body
      %s13 = ssub.s32 %s8, 1
      %s14 = ssub.s32 %s8, 2
      %s15 = sadd.s32 %s8, 1
      %s16 = ssub.s32 %s8, %s15
      %p17 = scmp.eq.s32.totalorder %s16, 0
      %s19 = sadd.s32 %s18, 1
      %s20 = scalar_select %p17, %s18, %s19
      %p23 = pneg %p17
      %p24 = scmp.eq.s32.totalorder %s8, 1
      %p25 = por %p23, %p24
      %p26 = scmp.ne.s32.totalorder %s18, %s21
      %p27 = scmp.eq.s32.totalorder %s8, 0
      %p28 = por %p26, %p27
      %p29 = scmp.ne.s32.totalorder %s18, %s21
      %p30 = scmp.eq.s32.totalorder %s13, 1
      %p31 = por %p29, %p30
      %p32 = scmp.ne.s32.totalorder %s21, %s22
      %p33 = scmp.eq.s32.totalorder %s13, 0
      %p34 = por %p32, %p33
      %p35 = scmp.ne.s32.totalorder %s21, %s22
      %p36 = scmp.eq.s32.totalorder %s14, 1
      %p37 = por %p35, %p36
      %p39 = scmp.ne.s32.totalorder %s22, %s38
      %p40 = scmp.eq.s32.totalorder %s14, 0
      %p41 = por %p39, %p40
      %s43 = sadd.s32 %s42, 1
      %p46 = scmp.eq.s32.totalorder %s8, 1
      %p47 = scmp.ne.s32.totalorder %s42, %s44
      %p48 = scmp.eq.s32.totalorder %s8, 0
      %p49 = por %p47, %p48
      %p50 = scmp.ne.s32.totalorder %s42, %s44
      %p51 = scmp.eq.s32.totalorder %s13, 1
      %p52 = por %p50, %p51
      %p53 = scmp.ne.s32.totalorder %s44, %s45
      %p54 = scmp.eq.s32.totalorder %s13, 0
      %p55 = por %p53, %p54
      %p56 = scmp.ne.s32.totalorder %s44, %s45
      %p57 = scmp.eq.s32.totalorder %s14, 1
      %p58 = por %p56, %p57
      %p60 = scmp.ne.s32.totalorder %s45, %s59
      %p61 = scmp.eq.s32.totalorder %s14, 0
      %p62 = por %p60, %p61
      %s63 = ssub.s32 %s8, %s15
      %p64 = scmp.eq.s32.totalorder %s63, 0
      %s66 = sadd.s32 %s65, 1
      %s67 = scalar_select %p64, %s65, %s66
      %p70 = pneg %p64
      %p71 = scmp.eq.s32.totalorder %s8, 1
      %p72 = por %p70, %p71
      %p73 = scmp.ne.s32.totalorder %s65, %s68
      %p74 = scmp.eq.s32.totalorder %s8, 0
      %p75 = por %p73, %p74
      %p76 = scmp.ne.s32.totalorder %s65, %s68
      %p77 = scmp.eq.s32.totalorder %s13, 1
      %p78 = por %p76, %p77
      %p79 = scmp.ne.s32.totalorder %s68, %s69
      %p80 = scmp.eq.s32.totalorder %s13, 0
      %p81 = por %p79, %p80
      %p82 = scmp.ne.s32.totalorder %s68, %s69
      %p83 = scmp.eq.s32.totalorder %s14, 1
      %p84 = por %p82, %p83
      %p86 = scmp.ne.s32.totalorder %s69, %s85
      %p87 = scmp.eq.s32.totalorder %s14, 0
      %p88 = por %p86, %p87
      %p89 = scmp.le.s32.totalorder 1, %s8
      %p90 = scmp.lt.s32.totalorder %s8, 3
      %p91 = pnand %p89, %p90
      %p92 = pneg %p91
      // Predicated region
      $region9: #{mss_loss.4} parent=5 // pred_check
        _
      $region10: #{mss_loss.4} parent=5 // pred_check_branch
        %94 = sbr.rel (%p91) target = $region12
      $region11: #{mss_loss.4} parent=5 // pred_region
        %s95 = ssub.s32 %s8, 1
        // Predicated region
        $region13: #{mss_loss.4} parent=11 // pred_check
          %p96 = pneg %p55
        $region14: #{mss_loss.4} parent=11 // pred_check_branch
          %98 = sbr.rel (%p96) target = $region16
        $region15: #{mss_loss.4} parent=11 // pred_region
          _
        $region16: #{mss_loss.4} parent=11 // pred_fallthru
          _
      $region12: #{mss_loss.4} parent=5 // pred_fallthru
        _
      %p99 = scmp.lt.s32.totalorder %s8, 2
      // Predicated region
      $region17: #{mss_loss.4} parent=5 // pred_check
        %p100 = pneg %p99
      $region18: #{mss_loss.4} parent=5 // pred_check_branch
        %102 = sbr.rel (%p100) target = $region20
      $region19: #{mss_loss.4} parent=5 // pred_region
        // Predicated region
        $region21: #{mss_loss.4} parent=19 // pred_check
          %p103 = pneg %p28
        $region22: #{mss_loss.4} parent=19 // pred_check_branch
          %105 = sbr.rel (%p103) target = $region24
        $region23: #{mss_loss.4} parent=19 // pred_region
          %s106 = sand.u32 %s18, 1
          %s107 = sand.u32 %s18, 1
          %s108 = smul.addr %s107, 144
          %s109 = scalar_lea.vmem [#allocation2], %s108
          %s110 = smul.u32 9, %s8
          %s111 = smul.addr %s110, 2
          %s112 = smul.addr %s111, 4
          %s113 = scalar_lea.vmem %s0, %s112
          // Predicated region
          $region25: #{mss_loss.4} parent=23 // pred_check
            _
          $region26: #{mss_loss.4} parent=23 // pred_check_branch
            %115 = sbr.rel (0) target = $region28
          $region27: #{mss_loss.4} parent=23 // pred_region
            // Predicated region
            $region29: #{mss_loss.4} parent=27 // pred_check
              _
            $region30: #{mss_loss.4} parent=27 // pred_check_branch
              %117 = sbr.rel (0) target = $region32
            $region31: #{mss_loss.4} parent=27 // pred_region
              // Predicated region
              $region44: #{mss_loss.4} parent=31 // pred_check
                _
              $region45: #{mss_loss.4} parent=31 // pred_check_branch
                %167 = sbr.rel (0) target = $region47
              $region46: #{mss_loss.4} parent=31 // pred_region
                loop: start=0, step=1, limit=1
                $region48: #{mss_loss.4} parent=46 // loop_pre_header
                  _
                $region49: #{mss_loss.4} parent=46 // loop_header
                  %s169 = sphi 0, %s173
                  %p170 = scmp.ge.s32.totalorder %s169, 1
                  %s174 = sphi %s113, %s113
                  %s175 = sphi %s109, %s109
                $region50: #{mss_loss.4} parent=46 // loop_header_branch
                  %172 = sbr.rel (%p170) target = $region54
                $region51: #{mss_loss.4} parent=46 // loop_body
                  %v176 = vld [vmem:[%s174] sm:$0xff]
                  %177 = vst [vmem:[%s175] sm:$0xff] %v176
                  %v178 = vld [vmem:[%s174 + $0x8] sm:$0xff]
                  %179 = vst [vmem:[%s175 + $0x8] sm:$0xff] %v178
                  %v180 = vld [vmem:[%s174 + $0x10] sm:$0xff]
                  %181 = vst [vmem:[%s175 + $0x10] sm:$0xff] %v180
                  %v182 = vld [vmem:[%s174 + $0x18] sm:$0xff]
                  %183 = vst [vmem:[%s175 + $0x18] sm:$0xff] %v182
                  %v184 = vld [vmem:[%s174 + $0x20] sm:$0xff]
                  %185 = vst [vmem:[%s175 + $0x20] sm:$0xff] %v184
                  %v186 = vld [vmem:[%s174 + $0x28] sm:$0xff]
                  %187 = vst [vmem:[%s175 + $0x28] sm:$0xff] %v186
                  %v188 = vld [vmem:[%s174 + $0x30] sm:$0xff]
                  %189 = vst [vmem:[%s175 + $0x30] sm:$0xff] %v188
                  %v190 = vld [vmem:[%s174 + $0x38] sm:$0xff]
                  %191 = vst [vmem:[%s175 + $0x38] sm:$0xff] %v190
                  %v192 = vld [vmem:[%s174 + $0x40] sm:$0xff]
                  %193 = vst [vmem:[%s175 + $0x40] sm:$0xff] %v192
                  %v194 = vld [vmem:[%s174 + $0x90] sm:$0xff]
                  %195 = vst [vmem:[%s175 + $0x48] sm:$0xff] %v194
                  %v196 = vld [vmem:[%s174 + $0x98] sm:$0xff]
                  %197 = vst [vmem:[%s175 + $0x50] sm:$0xff] %v196
                  %v198 = vld [vmem:[%s174 + $0xa0] sm:$0xff]
                  %199 = vst [vmem:[%s175 + $0x58] sm:$0xff] %v198
                  %v200 = vld [vmem:[%s174 + $0xa8] sm:$0xff]
                  %201 = vst [vmem:[%s175 + $0x60] sm:$0xff] %v200
                  %v202 = vld [vmem:[%s174 + $0xb0] sm:$0xff]
                  %203 = vst [vmem:[%s175 + $0x68] sm:$0xff] %v202
                  %v204 = vld [vmem:[%s174 + $0xb8] sm:$0xff]
                  %205 = vst [vmem:[%s175 + $0x70] sm:$0xff] %v204
                  %v206 = vld [vmem:[%s174 + $0xc0] sm:$0xff]
                  %207 = vst [vmem:[%s175 + $0x78] sm:$0xff] %v206
                  %v208 = vld [vmem:[%s174 + $0xc8] sm:$0xff]
                  %209 = vst [vmem:[%s175 + $0x80] sm:$0xff] %v208
                  %v210 = vld [vmem:[%s174 + $0xd0] sm:$0xff]
                  %211 = vst [vmem:[%s175 + $0x88] sm:$0xff] %v210
                $region52: #{mss_loss.4} parent=46 // loop_footer
                  %s173 = sadd.s32 1, %s169
                $region53: #{mss_loss.4} parent=46 // loop_footer_branch
                  %168 = sbr.rel target = $region49
                $region54: #{mss_loss.4} parent=46 // loop_exit
                  _
              $region47: #{mss_loss.4} parent=31 // pred_fallthru
                _
              // Predicated region
              $region55: #{mss_loss.4} parent=31 // pred_check
                _
              $region56: #{mss_loss.4} parent=31 // pred_check_branch
                %213 = sbr.rel target = $region58
              $region57: #{mss_loss.4} parent=31 // pred_region
                _
              $region58: #{mss_loss.4} parent=31 // pred_fallthru
                _
            $region32: #{mss_loss.4} parent=27 // pred_fallthru
              _
            // Predicated region
            $region33: #{mss_loss.4} parent=27 // pred_check
              _
            $region34: #{mss_loss.4} parent=27 // pred_check_branch
              %119 = sbr.rel target = $region36
            $region35: #{mss_loss.4} parent=27 // pred_region
              %s121 = ssub.s32 256, 1
              loop: start=0, step=1, limit=1
              $region37: #{mss_loss.4} parent=35 // loop_pre_header
                _
              $region38: #{mss_loss.4} parent=35 // loop_header
                %s123 = sphi 0, %s127
                %p124 = scmp.ge.s32.totalorder %s123, 1
                %s128 = sphi %s113, %s113
                %s129 = sphi %s109, %s109
              $region39: #{mss_loss.4} parent=35 // loop_header_branch
                %126 = sbr.rel (%p124) target = $region43
              $region40: #{mss_loss.4} parent=35 // loop_body
                %v130 = vld [vmem:[%s128] sm:%s121]
                %131 = vst [vmem:[%s129] sm:%s121] %v130
                %v132 = vld [vmem:[%s128 + $0x8] sm:%s121]
                %133 = vst [vmem:[%s129 + $0x8] sm:%s121] %v132
                %v134 = vld [vmem:[%s128 + $0x10] sm:%s121]
                %135 = vst [vmem:[%s129 + $0x10] sm:%s121] %v134
                %v136 = vld [vmem:[%s128 + $0x18] sm:%s121]
                %137 = vst [vmem:[%s129 + $0x18] sm:%s121] %v136
                %v138 = vld [vmem:[%s128 + $0x20] sm:%s121]
                %139 = vst [vmem:[%s129 + $0x20] sm:%s121] %v138
                %v140 = vld [vmem:[%s128 + $0x28] sm:%s121]
                %141 = vst [vmem:[%s129 + $0x28] sm:%s121] %v140
                %v142 = vld [vmem:[%s128 + $0x30] sm:%s121]
                %143 = vst [vmem:[%s129 + $0x30] sm:%s121] %v142
                %v144 = vld [vmem:[%s128 + $0x38] sm:%s121]
                %145 = vst [vmem:[%s129 + $0x38] sm:%s121] %v144
                %v146 = vld [vmem:[%s128 + $0x40] sm:%s121]
                %147 = vst [vmem:[%s129 + $0x40] sm:%s121] %v146
                %v148 = vld [vmem:[%s128 + $0x90] sm:%s121]
                %149 = vst [vmem:[%s129 + $0x48] sm:%s121] %v148
                %v150 = vld [vmem:[%s128 + $0x98] sm:%s121]
                %151 = vst [vmem:[%s129 + $0x50] sm:%s121] %v150
                %v152 = vld [vmem:[%s128 + $0xa0] sm:%s121]
                %153 = vst [vmem:[%s129 + $0x58] sm:%s121] %v152
                %v154 = vld [vmem:[%s128 + $0xa8] sm:%s121]
                %155 = vst [vmem:[%s129 + $0x60] sm:%s121] %v154
                %v156 = vld [vmem:[%s128 + $0xb0] sm:%s121]
                %157 = vst [vmem:[%s129 + $0x68] sm:%s121] %v156
                %v158 = vld [vmem:[%s128 + $0xb8] sm:%s121]
                %159 = vst [vmem:[%s129 + $0x70] sm:%s121] %v158
                %v160 = vld [vmem:[%s128 + $0xc0] sm:%s121]
                %161 = vst [vmem:[%s129 + $0x78] sm:%s121] %v160
                %v162 = vld [vmem:[%s128 + $0xc8] sm:%s121]
                %163 = vst [vmem:[%s129 + $0x80] sm:%s121] %v162
                %v164 = vld [vmem:[%s128 + $0xd0] sm:%s121]
                %165 = vst [vmem:[%s129 + $0x88] sm:%s121] %v164
              $region41: #{mss_loss.4} parent=35 // loop_footer
                %s127 = sadd.s32 1, %s123
              $region42: #{mss_loss.4} parent=35 // loop_footer_branch
                %122 = sbr.rel target = $region38
              $region43: #{mss_loss.4} parent=35 // loop_exit
                _
            $region36: #{mss_loss.4} parent=27 // pred_fallthru
              _
          $region28: #{mss_loss.4} parent=23 // pred_fallthru
            _
          %214 = vnop
        $region24: #{mss_loss.4} parent=19 // pred_fallthru
          _
      $region20: #{mss_loss.4} parent=5 // pred_fallthru
        _
      %p215 = scmp.le.s32.totalorder 1, %s8
      %p216 = scmp.lt.s32.totalorder %s8, 3
      %p217 = pnand %p215, %p216
      %p218 = pneg %p217
      // Predicated region
      $region59: #{mss_loss.4} parent=5 // pred_check
        _
      $region60: #{mss_loss.4} parent=5 // pred_check_branch
        %220 = sbr.rel (%p217) target = $region62
      $region61: #{mss_loss.4} parent=5 // pred_region
        %s221 = ssub.s32 %s8, 1
        %s222 = sand.u32 %s21, 1
        %s223 = sand.u32 %s21, 1
        %s224 = smul.addr %s223, 144
        %s225 = scalar_lea.vmem [#allocation2], %s224
        // Predicated region
        $region63: #{mss_loss.4} parent=61 // pred_check
          %p226 = pneg %p34
        $region64: #{mss_loss.4} parent=61 // pred_check_branch
          %228 = sbr.rel (%p226) target = $region66
        $region65: #{mss_loss.4} parent=61 // pred_region
          _
        $region66: #{mss_loss.4} parent=61 // pred_fallthru
          _
        %s229 = sand.u32 %s21, 1
        %s230 = sand.u32 %s21, 1
        %s231 = smul.addr %s230, 144
        %s232 = scalar_lea.vmem [#allocation2], %s231
        %p233 = pneg %p34
        %p234 = pneg %p31
        %p235 = pneg %p55
        %p236 = pneg %p52
        %p237 = pneg %p81
        %p238 = pneg %p78
        %p239 = scmp.lt.s32.totalorder %s13, 1
        %s240 = scalar_select %p239, %s13, 1
        %s241 = smul.addr %s240, 2
        %s242 = scalar_lea.vmem %s2, %s241
        %s243 = smul.u32 9, %s13
        %p244 = scmp.lt.s32.totalorder %s13, 1
        %s245 = scalar_select %p244, %s13, 1
        %s246 = smul.addr %s245, 2
        %s247 = scalar_lea.vmem %s2, %s246
        %v248 = vld [vmem:[%s225] sm:$0xff]
        %v249 = vld [vmem:[%s225 + $0x8] sm:$0xff]
        %v250 = vld [vmem:[%s225 + $0x10] sm:$0xff]
        %v251 = vld [vmem:[%s225 + $0x18] sm:$0xff]
        %v252 = vld [vmem:[%s225 + $0x20] sm:$0xff]
        %v253 = vld [vmem:[%s225 + $0x28] sm:$0xff]
        %v254 = vld [vmem:[%s225 + $0x30] sm:$0xff]
        %v255 = vld [vmem:[%s225 + $0x38] sm:$0xff]
        %v256 = vld [vmem:[%s225 + $0x40] sm:$0xff]
        %v257 = vld [vmem:[%s225 + $0x48] sm:$0xff]
        %v258 = vld [vmem:[%s225 + $0x50] sm:$0xff]
        %v259 = vld [vmem:[%s225 + $0x58] sm:$0xff]
        %v260 = vld [vmem:[%s225 + $0x60] sm:$0xff]
        %v261 = vld [vmem:[%s225 + $0x68] sm:$0xff]
        %v262 = vld [vmem:[%s225 + $0x70] sm:$0xff]
        %v263 = vld [vmem:[%s225 + $0x78] sm:$0xff]
        %v264 = vld [vmem:[%s225 + $0x80] sm:$0xff]
        %v265 = vld [vmem:[%s225 + $0x88] sm:$0xff]
        %v266 = vld [vmem:[%s1] sm:$0xff]
        %v267 = vld [vmem:[%s1 + $0x8] sm:$0xff]
        %v268 = vld [vmem:[%s1 + $0x10] sm:$0xff]
        %v269 = vld [vmem:[%s1 + $0x18] sm:$0xff]
        %v270 = vld [vmem:[%s1 + $0x20] sm:$0xff]
        %v271 = vld [vmem:[%s1 + $0x28] sm:$0xff]
        %v272 = vld [vmem:[%s1 + $0x30] sm:$0xff]
        %v273 = vld [vmem:[%s1 + $0x38] sm:$0xff]
        %v274 = vld [vmem:[%s1 + $0x40] sm:$0xff]
        %v275 = vld [vmem:[%s1 + $0x48] sm:$0xff]
        %v276 = vld [vmem:[%s1 + $0x50] sm:$0xff]
        %v277 = vld [vmem:[%s1 + $0x58] sm:$0xff]
        %v278 = vld [vmem:[%s1 + $0x60] sm:$0xff]
        %v279 = vld [vmem:[%s1 + $0x68] sm:$0xff]
        %v280 = vld [vmem:[%s1 + $0x70] sm:$0xff]
        %v281 = vld [vmem:[%s1 + $0x78] sm:$0xff]
        %v282 = vld [vmem:[%s1 + $0x80] sm:$0xff]
        %v283 = vld [vmem:[%s1 + $0x88] sm:$0xff]
        %v284 = vld [vmem:[%s1 + $0x90] sm:$0xff]
        %v285 = vld [vmem:[%s1 + $0x98] sm:$0xff]
        %v286 = vld [vmem:[%s1 + $0xa0] sm:$0xff]
        %v287 = vld [vmem:[%s1 + $0xa8] sm:$0xff]
        %v288 = vld [vmem:[%s1 + $0xb0] sm:$0xff]
        %v289 = vld [vmem:[%s1 + $0xb8] sm:$0xff]
        %v290 = vld [vmem:[%s1 + $0xc0] sm:$0xff]
        %v291 = vld [vmem:[%s1 + $0xc8] sm:$0xff]
        %v292 = vld [vmem:[%s1 + $0xd0] sm:$0xff]
        %v293 = vld [vmem:[%s1 + $0xd8] sm:$0xff]
        %v294 = vld [vmem:[%s1 + $0xe0] sm:$0xff]
        %v295 = vld [vmem:[%s1 + $0xe8] sm:$0xff]
        %v296 = vld [vmem:[%s1 + $0xf0] sm:$0xff]
        %v297 = vld [vmem:[%s1 + $0xf8] sm:$0xff]
        %v316 = vunpack.c.l.b16 %v248
        %v317 = vunpack.c.h.b16 %v248
        %v318 = vunpack.c.l.b16 %v249
        %v319 = vunpack.c.h.b16 %v249
        %v320 = vunpack.c.l.b16 %v250
        %v321 = vunpack.c.h.b16 %v250
        %v322 = vunpack.c.l.b16 %v251
        %v323 = vunpack.c.h.b16 %v251
        %v324 = vunpack.c.l.b16 %v252
        %v325 = vunpack.c.h.b16 %v252
        %v326 = vunpack.c.l.b16 %v253
        %v327 = vunpack.c.h.b16 %v253
        %v328 = vunpack.c.l.b16 %v254
        %v329 = vunpack.c.h.b16 %v254
        %v330 = vunpack.c.l.b16 %v255
        %v331 = vunpack.c.h.b16 %v255
        %v332 = vunpack.c.l.b16 %v256
        %v333 = vunpack.c.h.b16 %v256
        %v334 = vunpack.c.l.b16 %v257
        %v335 = vunpack.c.h.b16 %v257
        %v336 = vunpack.c.l.b16 %v258
        %v337 = vunpack.c.h.b16 %v258
        %v338 = vunpack.c.l.b16 %v259
        %v339 = vunpack.c.h.b16 %v259
        %v340 = vunpack.c.l.b16 %v260
        %v341 = vunpack.c.h.b16 %v260
        %v342 = vunpack.c.l.b16 %v261
        %v343 = vunpack.c.h.b16 %v261
        %v344 = vunpack.c.l.b16 %v262
        %v345 = vunpack.c.h.b16 %v262
        %v346 = vunpack.c.l.b16 %v263
        %v347 = vunpack.c.h.b16 %v263
        %v348 = vunpack.c.l.b16 %v264
        %v349 = vunpack.c.h.b16 %v264
        %v350 = vunpack.c.l.b16 %v265
        %v351 = vunpack.c.h.b16 %v265
        %v352 = vpack.c.b16 %v318, %v316
        %v353 = vpack.c.b16 %v319, %v317
        %v354 = vpack.c.b16 %v322, %v320
        %v355 = vpack.c.b16 %v323, %v321
        %v356 = vpack.c.b16 %v326, %v324
        %v357 = vpack.c.b16 %v327, %v325
        %v358 = vpack.c.b16 %v330, %v328
        %v359 = vpack.c.b16 %v331, %v329
        %v360 = vpack.c.b16 %v334, %v332
        %v361 = vpack.c.b16 %v335, %v333
        %v362 = vpack.c.b16 %v338, %v336
        %v363 = vpack.c.b16 %v339, %v337
        %v364 = vpack.c.b16 %v342, %v340
        %v365 = vpack.c.b16 %v343, %v341
        %v366 = vpack.c.b16 %v346, %v344
        %v367 = vpack.c.b16 %v347, %v345
        %v368 = vpack.c.b16 %v350, %v348
        %v369 = vpack.c.b16 %v351, %v349
        %v420 = vunpack.c.l.b16 %v266
        %v421 = vunpack.c.h.b16 %v266
        %v422 = vunpack.c.l.b16 %v267
        %v423 = vunpack.c.h.b16 %v267
        %v424 = vunpack.c.l.b16 %v268
        %v425 = vunpack.c.h.b16 %v268
        %v426 = vunpack.c.l.b16 %v269
        %v427 = vunpack.c.h.b16 %v269
        %v428 = vunpack.c.l.b16 %v270
        %v429 = vunpack.c.h.b16 %v270
        %v430 = vunpack.c.l.b16 %v271
        %v431 = vunpack.c.h.b16 %v271
        %v432 = vunpack.c.l.b16 %v272
        %v433 = vunpack.c.h.b16 %v272
        %v434 = vunpack.c.l.b16 %v273
        %v435 = vunpack.c.h.b16 %v273
        %v436 = vunpack.c.l.b16 %v274
        %v437 = vunpack.c.h.b16 %v274
        %v438 = vunpack.c.l.b16 %v275
        %v439 = vunpack.c.h.b16 %v275
        %v440 = vunpack.c.l.b16 %v276
        %v441 = vunpack.c.h.b16 %v276
        %v442 = vunpack.c.l.b16 %v277
        %v443 = vunpack.c.h.b16 %v277
        %v444 = vunpack.c.l.b16 %v278
        %v445 = vunpack.c.h.b16 %v278
        %v446 = vunpack.c.l.b16 %v279
        %v447 = vunpack.c.h.b16 %v279
        %v448 = vunpack.c.l.b16 %v280
        %v449 = vunpack.c.h.b16 %v280
        %v450 = vunpack.c.l.b16 %v281
        %v451 = vunpack.c.h.b16 %v281
        %v452 = vunpack.c.l.b16 %v282
        %v453 = vunpack.c.h.b16 %v282
        %v454 = vunpack.c.l.b16 %v283
        %v455 = vunpack.c.h.b16 %v283
        %v456 = vunpack.c.l.b16 %v284
        %v457 = vunpack.c.h.b16 %v284
        %v458 = vunpack.c.l.b16 %v285
        %v459 = vunpack.c.h.b16 %v285
        %v460 = vunpack.c.l.b16 %v286
        %v461 = vunpack.c.h.b16 %v286
        %v462 = vunpack.c.l.b16 %v287
        %v463 = vunpack.c.h.b16 %v287
        %v464 = vunpack.c.l.b16 %v288
        %v465 = vunpack.c.h.b16 %v288
        %v466 = vunpack.c.l.b16 %v289
        %v467 = vunpack.c.h.b16 %v289
        %v468 = vunpack.c.l.b16 %v290
        %v469 = vunpack.c.h.b16 %v290
        %v470 = vunpack.c.l.b16 %v291
        %v471 = vunpack.c.h.b16 %v291
        %v472 = vunpack.c.l.b16 %v292
        %v473 = vunpack.c.h.b16 %v292
        %v474 = vunpack.c.l.b16 %v293
        %v475 = vunpack.c.h.b16 %v293
        %v476 = vunpack.c.l.b16 %v294
        %v477 = vunpack.c.h.b16 %v294
        %v478 = vunpack.c.l.b16 %v295
        %v479 = vunpack.c.h.b16 %v295
        %v480 = vunpack.c.l.b16 %v296
        %v481 = vunpack.c.h.b16 %v296
        %v482 = vunpack.c.l.b16 %v297
        %v483 = vunpack.c.h.b16 %v297
        %v484 = vpack.c.b16 %v422, %v420
        %v485 = vpack.c.b16 %v423, %v421
        %v486 = vpack.c.b16 %v426, %v424
        %v487 = vpack.c.b16 %v427, %v425
        %v488 = vpack.c.b16 %v430, %v428
        %v489 = vpack.c.b16 %v431, %v429
        %v490 = vpack.c.b16 %v434, %v432
        %v491 = vpack.c.b16 %v435, %v433
        %v492 = vpack.c.b16 %v438, %v436
        %v493 = vpack.c.b16 %v439, %v437
        %v494 = vpack.c.b16 %v442, %v440
        %v495 = vpack.c.b16 %v443, %v441
        %v496 = vpack.c.b16 %v446, %v444
        %v497 = vpack.c.b16 %v447, %v445
        %v498 = vpack.c.b16 %v450, %v448
        %v499 = vpack.c.b16 %v451, %v449
        %v500 = vpack.c.b16 %v454, %v452
        %v501 = vpack.c.b16 %v455, %v453
        %v502 = vpack.c.b16 %v458, %v456
        %v503 = vpack.c.b16 %v459, %v457
        %v504 = vpack.c.b16 %v462, %v460
        %v505 = vpack.c.b16 %v463, %v461
        %v506 = vpack.c.b16 %v466, %v464
        %v507 = vpack.c.b16 %v467, %v465
        %v508 = vpack.c.b16 %v470, %v468
        %v509 = vpack.c.b16 %v471, %v469
        %v510 = vpack.c.b16 %v474, %v472
        %v511 = vpack.c.b16 %v475, %v473
        %v512 = vpack.c.b16 %v478, %v476
        %v513 = vpack.c.b16 %v479, %v477
        %v514 = vpack.c.b16 %v482, %v480
        %v515 = vpack.c.b16 %v483, %v481
        %548 = vmatprep.subr.bf16.mxu0 %v499
        %549 = vmatpush1.bf16.msra.mxu0 %v498
        %550 = vmatprep.subr.bf16.mxu0 %v497
        %551 = vmatpush1.bf16.msra.mxu0 %v496
        %552 = vmatprep.subr.bf16.mxu0 %v495
        %553 = vmatpush1.bf16.msra.mxu0 %v494
        %554 = vmatprep.subr.bf16.mxu0 %v493
        %555 = vmatpush1.bf16.msra.mxu0 %v492
        %556 = vmatprep.subr.bf16.mxu0 %v491
        %557 = vmatpush1.bf16.msra.mxu0 %v490
        %558 = vmatprep.subr.bf16.mxu0 %v489
        %559 = vmatpush1.bf16.msra.mxu0 %v488
        %560 = vmatprep.subr.bf16.mxu0 %v487
        %561 = vmatpush1.bf16.msra.mxu0 %v486
        %562 = vmatprep.subr.bf16.mxu0 %v485
        %563 = vmatpush1.bf16.msra.mxu0 %v484
        %564 = vmatprep.subr.bf16.mxu0 %v515
        %565 = vmatpush2.bf16.msra.mxu0 %v514
        %566 = vmatprep.subr.bf16.mxu0 %v513
        %567 = vmatpush2.bf16.msra.mxu0 %v512
        %568 = vmatprep.subr.bf16.mxu0 %v511
        %569 = vmatpush2.bf16.msra.mxu0 %v510
        %570 = vmatprep.subr.bf16.mxu0 %v509
        %571 = vmatpush2.bf16.msra.mxu0 %v508
        %572 = vmatprep.subr.bf16.mxu0 %v507
        %573 = vmatpush2.bf16.msra.mxu0 %v506
        %574 = vmatprep.subr.bf16.mxu0 %v505
        %575 = vmatpush2.bf16.msra.mxu0 %v504
        %576 = vmatprep.subr.bf16.mxu0 %v503
        %577 = vmatpush2.bf16.msra.mxu0 %v502
        %578 = vmatprep.subr.bf16.mxu0 %v501
        %579 = vmatpush2.bf16.msra.mxu0 %v500
        %580 = vmatprep.mubr.bf16.mxu0 %v353
        %581 = vmatmul.mubr.bf16.gmra.mxu0 %v352
        %v582 = vpop.f32.mrf.mxu0
        %v583 = vadd.f32 0.0, %v582
        %v584 = vpop.f32.mrf.mxu0
        %v585 = vadd.f32 0.0, %v584
        %v586 = vpop.f32.mrf.mxu0
        %v587 = vadd.f32 0.0, %v586
        %v588 = vpop.f32.mrf.mxu0
        %v589 = vadd.f32 0.0, %v588
        %590 = vmatprep.mubr.bf16.mxu0 %v355
        %591 = vmatmul.mubr.bf16.gmra.mxu0 %v354
        %v592 = vpop.f32.mrf.mxu0
        %v593 = vadd.f32 0.0, %v592
        %v594 = vpop.f32.mrf.mxu0
        %v595 = vadd.f32 0.0, %v594
        %v596 = vpop.f32.mrf.mxu0
        %v597 = vadd.f32 0.0, %v596
        %v598 = vpop.f32.mrf.mxu0
        %v599 = vadd.f32 0.0, %v598
        %600 = vmatprep.mubr.bf16.mxu0 %v357
        %601 = vmatmul.mubr.bf16.gmra.mxu0 %v356
        %v602 = vpop.f32.mrf.mxu0
        %v603 = vadd.f32 0.0, %v602
        %v604 = vpop.f32.mrf.mxu0
        %v605 = vadd.f32 0.0, %v604
        %v606 = vpop.f32.mrf.mxu0
        %v607 = vadd.f32 0.0, %v606
        %v608 = vpop.f32.mrf.mxu0
        %v609 = vadd.f32 0.0, %v608
        %610 = vmatprep.mubr.bf16.mxu0 %v359
        %611 = vmatmul.mubr.bf16.gmra.mxu0 %v358
        %v612 = vpop.f32.mrf.mxu0
        %v613 = vadd.f32 0.0, %v612
        %v614 = vpop.f32.mrf.mxu0
        %v615 = vadd.f32 0.0, %v614
        %v616 = vpop.f32.mrf.mxu0
        %v617 = vadd.f32 0.0, %v616
        %v618 = vpop.f32.mrf.mxu0
        %v619 = vadd.f32 0.0, %v618
        %620 = vmatprep.mubr.bf16.mxu0 %v361
        %621 = vmatmul.mubr.bf16.gmra.mxu0 %v360
        %v622 = vpop.f32.mrf.mxu0
        %v623 = vadd.f32 0.0, %v622
        %v624 = vpop.f32.mrf.mxu0
        %v625 = vadd.f32 0.0, %v624
        %v626 = vpop.f32.mrf.mxu0
        %v627 = vadd.f32 0.0, %v626
        %v628 = vpop.f32.mrf.mxu0
        %v629 = vadd.f32 0.0, %v628
        %630 = vmatprep.mubr.bf16.mxu0 %v363
        %631 = vmatmul.mubr.bf16.gmra.mxu0 %v362
        %v632 = vpop.f32.mrf.mxu0
        %v633 = vadd.f32 0.0, %v632
        %v634 = vpop.f32.mrf.mxu0
        %v635 = vadd.f32 0.0, %v634
        %v636 = vpop.f32.mrf.mxu0
        %v637 = vadd.f32 0.0, %v636
        %v638 = vpop.f32.mrf.mxu0
        %v639 = vadd.f32 0.0, %v638
        %640 = vmatprep.mubr.bf16.mxu0 %v365
        %641 = vmatmul.mubr.bf16.gmra.mxu0 %v364
        %v642 = vpop.f32.mrf.mxu0
        %v643 = vadd.f32 0.0, %v642
        %v644 = vpop.f32.mrf.mxu0
        %v645 = vadd.f32 0.0, %v644
        %v646 = vpop.f32.mrf.mxu0
        %v647 = vadd.f32 0.0, %v646
        %v648 = vpop.f32.mrf.mxu0
        %v649 = vadd.f32 0.0, %v648
        %650 = vmatprep.mubr.bf16.mxu0 %v367
        %651 = vmatmul.mubr.bf16.gmra.mxu0 %v366
        %v652 = vpop.f32.mrf.mxu0
        %v653 = vadd.f32 0.0, %v652
        %v654 = vpop.f32.mrf.mxu0
        %v655 = vadd.f32 0.0, %v654
        %v656 = vpop.f32.mrf.mxu0
        %v657 = vadd.f32 0.0, %v656
        %v658 = vpop.f32.mrf.mxu0
        %v659 = vadd.f32 0.0, %v658
        %660 = vmatprep.mubr.bf16.mxu0 %v369
        %661 = vmatmul.mubr.bf16.gmra.mxu0 %v368
        %v662 = vpop.f32.mrf.mxu0
        %v663 = vadd.f32 0.0, %v662
        %v664 = vpop.f32.mrf.mxu0
        %v665 = vadd.f32 0.0, %v664
        %v666 = vpop.f32.mrf.mxu0
        %v667 = vadd.f32 0.0, %v666
        %v668 = vpop.f32.mrf.mxu0
        %v669 = vadd.f32 0.0, %v668
        %670 = vdwg.mxu0
        %v671 = vmul.f32 %v583, %v583
        %v672 = vmul.f32 %v585, %v585
        %v673 = vmul.f32 %v587, %v587
        %v674 = vmul.f32 %v589, %v589
        %v675 = vmul.f32 %v593, %v593
        %v676 = vmul.f32 %v595, %v595
        %v677 = vmul.f32 %v597, %v597
        %v678 = vmul.f32 %v599, %v599
        %v679 = vmul.f32 %v603, %v603
        %v680 = vmul.f32 %v605, %v605
        %v681 = vmul.f32 %v607, %v607
        %v682 = vmul.f32 %v609, %v609
        %v683 = vmul.f32 %v613, %v613
        %v684 = vmul.f32 %v615, %v615
        %v685 = vmul.f32 %v617, %v617
        %v686 = vmul.f32 %v619, %v619
        %v687 = vmul.f32 %v623, %v623
        %v688 = vmul.f32 %v625, %v625
        %v689 = vmul.f32 %v627, %v627
        %v690 = vmul.f32 %v629, %v629
        %v691 = vmul.f32 %v633, %v633
        %v692 = vmul.f32 %v635, %v635
        %v693 = vmul.f32 %v637, %v637
        %v694 = vmul.f32 %v639, %v639
        %v695 = vmul.f32 %v643, %v643
        %v696 = vmul.f32 %v645, %v645
        %v697 = vmul.f32 %v647, %v647
        %v698 = vmul.f32 %v649, %v649
        %v699 = vmul.f32 %v653, %v653
        %v700 = vmul.f32 %v655, %v655
        %v701 = vmul.f32 %v657, %v657
        %v702 = vmul.f32 %v659, %v659
        %v703 = vmul.f32 %v663, %v663
        %v704 = vmul.f32 %v665, %v665
        %v705 = vmul.f32 %v667, %v667
        %v706 = vmul.f32 %v669, %v669
        %v707 = vadd.f32 %v671, %v672
        %v708 = vadd.f32 %v673, %v674
        %v709 = vadd.f32 %v675, %v676
        %v710 = vadd.f32 %v677, %v678
        %v711 = vadd.f32 %v679, %v680
        %v712 = vadd.f32 %v681, %v682
        %v713 = vadd.f32 %v683, %v684
        %v714 = vadd.f32 %v685, %v686
        %v715 = vadd.f32 %v687, %v688
        %v716 = vadd.f32 %v689, %v690
        %v717 = vadd.f32 %v691, %v692
        %v718 = vadd.f32 %v693, %v694
        %v719 = vadd.f32 %v695, %v696
        %v720 = vadd.f32 %v697, %v698
        %v721 = vadd.f32 %v699, %v700
        %v722 = vadd.f32 %v701, %v702
        %v723 = vadd.f32 %v703, %v704
        %v724 = vadd.f32 %v705, %v706
        %v725 = vsub.f32 %v707, %v716
        %v726 = vsub.f32 %v708, %v717
        %v727 = vsub.f32 %v709, %v718
        %v728 = vsub.f32 %v710, %v719
        %v729 = vsub.f32 %v711, %v720
        %v730 = vsub.f32 %v712, %v721
        %v731 = vsub.f32 %v713, %v722
        %v732 = vsub.f32 %v714, %v723
        %v733 = vsub.f32 %v715, %v724
        %v734 = vand.u32 2147483647, %v725
        %v735 = vand.u32 2147483647, %v726
        %v736 = vand.u32 2147483647, %v727
        %v737 = vand.u32 2147483647, %v728
        %v738 = vand.u32 2147483647, %v729
        %v739 = vand.u32 2147483647, %v730
        %v740 = vand.u32 2147483647, %v731
        %v741 = vand.u32 2147483647, %v732
        %v742 = vand.u32 2147483647, %v733
        %v743 = vadd.f32 %v734, %v735
        %v744 = vadd.f32 %v743, %v736
        %v745 = vadd.f32 %v744, %v737
        %v746 = vadd.f32 %v745, %v738
        %v747 = vadd.f32 %v746, %v739
        %v748 = vadd.f32 %v747, %v740
        %v749 = vadd.f32 %v748, %v741
        %v750 = vadd.f32 %v749, %v742
        %v751 = vrot.slane %v750, 4
        %v752 = vadd.f32 %v750, %v751
        %v753 = vrot.slane %v752, 2
        %v754 = vadd.f32 %v752, %v753
        %v755 = vrot.slane %v754, 1
        %v756 = vadd.f32 %v754, %v755
        %v757 = vadd.f32 %v716, 1e-07
        %v758 = vadd.f32 %v717, 1e-07
        %v759 = vadd.f32 %v718, 1e-07
        %v760 = vadd.f32 %v719, 1e-07
        %v761 = vadd.f32 %v720, 1e-07
        %v762 = vadd.f32 %v721, 1e-07
        %v763 = vadd.f32 %v722, 1e-07
        %v764 = vadd.f32 %v723, 1e-07
        %v765 = vadd.f32 %v724, 1e-07
        %v766 = vadd.f32 %v707, 1e-07
        %v767 = vadd.f32 %v708, 1e-07
        %v768 = vadd.f32 %v709, 1e-07
        %v769 = vadd.f32 %v710, 1e-07
        %v770 = vadd.f32 %v711, 1e-07
        %v771 = vadd.f32 %v712, 1e-07
        %v772 = vadd.f32 %v713, 1e-07
        %v773 = vadd.f32 %v714, 1e-07
        %v774 = vadd.f32 %v715, 1e-07
        %v775 = vrcp.pop %v766
        %v776 = vrcp.pop %v767
        %v777 = vrcp.pop %v768
        %v778 = vrcp.pop %v769
        %v779 = vrcp.pop %v770
        %v780 = vrcp.pop %v771
        %v781 = vrcp.pop %v772
        %v782 = vrcp.pop %v773
        %v783 = vrcp.pop %v774
        %v784 = vmul.f32 %v757, %v775
        %v785 = vmul.f32 %v758, %v776
        %v786 = vmul.f32 %v759, %v777
        %v787 = vmul.f32 %v760, %v778
        %v788 = vmul.f32 %v761, %v779
        %v789 = vmul.f32 %v762, %v780
        %v790 = vmul.f32 %v763, %v781
        %v791 = vmul.f32 %v764, %v782
        %v792 = vmul.f32 %v765, %v783
        %v793 = vlog2.pop %v784
        %v794 = vmul.f32 %v793, 0.6931472
        %v795 = vlog2.pop %v785
        %v796 = vmul.f32 %v795, 0.6931472
        %v797 = vlog2.pop %v786
        %v798 = vmul.f32 %v797, 0.6931472
        %v799 = vlog2.pop %v787
        %v800 = vmul.f32 %v799, 0.6931472
        %v801 = vlog2.pop %v788
        %v802 = vmul.f32 %v801, 0.6931472
        %v803 = vlog2.pop %v789
        %v804 = vmul.f32 %v803, 0.6931472
        %v805 = vlog2.pop %v790
        %v806 = vmul.f32 %v805, 0.6931472
        %v807 = vlog2.pop %v791
        %v808 = vmul.f32 %v807, 0.6931472
        %v809 = vlog2.pop %v792
        %v810 = vmul.f32 %v809, 0.6931472
        %v811 = vrcp.pop 0.6931472
        %v812 = vmul.f32 %v794, %v811
        %v813 = vmul.f32 %v796, %v811
        %v814 = vmul.f32 %v798, %v811
        %v815 = vmul.f32 %v800, %v811
        %v816 = vmul.f32 %v802, %v811
        %v817 = vmul.f32 %v804, %v811
        %v818 = vmul.f32 %v806, %v811
        %v819 = vmul.f32 %v808, %v811
        %v820 = vmul.f32 %v810, %v811
        %v821 = vand.u32 2147483647, %v812
        %v822 = vand.u32 2147483647, %v813
        %v823 = vand.u32 2147483647, %v814
        %v824 = vand.u32 2147483647, %v815
        %v825 = vand.u32 2147483647, %v816
        %v826 = vand.u32 2147483647, %v817
        %v827 = vand.u32 2147483647, %v818
        %v828 = vand.u32 2147483647, %v819
        %v829 = vand.u32 2147483647, %v820
        %v830 = vadd.f32 %v821, %v822
        %v831 = vadd.f32 %v830, %v823
        %v832 = vadd.f32 %v831, %v824
        %v833 = vadd.f32 %v832, %v825
        %v834 = vadd.f32 %v833, %v826
        %v835 = vadd.f32 %v834, %v827
        %v836 = vadd.f32 %v835, %v828
        %v837 = vadd.f32 %v836, %v829
        %v838 = vrot.slane %v837, 4
        %v839 = vadd.f32 %v837, %v838
        %v840 = vrot.slane %v839, 2
        %v841 = vadd.f32 %v839, %v840
        %v842 = vrot.slane %v841, 1
        %v843 = vadd.f32 %v841, %v842
        %vm844 = vcmask 1040384
        %v845 = vsel %vm844, %v756, %v843
        %846 = vst [vmem:[%s247] sm:$0x3] %v845
        %p847 = scmp.lt.s32.totalorder %s13, 1
        %s848 = scalar_select %p847, %s13, 1
        %s849 = smul.addr %s848, 2
        %s850 = scalar_lea.vmem %s2, %s849
        // Predicated region
        $region67: #{mss_loss.4} parent=61 // pred_check
          %p851 = pneg %p78
        $region68: #{mss_loss.4} parent=61 // pred_check_branch
          %853 = sbr.rel (%p851) target = $region70
        $region69: #{mss_loss.4} parent=61 // pred_region
          _
        $region70: #{mss_loss.4} parent=61 // pred_fallthru
          _
      $region62: #{mss_loss.4} parent=5 // pred_fallthru
        _
      %p854 = scmp.le.s32.totalorder 2, %s8
      // Predicated region
      $region71: #{mss_loss.4} parent=5 // pred_check
        %p855 = pneg %p854
      $region72: #{mss_loss.4} parent=5 // pred_check_branch
        %857 = sbr.rel (%p855) target = $region74
      $region73: #{mss_loss.4} parent=5 // pred_region
        %s858 = ssub.s32 %s8, 2
        // Predicated region
        $region75: #{mss_loss.4} parent=73 // pred_check
          %p859 = pneg %p84
        $region76: #{mss_loss.4} parent=73 // pred_check_branch
          %861 = sbr.rel (%p859) target = $region78
        $region77: #{mss_loss.4} parent=73 // pred_region
          %p862 = scmp.lt.s32.totalorder %s14, 1
          %s863 = scalar_select %p862, %s14, 1
          %s864 = smul.addr %s863, 2
          %s865 = scalar_lea.vmem %s2, %s864
        $region78: #{mss_loss.4} parent=73 // pred_fallthru
          _
      $region74: #{mss_loss.4} parent=5 // pred_fallthru
        _
    $region6: #{mss_loss.4} parent=1 // loop_footer
      %s12 = sadd.s32 1, %s8
    $region7: #{mss_loss.4} parent=1 // loop_footer_branch
      %7 = sbr.rel target = $region3
    $region8: #{mss_loss.4} parent=1 // loop_exit
      _

// kernel: mss_loss.3
$region0: #{mss_loss.3}
  #allocation0 [shape = 'u32[]', space=smem, size = 0x4, offset = 0x4, fixed_abs, tag = 'smem constant byte address 0x4 - core index']
  #allocation1 [shape = 'u32[144,128]{1,0:T(1,128)}', space=vmem, size = 0x12000, scoped, tag = 'internal scratch']
  %s0 = inlined_call_operand.vmem [shape: bf16[2,80,512], index: 0, kind: input, shape index: {}]
  %s1 = inlined_call_operand.vmem [shape: bf16[512,512], index: 1, kind: input, shape index: {}]
  %s2 = inlined_call_operand.vmem [shape: f32[2,2,256], index: 2, kind: output, shape index: {}]
  %s3 = sld [smem:[#allocation0]]
  $region64: #{mss_loss.3} parent=0
    _
  %s5 = ssub.s32 1, %s3
  %s6 = scalar_select 0, %s5, %s3
  $region1: #{mss_loss.3} parent=0
    #allocation2 [shape = 'u8[163840]{0}', space=vmem, size = 0x28000, scoped, tag = 'input window, operand 0']
    loop: start=0, step=1, limit=4
    $region2: #{mss_loss.3} parent=1 // loop_pre_header
      _
    $region3: #{mss_loss.3} parent=1 // loop_header
      %s8 = sphi 0, %s12
      %p9 = scmp.ge.s32.totalorder %s8, 4
      %s18 = sphi 0, %s20
      %s21 = sphi 0, %s18
      %s22 = sphi 0, %s21
      %s38 = sphi 0, %s22
      %s42 = sphi 0, %s42
      %s44 = sphi 0, %s42
      %s45 = sphi 0, %s44
      %s59 = sphi 0, %s45
      %s65 = sphi 0, %s67
      %s68 = sphi 0, %s65
      %s69 = sphi 0, %s68
      %s85 = sphi 0, %s69
    $region4: #{mss_loss.3} parent=1 // loop_header_branch
      %11 = sbr.rel (%p9) target = $region8
    $region5: #{mss_loss.3} parent=1 // loop_body
      %s13 = ssub.s32 %s8, 1
      %s14 = ssub.s32 %s8, 2
      %s15 = sadd.s32 %s8, 1
      %s16 = ssub.s32 %s8, %s15
      %p17 = scmp.eq.s32.totalorder %s16, 0
      %s19 = sadd.s32 %s18, 1
      %s20 = scalar_select %p17, %s18, %s19
      %p23 = pneg %p17
      %p24 = scmp.eq.s32.totalorder %s8, 1
      %p25 = por %p23, %p24
      %p26 = scmp.ne.s32.totalorder %s18, %s21
      %p27 = scmp.eq.s32.totalorder %s8, 0
      %p28 = por %p26, %p27
      %p29 = scmp.ne.s32.totalorder %s18, %s21
      %p30 = scmp.eq.s32.totalorder %s13, 1
      %p31 = por %p29, %p30
      %p32 = scmp.ne.s32.totalorder %s21, %s22
      %p33 = scmp.eq.s32.totalorder %s13, 0
      %p34 = por %p32, %p33
      %p35 = scmp.ne.s32.totalorder %s21, %s22
      %p36 = scmp.eq.s32.totalorder %s14, 1
      %p37 = por %p35, %p36
      %p39 = scmp.ne.s32.totalorder %s22, %s38
      %p40 = scmp.eq.s32.totalorder %s14, 0
      %p41 = por %p39, %p40
      %s43 = sadd.s32 %s42, 1
      %p46 = scmp.eq.s32.totalorder %s8, 1
      %p47 = scmp.ne.s32.totalorder %s42, %s44
      %p48 = scmp.eq.s32.totalorder %s8, 0
      %p49 = por %p47, %p48
      %p50 = scmp.ne.s32.totalorder %s42, %s44
      %p51 = scmp.eq.s32.totalorder %s13, 1
      %p52 = por %p50, %p51
      %p53 = scmp.ne.s32.totalorder %s44, %s45
      %p54 = scmp.eq.s32.totalorder %s13, 0
      %p55 = por %p53, %p54
      %p56 = scmp.ne.s32.totalorder %s44, %s45
      %p57 = scmp.eq.s32.totalorder %s14, 1
      %p58 = por %p56, %p57
      %p60 = scmp.ne.s32.totalorder %s45, %s59
      %p61 = scmp.eq.s32.totalorder %s14, 0
      %p62 = por %p60, %p61
      %s63 = ssub.s32 %s8, %s15
      %p64 = scmp.eq.s32.totalorder %s63, 0
      %s66 = sadd.s32 %s65, 1
      %s67 = scalar_select %p64, %s65, %s66
      %p70 = pneg %p64
      %p71 = scmp.eq.s32.totalorder %s8, 1
      %p72 = por %p70, %p71
      %p73 = scmp.ne.s32.totalorder %s65, %s68
      %p74 = scmp.eq.s32.totalorder %s8, 0
      %p75 = por %p73, %p74
      %p76 = scmp.ne.s32.totalorder %s65, %s68
      %p77 = scmp.eq.s32.totalorder %s13, 1
      %p78 = por %p76, %p77
      %p79 = scmp.ne.s32.totalorder %s68, %s69
      %p80 = scmp.eq.s32.totalorder %s13, 0
      %p81 = por %p79, %p80
      %p82 = scmp.ne.s32.totalorder %s68, %s69
      %p83 = scmp.eq.s32.totalorder %s14, 1
      %p84 = por %p82, %p83
      %p86 = scmp.ne.s32.totalorder %s69, %s85
      %p87 = scmp.eq.s32.totalorder %s14, 0
      %p88 = por %p86, %p87
      %p89 = scmp.le.s32.totalorder 1, %s8
      %p90 = scmp.lt.s32.totalorder %s8, 3
      %p91 = pnand %p89, %p90
      %p92 = pneg %p91
      // Predicated region
      $region9: #{mss_loss.3} parent=5 // pred_check
        _
      $region10: #{mss_loss.3} parent=5 // pred_check_branch
        %94 = sbr.rel (%p91) target = $region12
      $region11: #{mss_loss.3} parent=5 // pred_region
        %s95 = ssub.s32 %s8, 1
        // Predicated region
        $region13: #{mss_loss.3} parent=11 // pred_check
          %p96 = pneg %p55
        $region14: #{mss_loss.3} parent=11 // pred_check_branch
          %98 = sbr.rel (%p96) target = $region16
        $region15: #{mss_loss.3} parent=11 // pred_region
          _
        $region16: #{mss_loss.3} parent=11 // pred_fallthru
          _
      $region12: #{mss_loss.3} parent=5 // pred_fallthru
        _
      %p99 = scmp.lt.s32.totalorder %s8, 2
      // Predicated region
      $region17: #{mss_loss.3} parent=5 // pred_check
        %p100 = pneg %p99
      $region18: #{mss_loss.3} parent=5 // pred_check_branch
        %102 = sbr.rel (%p100) target = $region20
      $region19: #{mss_loss.3} parent=5 // pred_region
        // Predicated region
        $region21: #{mss_loss.3} parent=19 // pred_check
          %p103 = pneg %p28
        $region22: #{mss_loss.3} parent=19 // pred_check_branch
          %105 = sbr.rel (%p103) target = $region24
        $region23: #{mss_loss.3} parent=19 // pred_region
          %s106 = sand.u32 %s18, 1
          %s107 = sand.u32 %s18, 1
          %s108 = smul.addr %s107, 160
          %s109 = scalar_lea.vmem [#allocation2], %s108
          %s110 = smul.u32 5, %s8
          %s111 = smul.addr %s110, 4
          %s112 = smul.addr %s111, 4
          %s113 = scalar_lea.vmem %s0, %s112
          // Predicated region
          $region25: #{mss_loss.3} parent=23 // pred_check
            _
          $region26: #{mss_loss.3} parent=23 // pred_check_branch
            %115 = sbr.rel (0) target = $region28
          $region27: #{mss_loss.3} parent=23 // pred_region
            // Predicated region
            $region29: #{mss_loss.3} parent=27 // pred_check
              _
            $region30: #{mss_loss.3} parent=27 // pred_check_branch
              %117 = sbr.rel (0) target = $region32
            $region31: #{mss_loss.3} parent=27 // pred_region
              loop: start=0, step=1, limit=1
              $region33: #{mss_loss.3} parent=31 // loop_pre_header
                _
              $region34: #{mss_loss.3} parent=31 // loop_header
                %s119 = sphi 0, %s123
                %p120 = scmp.ge.s32.totalorder %s119, 1
                %s124 = sphi %s113, %s113
                %s125 = sphi %s109, %s109
              $region35: #{mss_loss.3} parent=31 // loop_header_branch
                %122 = sbr.rel (%p120) target = $region39
              $region36: #{mss_loss.3} parent=31 // loop_body
                %v126 = vld [vmem:[%s124] sm:$0xff]
                %127 = vst [vmem:[%s125] sm:$0xff] %v126
                %v128 = vld [vmem:[%s124 + $0x8] sm:$0xff]
                %129 = vst [vmem:[%s125 + $0x8] sm:$0xff] %v128
                %v130 = vld [vmem:[%s124 + $0x10] sm:$0xff]
                %131 = vst [vmem:[%s125 + $0x10] sm:$0xff] %v130
                %v132 = vld [vmem:[%s124 + $0x18] sm:$0xff]
                %133 = vst [vmem:[%s125 + $0x18] sm:$0xff] %v132
                %v134 = vld [vmem:[%s124 + $0x20] sm:$0xff]
                %135 = vst [vmem:[%s125 + $0x20] sm:$0xff] %v134
                %v136 = vld [vmem:[%s124 + $0x28] sm:$0xff]
                %137 = vst [vmem:[%s125 + $0x28] sm:$0xff] %v136
                %v138 = vld [vmem:[%s124 + $0x30] sm:$0xff]
                %139 = vst [vmem:[%s125 + $0x30] sm:$0xff] %v138
                %v140 = vld [vmem:[%s124 + $0x38] sm:$0xff]
                %141 = vst [vmem:[%s125 + $0x38] sm:$0xff] %v140
                %v142 = vld [vmem:[%s124 + $0x40] sm:$0xff]
                %143 = vst [vmem:[%s125 + $0x40] sm:$0xff] %v142
                %v144 = vld [vmem:[%s124 + $0x48] sm:$0xff]
                %145 = vst [vmem:[%s125 + $0x48] sm:$0xff] %v144
                %v146 = vld [vmem:[%s124 + $0xa0] sm:$0xff]
                %147 = vst [vmem:[%s125 + $0x50] sm:$0xff] %v146
                %v148 = vld [vmem:[%s124 + $0xa8] sm:$0xff]
                %149 = vst [vmem:[%s125 + $0x58] sm:$0xff] %v148
                %v150 = vld [vmem:[%s124 + $0xb0] sm:$0xff]
                %151 = vst [vmem:[%s125 + $0x60] sm:$0xff] %v150
                %v152 = vld [vmem:[%s124 + $0xb8] sm:$0xff]
                %153 = vst [vmem:[%s125 + $0x68] sm:$0xff] %v152
                %v154 = vld [vmem:[%s124 + $0xc0] sm:$0xff]
                %155 = vst [vmem:[%s125 + $0x70] sm:$0xff] %v154
                %v156 = vld [vmem:[%s124 + $0xc8] sm:$0xff]
                %157 = vst [vmem:[%s125 + $0x78] sm:$0xff] %v156
                %v158 = vld [vmem:[%s124 + $0xd0] sm:$0xff]
                %159 = vst [vmem:[%s125 + $0x80] sm:$0xff] %v158
                %v160 = vld [vmem:[%s124 + $0xd8] sm:$0xff]
                %161 = vst [vmem:[%s125 + $0x88] sm:$0xff] %v160
                %v162 = vld [vmem:[%s124 + $0xe0] sm:$0xff]
                %163 = vst [vmem:[%s125 + $0x90] sm:$0xff] %v162
                %v164 = vld [vmem:[%s124 + $0xe8] sm:$0xff]
                %165 = vst [vmem:[%s125 + $0x98] sm:$0xff] %v164
              $region37: #{mss_loss.3} parent=31 // loop_footer
                %s123 = sadd.s32 1, %s119
              $region38: #{mss_loss.3} parent=31 // loop_footer_branch
                %118 = sbr.rel target = $region34
              $region39: #{mss_loss.3} parent=31 // loop_exit
                _
            $region32: #{mss_loss.3} parent=27 // pred_fallthru
              _
            // Predicated region
            $region40: #{mss_loss.3} parent=27 // pred_check
              _
            $region41: #{mss_loss.3} parent=27 // pred_check_branch
              %167 = sbr.rel target = $region43
            $region42: #{mss_loss.3} parent=27 // pred_region
              _
            $region43: #{mss_loss.3} parent=27 // pred_fallthru
              _
          $region28: #{mss_loss.3} parent=23 // pred_fallthru
            _
          %168 = vnop
        $region24: #{mss_loss.3} parent=19 // pred_fallthru
          _
      $region20: #{mss_loss.3} parent=5 // pred_fallthru
        _
      %p169 = scmp.le.s32.totalorder 1, %s8
      %p170 = scmp.lt.s32.totalorder %s8, 3
      %p171 = pnand %p169, %p170
      %p172 = pneg %p171
      // Predicated region
      $region44: #{mss_loss.3} parent=5 // pred_check
        _
      $region45: #{mss_loss.3} parent=5 // pred_check_branch
        %174 = sbr.rel (%p171) target = $region47
      $region46: #{mss_loss.3} parent=5 // pred_region
        %s175 = ssub.s32 %s8, 1
        %s176 = sand.u32 %s21, 1
        %s177 = sand.u32 %s21, 1
        %s178 = smul.addr %s177, 160
        %s179 = scalar_lea.vmem [#allocation2], %s178
        // Predicated region
        $region48: #{mss_loss.3} parent=46 // pred_check
          %p180 = pneg %p34
        $region49: #{mss_loss.3} parent=46 // pred_check_branch
          %182 = sbr.rel (%p180) target = $region51
        $region50: #{mss_loss.3} parent=46 // pred_region
          _
        $region51: #{mss_loss.3} parent=46 // pred_fallthru
          _
        %s183 = sand.u32 %s21, 1
        %s184 = sand.u32 %s21, 1
        %s185 = smul.addr %s184, 160
        %s186 = scalar_lea.vmem [#allocation2], %s185
        %p187 = pneg %p34
        %p188 = pneg %p31
        %p189 = pneg %p55
        %p190 = pneg %p52
        %p191 = pneg %p81
        %p192 = pneg %p78
        %p193 = scmp.lt.s32.totalorder %s13, 1
        %s194 = scalar_select %p193, %s13, 1
        %s195 = smul.addr %s194, 2
        %s196 = smul.addr %s195, 2
        %s197 = scalar_lea.vmem %s2, %s196
        %s198 = smul.u32 5, %s13
        %p199 = scmp.lt.s32.totalorder %s13, 1
        %s200 = scalar_select %p199, %s13, 1
        %s201 = smul.addr %s200, 2
        %s202 = smul.addr %s201, 2
        %s203 = scalar_lea.vmem %s2, %s202
        %v204 = vld [vmem:[%s179] sm:$0xff]
        %v205 = vld [vmem:[%s179 + $0x8] sm:$0xff]
        %v206 = vld [vmem:[%s179 + $0x10] sm:$0xff]
        %v207 = vld [vmem:[%s179 + $0x18] sm:$0xff]
        %v208 = vld [vmem:[%s179 + $0x20] sm:$0xff]
        %v209 = vld [vmem:[%s179 + $0x28] sm:$0xff]
        %v210 = vld [vmem:[%s179 + $0x30] sm:$0xff]
        %v211 = vld [vmem:[%s179 + $0x38] sm:$0xff]
        %v212 = vld [vmem:[%s179 + $0x40] sm:$0xff]
        %v213 = vld [vmem:[%s179 + $0x48] sm:$0xff]
        %v214 = vld [vmem:[%s179 + $0x50] sm:$0xff]
        %v215 = vld [vmem:[%s179 + $0x58] sm:$0xff]
        %v216 = vld [vmem:[%s179 + $0x60] sm:$0xff]
        %v217 = vld [vmem:[%s179 + $0x68] sm:$0xff]
        %v218 = vld [vmem:[%s179 + $0x70] sm:$0xff]
        %v219 = vld [vmem:[%s179 + $0x78] sm:$0xff]
        %v220 = vld [vmem:[%s179 + $0x80] sm:$0xff]
        %v221 = vld [vmem:[%s179 + $0x88] sm:$0xff]
        %v222 = vld [vmem:[%s179 + $0x90] sm:$0xff]
        %v223 = vld [vmem:[%s179 + $0x98] sm:$0xff]
        %v224 = vld [vmem:[%s1] sm:$0xff]
        %v225 = vld [vmem:[%s1 + $0x8] sm:$0xff]
        %v226 = vld [vmem:[%s1 + $0x10] sm:$0xff]
        %v227 = vld [vmem:[%s1 + $0x18] sm:$0xff]
        %v228 = vld [vmem:[%s1 + $0x20] sm:$0xff]
        %v229 = vld [vmem:[%s1 + $0x28] sm:$0xff]
        %v230 = vld [vmem:[%s1 + $0x30] sm:$0xff]
        %v231 = vld [vmem:[%s1 + $0x38] sm:$0xff]
        %v232 = vld [vmem:[%s1 + $0x40] sm:$0xff]
        %v233 = vld [vmem:[%s1 + $0x48] sm:$0xff]
        %v234 = vld [vmem:[%s1 + $0x50] sm:$0xff]
        %v235 = vld [vmem:[%s1 + $0x58] sm:$0xff]
        %v236 = vld [vmem:[%s1 + $0x60] sm:$0xff]
        %v237 = vld [vmem:[%s1 + $0x68] sm:$0xff]
        %v238 = vld [vmem:[%s1 + $0x70] sm:$0xff]
        %v239 = vld [vmem:[%s1 + $0x78] sm:$0xff]
        %v240 = vld [vmem:[%s1 + $0x80] sm:$0xff]
        %v241 = vld [vmem:[%s1 + $0x88] sm:$0xff]
        %v242 = vld [vmem:[%s1 + $0x90] sm:$0xff]
        %v243 = vld [vmem:[%s1 + $0x98] sm:$0xff]
        %v244 = vld [vmem:[%s1 + $0xa0] sm:$0xff]
        %v245 = vld [vmem:[%s1 + $0xa8] sm:$0xff]
        %v246 = vld [vmem:[%s1 + $0xb0] sm:$0xff]
        %v247 = vld [vmem:[%s1 + $0xb8] sm:$0xff]
        %v248 = vld [vmem:[%s1 + $0xc0] sm:$0xff]
        %v249 = vld [vmem:[%s1 + $0xc8] sm:$0xff]
        %v250 = vld [vmem:[%s1 + $0xd0] sm:$0xff]
        %v251 = vld [vmem:[%s1 + $0xd8] sm:$0xff]
        %v252 = vld [vmem:[%s1 + $0xe0] sm:$0xff]
        %v253 = vld [vmem:[%s1 + $0xe8] sm:$0xff]
        %v254 = vld [vmem:[%s1 + $0xf0] sm:$0xff]
        %v255 = vld [vmem:[%s1 + $0xf8] sm:$0xff]
        %v256 = vld [vmem:[%s1 + $0x100] sm:$0xff]
        %v257 = vld [vmem:[%s1 + $0x108] sm:$0xff]
        %v258 = vld [vmem:[%s1 + $0x110] sm:$0xff]
        %v259 = vld [vmem:[%s1 + $0x118] sm:$0xff]
        %v260 = vld [vmem:[%s1 + $0x120] sm:$0xff]
        %v261 = vld [vmem:[%s1 + $0x128] sm:$0xff]
        %v262 = vld [vmem:[%s1 + $0x130] sm:$0xff]
        %v263 = vld [vmem:[%s1 + $0x138] sm:$0xff]
        %v264 = vld [vmem:[%s1 + $0x140] sm:$0xff]
        %v265 = vld [vmem:[%s1 + $0x148] sm:$0xff]
        %v266 = vld [vmem:[%s1 + $0x150] sm:$0xff]
        %v267 = vld [vmem:[%s1 + $0x158] sm:$0xff]
        %v268 = vld [vmem:[%s1 + $0x160] sm:$0xff]
        %v269 = vld [vmem:[%s1 + $0x168] sm:$0xff]
        %v270 = vld [vmem:[%s1 + $0x170] sm:$0xff]
        %v271 = vld [vmem:[%s1 + $0x178] sm:$0xff]
        %v272 = vld [vmem:[%s1 + $0x180] sm:$0xff]
        %v273 = vld [vmem:[%s1 + $0x188] sm:$0xff]
        %v274 = vld [vmem:[%s1 + $0x190] sm:$0xff]
        %v275 = vld [vmem:[%s1 + $0x198] sm:$0xff]
        %v276 = vld [vmem:[%s1 + $0x1a0] sm:$0xff]
        %v277 = vld [vmem:[%s1 + $0x1a8] sm:$0xff]
        %v278 = vld [vmem:[%s1 + $0x1b0] sm:$0xff]
        %v279 = vld [vmem:[%s1 + $0x1b8] sm:$0xff]
        %v280 = vld [vmem:[%s1 + $0x1c0] sm:$0xff]
        %v281 = vld [vmem:[%s1 + $0x1c8] sm:$0xff]
        %v282 = vld [vmem:[%s1 + $0x1d0] sm:$0xff]
        %v283 = vld [vmem:[%s1 + $0x1d8] sm:$0xff]
        %v284 = vld [vmem:[%s1 + $0x1e0] sm:$0xff]
        %v285 = vld [vmem:[%s1 + $0x1e8] sm:$0xff]
        %v286 = vld [vmem:[%s1 + $0x1f0] sm:$0xff]
        %v287 = vld [vmem:[%s1 + $0x1f8] sm:$0xff]
        %v288 = vld [vmem:[%s1 + $0x200] sm:$0xff]
        %v289 = vld [vmem:[%s1 + $0x208] sm:$0xff]
        %v290 = vld [vmem:[%s1 + $0x210] sm:$0xff]
        %v291 = vld [vmem:[%s1 + $0x218] sm:$0xff]
        %v292 = vld [vmem:[%s1 + $0x220] sm:$0xff]
        %v293 = vld [vmem:[%s1 + $0x228] sm:$0xff]
        %v294 = vld [vmem:[%s1 + $0x230] sm:$0xff]
        %v295 = vld [vmem:[%s1 + $0x238] sm:$0xff]
        %v296 = vld [vmem:[%s1 + $0x240] sm:$0xff]
        %v297 = vld [vmem:[%s1 + $0x248] sm:$0xff]
        %v298 = vld [vmem:[%s1 + $0x250] sm:$0xff]
        %v299 = vld [vmem:[%s1 + $0x258] sm:$0xff]
        %v300 = vld [vmem:[%s1 + $0x260] sm:$0xff]
        %v301 = vld [vmem:[%s1 + $0x268] sm:$0xff]
        %v302 = vld [vmem:[%s1 + $0x270] sm:$0xff]
        %v303 = vld [vmem:[%s1 + $0x278] sm:$0xff]
        %v304 = vld [vmem:[%s1 + $0x280] sm:$0xff]
        %v305 = vld [vmem:[%s1 + $0x288] sm:$0xff]
        %v306 = vld [vmem:[%s1 + $0x290] sm:$0xff]
        %v307 = vld [vmem:[%s1 + $0x298] sm:$0xff]
        %v308 = vld [vmem:[%s1 + $0x2a0] sm:$0xff]
        %v309 = vld [vmem:[%s1 + $0x2a8] sm:$0xff]
        %v310 = vld [vmem:[%s1 + $0x2b0] sm:$0xff]
        %v311 = vld [vmem:[%s1 + $0x2b8] sm:$0xff]
        %v312 = vld [vmem:[%s1 + $0x2c0] sm:$0xff]
        %v313 = vld [vmem:[%s1 + $0x2c8] sm:$0xff]
        %v314 = vld [vmem:[%s1 + $0x2d0] sm:$0xff]
        %v315 = vld [vmem:[%s1 + $0x2d8] sm:$0xff]
        %v316 = vld [vmem:[%s1 + $0x2e0] sm:$0xff]
        %v317 = vld [vmem:[%s1 + $0x2e8] sm:$0xff]
        %v318 = vld [vmem:[%s1 + $0x2f0] sm:$0xff]
        %v319 = vld [vmem:[%s1 + $0x2f8] sm:$0xff]
        %v320 = vld [vmem:[%s1 + $0x300] sm:$0xff]
        %v321 = vld [vmem:[%s1 + $0x308] sm:$0xff]
        %v322 = vld [vmem:[%s1 + $0x310] sm:$0xff]
        %v323 = vld [vmem:[%s1 + $0x318] sm:$0xff]
        %v324 = vld [vmem:[%s1 + $0x320] sm:$0xff]
        %v325 = vld [vmem:[%s1 + $0x328] sm:$0xff]
        %v326 = vld [vmem:[%s1 + $0x330] sm:$0xff]
        %v327 = vld [vmem:[%s1 + $0x338] sm:$0xff]
        %v328 = vld [vmem:[%s1 + $0x340] sm:$0xff]
        %v329 = vld [vmem:[%s1 + $0x348] sm:$0xff]
        %v330 = vld [vmem:[%s1 + $0x350] sm:$0xff]
        %v331 = vld [vmem:[%s1 + $0x358] sm:$0xff]
        %v332 = vld [vmem:[%s1 + $0x360] sm:$0xff]
        %v333 = vld [vmem:[%s1 + $0x368] sm:$0xff]
        %v334 = vld [vmem:[%s1 + $0x370] sm:$0xff]
        %v335 = vld [vmem:[%s1 + $0x378] sm:$0xff]
        %v336 = vld [vmem:[%s1 + $0x380] sm:$0xff]
        %v337 = vld [vmem:[%s1 + $0x388] sm:$0xff]
        %v338 = vld [vmem:[%s1 + $0x390] sm:$0xff]
        %v339 = vld [vmem:[%s1 + $0x398] sm:$0xff]
        %v340 = vld [vmem:[%s1 + $0x3a0] sm:$0xff]
        %v341 = vld [vmem:[%s1 + $0x3a8] sm:$0xff]
        %v342 = vld [vmem:[%s1 + $0x3b0] sm:$0xff]
        %v343 = vld [vmem:[%s1 + $0x3b8] sm:$0xff]
        %v344 = vld [vmem:[%s1 + $0x3c0] sm:$0xff]
        %v345 = vld [vmem:[%s1 + $0x3c8] sm:$0xff]
        %v346 = vld [vmem:[%s1 + $0x3d0] sm:$0xff]
        %v347 = vld [vmem:[%s1 + $0x3d8] sm:$0xff]
        %v348 = vld [vmem:[%s1 + $0x3e0] sm:$0xff]
        %v349 = vld [vmem:[%s1 + $0x3e8] sm:$0xff]
        %v350 = vld [vmem:[%s1 + $0x3f0] sm:$0xff]
        %v351 = vld [vmem:[%s1 + $0x3f8] sm:$0xff]
        %v372 = vunpack.c.l.b16 %v204
        %v373 = vunpack.c.h.b16 %v204
        %v374 = vunpack.c.l.b16 %v205
        %v375 = vunpack.c.h.b16 %v205
        %v376 = vunpack.c.l.b16 %v206
        %v377 = vunpack.c.h.b16 %v206
        %v378 = vunpack.c.l.b16 %v207
        %v379 = vunpack.c.h.b16 %v207
        %v380 = vunpack.c.l.b16 %v208
        %v381 = vunpack.c.h.b16 %v208
        %v382 = vunpack.c.l.b16 %v209
        %v383 = vunpack.c.h.b16 %v209
        %v384 = vunpack.c.l.b16 %v210
        %v385 = vunpack.c.h.b16 %v210
        %v386 = vunpack.c.l.b16 %v211
        %v387 = vunpack.c.h.b16 %v211
        %v388 = vunpack.c.l.b16 %v212
        %v389 = vunpack.c.h.b16 %v212
        %v390 = vunpack.c.l.b16 %v213
        %v391 = vunpack.c.h.b16 %v213
        %v392 = vunpack.c.l.b16 %v214
        %v393 = vunpack.c.h.b16 %v214
        %v394 = vunpack.c.l.b16 %v215
        %v395 = vunpack.c.h.b16 %v215
        %v396 = vunpack.c.l.b16 %v216
        %v397 = vunpack.c.h.b16 %v216
        %v398 = vunpack.c.l.b16 %v217
        %v399 = vunpack.c.h.b16 %v217
        %v400 = vunpack.c.l.b16 %v218
        %v401 = vunpack.c.h.b16 %v218
        %v402 = vunpack.c.l.b16 %v219
        %v403 = vunpack.c.h.b16 %v219
        %v404 = vunpack.c.l.b16 %v220
        %v405 = vunpack.c.h.b16 %v220
        %v406 = vunpack.c.l.b16 %v221
        %v407 = vunpack.c.h.b16 %v221
        %v408 = vunpack.c.l.b16 %v222
        %v409 = vunpack.c.h.b16 %v222
        %v410 = vunpack.c.l.b16 %v223
        %v411 = vunpack.c.h.b16 %v223
        %v412 = vpack.c.b16 %v376, %v372
        %v413 = vpack.c.b16 %v377, %v373
        %v414 = vpack.c.b16 %v378, %v374
        %v415 = vpack.c.b16 %v379, %v375
        %v416 = vpack.c.b16 %v384, %v380
        %v417 = vpack.c.b16 %v385, %v381
        %v418 = vpack.c.b16 %v386, %v382
        %v419 = vpack.c.b16 %v387, %v383
        %v420 = vpack.c.b16 %v392, %v388
        %v421 = vpack.c.b16 %v393, %v389
        %v422 = vpack.c.b16 %v394, %v390
        %v423 = vpack.c.b16 %v395, %v391
        %v424 = vpack.c.b16 %v400, %v396
        %v425 = vpack.c.b16 %v401, %v397
        %v426 = vpack.c.b16 %v402, %v398
        %v427 = vpack.c.b16 %v403, %v399
        %v428 = vpack.c.b16 %v408, %v404
        %v429 = vpack.c.b16 %v409, %v405
        %v430 = vpack.c.b16 %v410, %v406
        %v431 = vpack.c.b16 %v411, %v407
        %v580 = vunpack.c.l.b16 %v224
        %v581 = vunpack.c.h.b16 %v224
        %v582 = vunpack.c.l.b16 %v225
        %v583 = vunpack.c.h.b16 %v225
        %v584 = vunpack.c.l.b16 %v226
        %v585 = vunpack.c.h.b16 %v226
        %v586 = vunpack.c.l.b16 %v227
        %v587 = vunpack.c.h.b16 %v227
        %v588 = vunpack.c.l.b16 %v228
        %v589 = vunpack.c.h.b16 %v228
        %v590 = vunpack.c.l.b16 %v229
        %v591 = vunpack.c.h.b16 %v229
        %v592 = vunpack.c.l.b16 %v230
        %v593 = vunpack.c.h.b16 %v230
        %v594 = vunpack.c.l.b16 %v231
        %v595 = vunpack.c.h.b16 %v231
        %v596 = vunpack.c.l.b16 %v232
        %v597 = vunpack.c.h.b16 %v232
        %v598 = vunpack.c.l.b16 %v233
        %v599 = vunpack.c.h.b16 %v233
        %v600 = vunpack.c.l.b16 %v234
        %v601 = vunpack.c.h.b16 %v234
        %v602 = vunpack.c.l.b16 %v235
        %v603 = vunpack.c.h.b16 %v235
        %v604 = vunpack.c.l.b16 %v236
        %v605 = vunpack.c.h.b16 %v236
        %v606 = vunpack.c.l.b16 %v237
        %v607 = vunpack.c.h.b16 %v237
        %v608 = vunpack.c.l.b16 %v238
        %v609 = vunpack.c.h.b16 %v238
        %v610 = vunpack.c.l.b16 %v239
        %v611 = vunpack.c.h.b16 %v239
        %v612 = vunpack.c.l.b16 %v240
        %v613 = vunpack.c.h.b16 %v240
        %v614 = vunpack.c.l.b16 %v241
        %v615 = vunpack.c.h.b16 %v241
        %v616 = vunpack.c.l.b16 %v242
        %v617 = vunpack.c.h.b16 %v242
        %v618 = vunpack.c.l.b16 %v243
        %v619 = vunpack.c.h.b16 %v243
        %v620 = vunpack.c.l.b16 %v244
        %v621 = vunpack.c.h.b16 %v244
        %v622 = vunpack.c.l.b16 %v245
        %v623 = vunpack.c.h.b16 %v245
        %v624 = vunpack.c.l.b16 %v246
        %v625 = vunpack.c.h.b16 %v246
        %v626 = vunpack.c.l.b16 %v247
        %v627 = vunpack.c.h.b16 %v247
        %v628 = vunpack.c.l.b16 %v248
        %v629 = vunpack.c.h.b16 %v248
        %v630 = vunpack.c.l.b16 %v249
        %v631 = vunpack.c.h.b16 %v249
        %v632 = vunpack.c.l.b16 %v250
        %v633 = vunpack.c.h.b16 %v250
        %v634 = vunpack.c.l.b16 %v251
        %v635 = vunpack.c.h.b16 %v251
        %v636 = vunpack.c.l.b16 %v252
        %v637 = vunpack.c.h.b16 %v252
        %v638 = vunpack.c.l.b16 %v253
        %v639 = vunpack.c.h.b16 %v253
        %v640 = vunpack.c.l.b16 %v254
        %v641 = vunpack.c.h.b16 %v254
        %v642 = vunpack.c.l.b16 %v255
        %v643 = vunpack.c.h.b16 %v255
        %v644 = vunpack.c.l.b16 %v256
        %v645 = vunpack.c.h.b16 %v256
        %v646 = vunpack.c.l.b16 %v257
        %v647 = vunpack.c.h.b16 %v257
        %v648 = vunpack.c.l.b16 %v258
        %v649 = vunpack.c.h.b16 %v258
        %v650 = vunpack.c.l.b16 %v259
        %v651 = vunpack.c.h.b16 %v259
        %v652 = vunpack.c.l.b16 %v260
        %v653 = vunpack.c.h.b16 %v260
        %v654 = vunpack.c.l.b16 %v261
        %v655 = vunpack.c.h.b16 %v261
        %v656 = vunpack.c.l.b16 %v262
        %v657 = vunpack.c.h.b16 %v262
        %v658 = vunpack.c.l.b16 %v263
        %v659 = vunpack.c.h.b16 %v263
        %v660 = vunpack.c.l.b16 %v264
        %v661 = vunpack.c.h.b16 %v264
        %v662 = vunpack.c.l.b16 %v265
        %v663 = vunpack.c.h.b16 %v265
        %v664 = vunpack.c.l.b16 %v266
        %v665 = vunpack.c.h.b16 %v266
        %v666 = vunpack.c.l.b16 %v267
        %v667 = vunpack.c.h.b16 %v267
        %v668 = vunpack.c.l.b16 %v268
        %v669 = vunpack.c.h.b16 %v268
        %v670 = vunpack.c.l.b16 %v269
        %v671 = vunpack.c.h.b16 %v269
        %v672 = vunpack.c.l.b16 %v270
        %v673 = vunpack.c.h.b16 %v270
        %v674 = vunpack.c.l.b16 %v271
        %v675 = vunpack.c.h.b16 %v271
        %v676 = vunpack.c.l.b16 %v272
        %v677 = vunpack.c.h.b16 %v272
        %v678 = vunpack.c.l.b16 %v273
        %v679 = vunpack.c.h.b16 %v273
        %v680 = vunpack.c.l.b16 %v274
        %v681 = vunpack.c.h.b16 %v274
        %v682 = vunpack.c.l.b16 %v275
        %v683 = vunpack.c.h.b16 %v275
        %v684 = vunpack.c.l.b16 %v276
        %v685 = vunpack.c.h.b16 %v276
        %v686 = vunpack.c.l.b16 %v277
        %v687 = vunpack.c.h.b16 %v277
        %v688 = vunpack.c.l.b16 %v278
        %v689 = vunpack.c.h.b16 %v278
        %v690 = vunpack.c.l.b16 %v279
        %v691 = vunpack.c.h.b16 %v279
        %v692 = vunpack.c.l.b16 %v280
        %v693 = vunpack.c.h.b16 %v280
        %v694 = vunpack.c.l.b16 %v281
        %v695 = vunpack.c.h.b16 %v281
        %v696 = vunpack.c.l.b16 %v282
        %v697 = vunpack.c.h.b16 %v282
        %v698 = vunpack.c.l.b16 %v283
        %v699 = vunpack.c.h.b16 %v283
        %v700 = vunpack.c.l.b16 %v284
        %v701 = vunpack.c.h.b16 %v284
        %v702 = vunpack.c.l.b16 %v285
        %v703 = vunpack.c.h.b16 %v285
        %v704 = vunpack.c.l.b16 %v286
        %v705 = vunpack.c.h.b16 %v286
        %v706 = vunpack.c.l.b16 %v287
        %v707 = vunpack.c.h.b16 %v287
        %v708 = vunpack.c.l.b16 %v288
        %v709 = vunpack.c.h.b16 %v288
        %v710 = vunpack.c.l.b16 %v289
        %v711 = vunpack.c.h.b16 %v289
        %v712 = vunpack.c.l.b16 %v290
        %v713 = vunpack.c.h.b16 %v290
        %v714 = vunpack.c.l.b16 %v291
        %v715 = vunpack.c.h.b16 %v291
        %v716 = vunpack.c.l.b16 %v292
        %v717 = vunpack.c.h.b16 %v292
        %v718 = vunpack.c.l.b16 %v293
        %v719 = vunpack.c.h.b16 %v293
        %v720 = vunpack.c.l.b16 %v294
        %v721 = vunpack.c.h.b16 %v294
        %v722 = vunpack.c.l.b16 %v295
        %v723 = vunpack.c.h.b16 %v295
        %v724 = vunpack.c.l.b16 %v296
        %v725 = vunpack.c.h.b16 %v296
        %v726 = vunpack.c.l.b16 %v297
        %v727 = vunpack.c.h.b16 %v297
        %v728 = vunpack.c.l.b16 %v298
        %v729 = vunpack.c.h.b16 %v298
        %v730 = vunpack.c.l.b16 %v299
        %v731 = vunpack.c.h.b16 %v299
        %v732 = vunpack.c.l.b16 %v300
        %v733 = vunpack.c.h.b16 %v300
        %v734 = vunpack.c.l.b16 %v301
        %v735 = vunpack.c.h.b16 %v301
        %v736 = vunpack.c.l.b16 %v302
        %v737 = vunpack.c.h.b16 %v302
        %v738 = vunpack.c.l.b16 %v303
        %v739 = vunpack.c.h.b16 %v303
        %v740 = vunpack.c.l.b16 %v304
        %v741 = vunpack.c.h.b16 %v304
        %v742 = vunpack.c.l.b16 %v305
        %v743 = vunpack.c.h.b16 %v305
        %v744 = vunpack.c.l.b16 %v306
        %v745 = vunpack.c.h.b16 %v306
        %v746 = vunpack.c.l.b16 %v307
        %v747 = vunpack.c.h.b16 %v307
        %v748 = vunpack.c.l.b16 %v308
        %v749 = vunpack.c.h.b16 %v308
        %v750 = vunpack.c.l.b16 %v309
        %v751 = vunpack.c.h.b16 %v309
        %v752 = vunpack.c.l.b16 %v310
        %v753 = vunpack.c.h.b16 %v310
        %v754 = vunpack.c.l.b16 %v311
        %v755 = vunpack.c.h.b16 %v311
        %v756 = vunpack.c.l.b16 %v312
        %v757 = vunpack.c.h.b16 %v312
        %v758 = vunpack.c.l.b16 %v313
        %v759 = vunpack.c.h.b16 %v313
        %v760 = vunpack.c.l.b16 %v314
        %v761 = vunpack.c.h.b16 %v314
        %v762 = vunpack.c.l.b16 %v315
        %v763 = vunpack.c.h.b16 %v315
        %v764 = vunpack.c.l.b16 %v316
        %v765 = vunpack.c.h.b16 %v316
        %v766 = vunpack.c.l.b16 %v317
        %v767 = vunpack.c.h.b16 %v317
        %v768 = vunpack.c.l.b16 %v318
        %v769 = vunpack.c.h.b16 %v318
        %v770 = vunpack.c.l.b16 %v319
        %v771 = vunpack.c.h.b16 %v319
        %v772 = vunpack.c.l.b16 %v320
        %v773 = vunpack.c.h.b16 %v320
        %v774 = vunpack.c.l.b16 %v321
        %v775 = vunpack.c.h.b16 %v321
        %v776 = vunpack.c.l.b16 %v322
        %v777 = vunpack.c.h.b16 %v322
        %v778 = vunpack.c.l.b16 %v323
        %v779 = vunpack.c.h.b16 %v323
        %v780 = vunpack.c.l.b16 %v324
        %v781 = vunpack.c.h.b16 %v324
        %v782 = vunpack.c.l.b16 %v325
        %v783 = vunpack.c.h.b16 %v325
        %v784 = vunpack.c.l.b16 %v326
        %v785 = vunpack.c.h.b16 %v326
        %v786 = vunpack.c.l.b16 %v327
        %v787 = vunpack.c.h.b16 %v327
        %v788 = vunpack.c.l.b16 %v328
        %v789 = vunpack.c.h.b16 %v328
        %v790 = vunpack.c.l.b16 %v329
        %v791 = vunpack.c.h.b16 %v329
        %v792 = vunpack.c.l.b16 %v330
        %v793 = vunpack.c.h.b16 %v330
        %v794 = vunpack.c.l.b16 %v331
        %v795 = vunpack.c.h.b16 %v331
        %v796 = vunpack.c.l.b16 %v332
        %v797 = vunpack.c.h.b16 %v332
        %v798 = vunpack.c.l.b16 %v333
        %v799 = vunpack.c.h.b16 %v333
        %v800 = vunpack.c.l.b16 %v334
        %v801 = vunpack.c.h.b16 %v334
        %v802 = vunpack.c.l.b16 %v335
        %v803 = vunpack.c.h.b16 %v335
        %v804 = vunpack.c.l.b16 %v336
        %v805 = vunpack.c.h.b16 %v336
        %v806 = vunpack.c.l.b16 %v337
        %v807 = vunpack.c.h.b16 %v337
        %v808 = vunpack.c.l.b16 %v338
        %v809 = vunpack.c.h.b16 %v338
        %v810 = vunpack.c.l.b16 %v339
        %v811 = vunpack.c.h.b16 %v339
        %v812 = vunpack.c.l.b16 %v340
        %v813 = vunpack.c.h.b16 %v340
        %v814 = vunpack.c.l.b16 %v341
        %v815 = vunpack.c.h.b16 %v341
        %v816 = vunpack.c.l.b16 %v342
        %v817 = vunpack.c.h.b16 %v342
        %v818 = vunpack.c.l.b16 %v343
        %v819 = vunpack.c.h.b16 %v343
        %v820 = vunpack.c.l.b16 %v344
        %v821 = vunpack.c.h.b16 %v344
        %v822 = vunpack.c.l.b16 %v345
        %v823 = vunpack.c.h.b16 %v345
        %v824 = vunpack.c.l.b16 %v346
        %v825 = vunpack.c.h.b16 %v346
        %v826 = vunpack.c.l.b16 %v347
        %v827 = vunpack.c.h.b16 %v347
        %v828 = vunpack.c.l.b16 %v348
        %v829 = vunpack.c.h.b16 %v348
        %v830 = vunpack.c.l.b16 %v349
        %v831 = vunpack.c.h.b16 %v349
        %v832 = vunpack.c.l.b16 %v350
        %v833 = vunpack.c.h.b16 %v350
        %v834 = vunpack.c.l.b16 %v351
        %v835 = vunpack.c.h.b16 %v351
        %v836 = vpack.c.b16 %v584, %v580
        %v837 = vpack.c.b16 %v585, %v581
        %v838 = vpack.c.b16 %v586, %v582
        %v839 = vpack.c.b16 %v587, %v583
        %v840 = vpack.c.b16 %v592, %v588
        %v841 = vpack.c.b16 %v593, %v589
        %v842 = vpack.c.b16 %v594, %v590
        %v843 = vpack.c.b16 %v595, %v591
        %v844 = vpack.c.b16 %v600, %v596
        %v845 = vpack.c.b16 %v601, %v597
        %v846 = vpack.c.b16 %v602, %v598
        %v847 = vpack.c.b16 %v603, %v599
        %v848 = vpack.c.b16 %v608, %v604
        %v849 = vpack.c.b16 %v609, %v605
        %v850 = vpack.c.b16 %v610, %v606
        %v851 = vpack.c.b16 %v611, %v607
        %v852 = vpack.c.b16 %v616, %v612
        %v853 = vpack.c.b16 %v617, %v613
        %v854 = vpack.c.b16 %v618, %v614
        %v855 = vpack.c.b16 %v619, %v615
        %v856 = vpack.c.b16 %v624, %v620
        %v857 = vpack.c.b16 %v625, %v621
        %v858 = vpack.c.b16 %v626, %v622
        %v859 = vpack.c.b16 %v627, %v623
        %v860 = vpack.c.b16 %v632, %v628
        %v861 = vpack.c.b16 %v633, %v629
        %v862 = vpack.c.b16 %v634, %v630
        %v863 = vpack.c.b16 %v635, %v631
        %v864 = vpack.c.b16 %v640, %v636
        %v865 = vpack.c.b16 %v641, %v637
        %v866 = vpack.c.b16 %v642, %v638
        %v867 = vpack.c.b16 %v643, %v639
        %v868 = vpack.c.b16 %v648, %v644
        %v869 = vpack.c.b16 %v649, %v645
        %v870 = vpack.c.b16 %v650, %v646
        %v871 = vpack.c.b16 %v651, %v647
        %v872 = vpack.c.b16 %v656, %v652
        %v873 = vpack.c.b16 %v657, %v653
        %v874 = vpack.c.b16 %v658, %v654
        %v875 = vpack.c.b16 %v659, %v655
        %v876 = vpack.c.b16 %v664, %v660
        %v877 = vpack.c.b16 %v665, %v661
        %v878 = vpack.c.b16 %v666, %v662
        %v879 = vpack.c.b16 %v667, %v663
        %v880 = vpack.c.b16 %v672, %v668
        %v881 = vpack.c.b16 %v673, %v669
        %v882 = vpack.c.b16 %v674, %v670
        %v883 = vpack.c.b16 %v675, %v671
        %v884 = vpack.c.b16 %v680, %v676
        %v885 = vpack.c.b16 %v681, %v677
        %v886 = vpack.c.b16 %v682, %v678
        %v887 = vpack.c.b16 %v683, %v679
        %v888 = vpack.c.b16 %v688, %v684
        %v889 = vpack.c.b16 %v689, %v685
        %v890 = vpack.c.b16 %v690, %v686
        %v891 = vpack.c.b16 %v691, %v687
        %v892 = vpack.c.b16 %v696, %v692
        %v893 = vpack.c.b16 %v697, %v693
        %v894 = vpack.c.b16 %v698, %v694
        %v895 = vpack.c.b16 %v699, %v695
        %v896 = vpack.c.b16 %v704, %v700
        %v897 = vpack.c.b16 %v705, %v701
        %v898 = vpack.c.b16 %v706, %v702
        %v899 = vpack.c.b16 %v707, %v703
        %v900 = vpack.c.b16 %v712, %v708
        %v901 = vpack.c.b16 %v713, %v709
        %v902 = vpack.c.b16 %v714, %v710
        %v903 = vpack.c.b16 %v715, %v711
        %v904 = vpack.c.b16 %v720, %v716
        %v905 = vpack.c.b16 %v721, %v717
        %v906 = vpack.c.b16 %v722, %v718
        %v907 = vpack.c.b16 %v723, %v719
        %v908 = vpack.c.b16 %v728, %v724
        %v909 = vpack.c.b16 %v729, %v725
        %v910 = vpack.c.b16 %v730, %v726
        %v911 = vpack.c.b16 %v731, %v727
        %v912 = vpack.c.b16 %v736, %v732
        %v913 = vpack.c.b16 %v737, %v733
        %v914 = vpack.c.b16 %v738, %v734
        %v915 = vpack.c.b16 %v739, %v735
        %v916 = vpack.c.b16 %v744, %v740
        %v917 = vpack.c.b16 %v745, %v741
        %v918 = vpack.c.b16 %v746, %v742
        %v919 = vpack.c.b16 %v747, %v743
        %v920 = vpack.c.b16 %v752, %v748
        %v921 = vpack.c.b16 %v753, %v749
        %v922 = vpack.c.b16 %v754, %v750
        %v923 = vpack.c.b16 %v755, %v751
        %v924 = vpack.c.b16 %v760, %v756
        %v925 = vpack.c.b16 %v761, %v757
        %v926 = vpack.c.b16 %v762, %v758
        %v927 = vpack.c.b16 %v763, %v759
        %v928 = vpack.c.b16 %v768, %v764
        %v929 = vpack.c.b16 %v769, %v765
        %v930 = vpack.c.b16 %v770, %v766
        %v931 = vpack.c.b16 %v771, %v767
        %v932 = vpack.c.b16 %v776, %v772
        %v933 = vpack.c.b16 %v777, %v773
        %v934 = vpack.c.b16 %v778, %v774
        %v935 = vpack.c.b16 %v779, %v775
        %v936 = vpack.c.b16 %v784, %v780
        %v937 = vpack.c.b16 %v785, %v781
        %v938 = vpack.c.b16 %v786, %v782
        %v939 = vpack.c.b16 %v787, %v783
        %v940 = vpack.c.b16 %v792, %v788
        %v941 = vpack.c.b16 %v793, %v789
        %v942 = vpack.c.b16 %v794, %v790
        %v943 = vpack.c.b16 %v795, %v791
        %v944 = vpack.c.b16 %v800, %v796
        %v945 = vpack.c.b16 %v801, %v797
        %v946 = vpack.c.b16 %v802, %v798
        %v947 = vpack.c.b16 %v803, %v799
        %v948 = vpack.c.b16 %v808, %v804
        %v949 = vpack.c.b16 %v809, %v805
        %v950 = vpack.c.b16 %v810, %v806
        %v951 = vpack.c.b16 %v811, %v807
        %v952 = vpack.c.b16 %v816, %v812
        %v953 = vpack.c.b16 %v817, %v813
        %v954 = vpack.c.b16 %v818, %v814
        %v955 = vpack.c.b16 %v819, %v815
        %v956 = vpack.c.b16 %v824, %v820
        %v957 = vpack.c.b16 %v825, %v821
        %v958 = vpack.c.b16 %v826, %v822
        %v959 = vpack.c.b16 %v827, %v823
        %v960 = vpack.c.b16 %v832, %v828
        %v961 = vpack.c.b16 %v833, %v829
        %v962 = vpack.c.b16 %v834, %v830
        %v963 = vpack.c.b16 %v835, %v831
        %1092 = vmatprep.subr.bf16.mxu0 %v865
        %1093 = vmatpush1.bf16.msra.mxu0 %v864
        %1094 = vmatprep.subr.bf16.mxu0 %v861
        %1095 = vmatpush1.bf16.msra.mxu0 %v860
        %1096 = vmatprep.subr.bf16.mxu0 %v857
        %1097 = vmatpush1.bf16.msra.mxu0 %v856
        %1098 = vmatprep.subr.bf16.mxu0 %v853
        %1099 = vmatpush1.bf16.msra.mxu0 %v852
        %1100 = vmatprep.subr.bf16.mxu0 %v849
        %1101 = vmatpush1.bf16.msra.mxu0 %v848
        %1102 = vmatprep.subr.bf16.mxu0 %v845
        %1103 = vmatpush1.bf16.msra.mxu0 %v844
        %1104 = vmatprep.subr.bf16.mxu0 %v841
        %1105 = vmatpush1.bf16.msra.mxu0 %v840
        %1106 = vmatprep.subr.bf16.mxu0 %v837
        %1107 = vmatpush1.bf16.msra.mxu0 %v836
        %1108 = vmatprep.subr.bf16.mxu0 %v897
        %1109 = vmatpush2.bf16.msra.mxu0 %v896
        %1110 = vmatprep.subr.bf16.mxu0 %v893
        %1111 = vmatpush2.bf16.msra.mxu0 %v892
        %1112 = vmatprep.subr.bf16.mxu0 %v889
        %1113 = vmatpush2.bf16.msra.mxu0 %v888
        %1114 = vmatprep.subr.bf16.mxu0 %v885
        %1115 = vmatpush2.bf16.msra.mxu0 %v884
        %1116 = vmatprep.subr.bf16.mxu0 %v881
        %1117 = vmatpush2.bf16.msra.mxu0 %v880
        %1118 = vmatprep.subr.bf16.mxu0 %v877
        %1119 = vmatpush2.bf16.msra.mxu0 %v876
        %1120 = vmatprep.subr.bf16.mxu0 %v873
        %1121 = vmatpush2.bf16.msra.mxu0 %v872
        %1122 = vmatprep.subr.bf16.mxu0 %v869
        %1123 = vmatpush2.bf16.msra.mxu0 %v868
        %1124 = vmatprep.mubr.bf16.mxu0 %v413
        %1125 = vmatmul.mubr.bf16.gmra.mxu0 %v412
        %v1126 = vpop.f32.mrf.mxu0
        %v1127 = vadd.f32 0.0, %v1126
        %v1128 = vpop.f32.mrf.mxu0
        %v1129 = vadd.f32 0.0, %v1128
        %v1130 = vpop.f32.mrf.mxu0
        %v1131 = vadd.f32 0.0, %v1130
        %v1132 = vpop.f32.mrf.mxu0
        %v1133 = vadd.f32 0.0, %v1132
        %1134 = vmatprep.mubr.bf16.mxu0 %v417
        %1135 = vmatmul.mubr.bf16.gmra.mxu0 %v416
        %v1136 = vpop.f32.mrf.mxu0
        %v1137 = vadd.f32 0.0, %v1136
        %v1138 = vpop.f32.mrf.mxu0
        %v1139 = vadd.f32 0.0, %v1138
        %v1140 = vpop.f32.mrf.mxu0
        %v1141 = vadd.f32 0.0, %v1140
        %v1142 = vpop.f32.mrf.mxu0
        %v1143 = vadd.f32 0.0, %v1142
        %1144 = vmatprep.mubr.bf16.mxu0 %v421
        %1145 = vmatmul.mubr.bf16.gmra.mxu0 %v420
        %v1146 = vpop.f32.mrf.mxu0
        %v1147 = vadd.f32 0.0, %v1146
        %v1148 = vpop.f32.mrf.mxu0
        %v1149 = vadd.f32 0.0, %v1148
        %v1150 = vpop.f32.mrf.mxu0
        %v1151 = vadd.f32 0.0, %v1150
        %v1152 = vpop.f32.mrf.mxu0
        %v1153 = vadd.f32 0.0, %v1152
        %1154 = vmatprep.mubr.bf16.mxu0 %v425
        %1155 = vmatmul.mubr.bf16.gmra.mxu0 %v424
        %v1156 = vpop.f32.mrf.mxu0
        %v1157 = vadd.f32 0.0, %v1156
        %v1158 = vpop.f32.mrf.mxu0
        %v1159 = vadd.f32 0.0, %v1158
        %v1160 = vpop.f32.mrf.mxu0
        %v1161 = vadd.f32 0.0, %v1160
        %v1162 = vpop.f32.mrf.mxu0
        %v1163 = vadd.f32 0.0, %v1162
        %1164 = vmatprep.mubr.bf16.mxu0 %v429
        %1165 = vmatmul.mubr.bf16.gmra.mxu0 %v428
        %v1166 = vpop.f32.mrf.mxu0
        %v1167 = vadd.f32 0.0, %v1166
        %v1168 = vpop.f32.mrf.mxu0
        %v1169 = vadd.f32 0.0, %v1168
        %v1170 = vpop.f32.mrf.mxu0
        %v1171 = vadd.f32 0.0, %v1170
        %v1172 = vpop.f32.mrf.mxu0
        %v1173 = vadd.f32 0.0, %v1172
        %1174 = vdwg.mxu0
        %1175 = vmatprep.subr.bf16.mxu0 %v929
        %1176 = vmatpush1.bf16.msra.mxu0 %v928
        %1177 = vmatprep.subr.bf16.mxu0 %v925
        %1178 = vmatpush1.bf16.msra.mxu0 %v924
        %1179 = vmatprep.subr.bf16.mxu0 %v921
        %1180 = vmatpush1.bf16.msra.mxu0 %v920
        %1181 = vmatprep.subr.bf16.mxu0 %v917
        %1182 = vmatpush1.bf16.msra.mxu0 %v916
        %1183 = vmatprep.subr.bf16.mxu0 %v913
        %1184 = vmatpush1.bf16.msra.mxu0 %v912
        %1185 = vmatprep.subr.bf16.mxu0 %v909
        %1186 = vmatpush1.bf16.msra.mxu0 %v908
        %1187 = vmatprep.subr.bf16.mxu0 %v905
        %1188 = vmatpush1.bf16.msra.mxu0 %v904
        %1189 = vmatprep.subr.bf16.mxu0 %v901
        %1190 = vmatpush1.bf16.msra.mxu0 %v900
        %1191 = vmatprep.subr.bf16.mxu0 %v961
        %1192 = vmatpush2.bf16.msra.mxu0 %v960
        %1193 = vmatprep.subr.bf16.mxu0 %v957
        %1194 = vmatpush2.bf16.msra.mxu0 %v956
        %1195 = vmatprep.subr.bf16.mxu0 %v953
        %1196 = vmatpush2.bf16.msra.mxu0 %v952
        %1197 = vmatprep.subr.bf16.mxu0 %v949
        %1198 = vmatpush2.bf16.msra.mxu0 %v948
        %1199 = vmatprep.subr.bf16.mxu0 %v945
        %1200 = vmatpush2.bf16.msra.mxu0 %v944
        %1201 = vmatprep.subr.bf16.mxu0 %v941
        %1202 = vmatpush2.bf16.msra.mxu0 %v940
        %1203 = vmatprep.subr.bf16.mxu0 %v937
        %1204 = vmatpush2.bf16.msra.mxu0 %v936
        %1205 = vmatprep.subr.bf16.mxu0 %v933
        %1206 = vmatpush2.bf16.msra.mxu0 %v932
        %1207 = vmatprep.mubr.bf16.mxu0 %v415
        %1208 = vmatmul.mubr.bf16.gmra.mxu0 %v414
        %v1209 = vpop.f32.mrf.mxu0
        %v1210 = vadd.f32 %v1127, %v1209
        %v1211 = vpop.f32.mrf.mxu0
        %v1212 = vadd.f32 %v1129, %v1211
        %v1213 = vpop.f32.mrf.mxu0
        %v1214 = vadd.f32 %v1131, %v1213
        %v1215 = vpop.f32.mrf.mxu0
        %v1216 = vadd.f32 %v1133, %v1215
        %1217 = vmatprep.mubr.bf16.mxu0 %v419
        %1218 = vmatmul.mubr.bf16.gmra.mxu0 %v418
        %v1219 = vpop.f32.mrf.mxu0
        %v1220 = vadd.f32 %v1137, %v1219
        %v1221 = vpop.f32.mrf.mxu0
        %v1222 = vadd.f32 %v1139, %v1221
        %v1223 = vpop.f32.mrf.mxu0
        %v1224 = vadd.f32 %v1141, %v1223
        %v1225 = vpop.f32.mrf.mxu0
        %v1226 = vadd.f32 %v1143, %v1225
        %1227 = vmatprep.mubr.bf16.mxu0 %v423
        %1228 = vmatmul.mubr.bf16.gmra.mxu0 %v422
        %v1229 = vpop.f32.mrf.mxu0
        %v1230 = vadd.f32 %v1147, %v1229
        %v1231 = vpop.f32.mrf.mxu0
        %v1232 = vadd.f32 %v1149, %v1231
        %v1233 = vpop.f32.mrf.mxu0
        %v1234 = vadd.f32 %v1151, %v1233
        %v1235 = vpop.f32.mrf.mxu0
        %v1236 = vadd.f32 %v1153, %v1235
        %1237 = vmatprep.mubr.bf16.mxu0 %v427
        %1238 = vmatmul.mubr.bf16.gmra.mxu0 %v426
        %v1239 = vpop.f32.mrf.mxu0
        %v1240 = vadd.f32 %v1157, %v1239
        %v1241 = vpop.f32.mrf.mxu0
        %v1242 = vadd.f32 %v1159, %v1241
        %v1243 = vpop.f32.mrf.mxu0
        %v1244 = vadd.f32 %v1161, %v1243
        %v1245 = vpop.f32.mrf.mxu0
        %v1246 = vadd.f32 %v1163, %v1245
        %1247 = vmatprep.mubr.bf16.mxu0 %v431
        %1248 = vmatmul.mubr.bf16.gmra.mxu0 %v430
        %v1249 = vpop.f32.mrf.mxu0
        %v1250 = vadd.f32 %v1167, %v1249
        %v1251 = vpop.f32.mrf.mxu0
        %v1252 = vadd.f32 %v1169, %v1251
        %v1253 = vpop.f32.mrf.mxu0
        %v1254 = vadd.f32 %v1171, %v1253
        %v1255 = vpop.f32.mrf.mxu0
        %v1256 = vadd.f32 %v1173, %v1255
        %1257 = vdwg.mxu0
        %1258 = vmatprep.subr.bf16.mxu0 %v867
        %1259 = vmatpush1.bf16.msra.mxu0 %v866
        %1260 = vmatprep.subr.bf16.mxu0 %v863
        %1261 = vmatpush1.bf16.msra.mxu0 %v862
        %1262 = vmatprep.subr.bf16.mxu0 %v859
        %1263 = vmatpush1.bf16.msra.mxu0 %v858
        %1264 = vmatprep.subr.bf16.mxu0 %v855
        %1265 = vmatpush1.bf16.msra.mxu0 %v854
        %1266 = vmatprep.subr.bf16.mxu0 %v851
        %1267 = vmatpush1.bf16.msra.mxu0 %v850
        %1268 = vmatprep.subr.bf16.mxu0 %v847
        %1269 = vmatpush1.bf16.msra.mxu0 %v846
        %1270 = vmatprep.subr.bf16.mxu0 %v843
        %1271 = vmatpush1.bf16.msra.mxu0 %v842
        %1272 = vmatprep.subr.bf16.mxu0 %v839
        %1273 = vmatpush1.bf16.msra.mxu0 %v838
        %1274 = vmatprep.subr.bf16.mxu0 %v899
        %1275 = vmatpush2.bf16.msra.mxu0 %v898
        %1276 = vmatprep.subr.bf16.mxu0 %v895
        %1277 = vmatpush2.bf16.msra.mxu0 %v894
        %1278 = vmatprep.subr.bf16.mxu0 %v891
        %1279 = vmatpush2.bf16.msra.mxu0 %v890
        %1280 = vmatprep.subr.bf16.mxu0 %v887
        %1281 = vmatpush2.bf16.msra.mxu0 %v886
        %1282 = vmatprep.subr.bf16.mxu0 %v883
        %1283 = vmatpush2.bf16.msra.mxu0 %v882
        %1284 = vmatprep.subr.bf16.mxu0 %v879
        %1285 = vmatpush2.bf16.msra.mxu0 %v878
        %1286 = vmatprep.subr.bf16.mxu0 %v875
        %1287 = vmatpush2.bf16.msra.mxu0 %v874
        %1288 = vmatprep.subr.bf16.mxu0 %v871
        %1289 = vmatpush2.bf16.msra.mxu0 %v870
        %1290 = vmatprep.mubr.bf16.mxu0 %v413
        %1291 = vmatmul.mubr.bf16.gmra.mxu0 %v412
        %v1292 = vpop.f32.mrf.mxu0
        %v1293 = vadd.f32 0.0, %v1292
        %v1294 = vpop.f32.mrf.mxu0
        %v1295 = vadd.f32 0.0, %v1294
        %v1296 = vpop.f32.mrf.mxu0
        %v1297 = vadd.f32 0.0, %v1296
        %v1298 = vpop.f32.mrf.mxu0
        %v1299 = vadd.f32 0.0, %v1298
        %1300 = vmatprep.mubr.bf16.mxu0 %v417
        %1301 = vmatmul.mubr.bf16.gmra.mxu0 %v416
        %v1302 = vpop.f32.mrf.mxu0
        %v1303 = vadd.f32 0.0, %v1302
        %v1304 = vpop.f32.mrf.mxu0
        %v1305 = vadd.f32 0.0, %v1304
        %v1306 = vpop.f32.mrf.mxu0
        %v1307 = vadd.f32 0.0, %v1306
        %v1308 = vpop.f32.mrf.mxu0
        %v1309 = vadd.f32 0.0, %v1308
        %1310 = vmatprep.mubr.bf16.mxu0 %v421
        %1311 = vmatmul.mubr.bf16.gmra.mxu0 %v420
        %v1312 = vpop.f32.mrf.mxu0
        %v1313 = vadd.f32 0.0, %v1312
        %v1314 = vpop.f32.mrf.mxu0
        %v1315 = vadd.f32 0.0, %v1314
        %v1316 = vpop.f32.mrf.mxu0
        %v1317 = vadd.f32 0.0, %v1316
        %v1318 = vpop.f32.mrf.mxu0
        %v1319 = vadd.f32 0.0, %v1318
        %1320 = vmatprep.mubr.bf16.mxu0 %v425
        %1321 = vmatmul.mubr.bf16.gmra.mxu0 %v424
        %v1322 = vpop.f32.mrf.mxu0
        %v1323 = vadd.f32 0.0, %v1322
        %v1324 = vpop.f32.mrf.mxu0
        %v1325 = vadd.f32 0.0, %v1324
        %v1326 = vpop.f32.mrf.mxu0
        %v1327 = vadd.f32 0.0, %v1326
        %v1328 = vpop.f32.mrf.mxu0
        %v1329 = vadd.f32 0.0, %v1328
        %1330 = vmatprep.mubr.bf16.mxu0 %v429
        %1331 = vmatmul.mubr.bf16.gmra.mxu0 %v428
        %v1332 = vpop.f32.mrf.mxu0
        %v1333 = vadd.f32 0.0, %v1332
        %v1334 = vpop.f32.mrf.mxu0
        %v1335 = vadd.f32 0.0, %v1334
        %v1336 = vpop.f32.mrf.mxu0
        %v1337 = vadd.f32 0.0, %v1336
        %v1338 = vpop.f32.mrf.mxu0
        %v1339 = vadd.f32 0.0, %v1338
        %1340 = vdwg.mxu0
        %1341 = vmatprep.subr.bf16.mxu0 %v931
        %1342 = vmatpush1.bf16.msra.mxu0 %v930
        %1343 = vmatprep.subr.bf16.mxu0 %v927
        %1344 = vmatpush1.bf16.msra.mxu0 %v926
        %1345 = vmatprep.subr.bf16.mxu0 %v923
        %1346 = vmatpush1.bf16.msra.mxu0 %v922
        %1347 = vmatprep.subr.bf16.mxu0 %v919
        %1348 = vmatpush1.bf16.msra.mxu0 %v918
        %1349 = vmatprep.subr.bf16.mxu0 %v915
        %1350 = vmatpush1.bf16.msra.mxu0 %v914
        %1351 = vmatprep.subr.bf16.mxu0 %v911
        %1352 = vmatpush1.bf16.msra.mxu0 %v910
        %1353 = vmatprep.subr.bf16.mxu0 %v907
        %1354 = vmatpush1.bf16.msra.mxu0 %v906
        %1355 = vmatprep.subr.bf16.mxu0 %v903
        %1356 = vmatpush1.bf16.msra.mxu0 %v902
        %1357 = vmatprep.subr.bf16.mxu0 %v963
        %1358 = vmatpush2.bf16.msra.mxu0 %v962
        %1359 = vmatprep.subr.bf16.mxu0 %v959
        %1360 = vmatpush2.bf16.msra.mxu0 %v958
        %1361 = vmatprep.subr.bf16.mxu0 %v955
        %1362 = vmatpush2.bf16.msra.mxu0 %v954
        %1363 = vmatprep.subr.bf16.mxu0 %v951
        %1364 = vmatpush2.bf16.msra.mxu0 %v950
        %1365 = vmatprep.subr.bf16.mxu0 %v947
        %1366 = vmatpush2.bf16.msra.mxu0 %v946
        %1367 = vmatprep.subr.bf16.mxu0 %v943
        %1368 = vmatpush2.bf16.msra.mxu0 %v942
        %1369 = vmatprep.subr.bf16.mxu0 %v939
        %1370 = vmatpush2.bf16.msra.mxu0 %v938
        %1371 = vmatprep.subr.bf16.mxu0 %v935
        %1372 = vmatpush2.bf16.msra.mxu0 %v934
        %1373 = vmatprep.mubr.bf16.mxu0 %v415
        %1374 = vmatmul.mubr.bf16.gmra.mxu0 %v414
        %v1375 = vpop.f32.mrf.mxu0
        %v1376 = vadd.f32 %v1293, %v1375
        %v1377 = vpop.f32.mrf.mxu0
        %v1378 = vadd.f32 %v1295, %v1377
        %v1379 = vpop.f32.mrf.mxu0
        %v1380 = vadd.f32 %v1297, %v1379
        %v1381 = vpop.f32.mrf.mxu0
        %v1382 = vadd.f32 %v1299, %v1381
        %1383 = vmatprep.mubr.bf16.mxu0 %v419
        %1384 = vmatmul.mubr.bf16.gmra.mxu0 %v418
        %v1385 = vpop.f32.mrf.mxu0
        %v1386 = vadd.f32 %v1303, %v1385
        %v1387 = vpop.f32.mrf.mxu0
        %v1388 = vadd.f32 %v1305, %v1387
        %v1389 = vpop.f32.mrf.mxu0
        %v1390 = vadd.f32 %v1307, %v1389
        %v1391 = vpop.f32.mrf.mxu0
        %v1392 = vadd.f32 %v1309, %v1391
        %1393 = vmatprep.mubr.bf16.mxu0 %v423
        %1394 = vmatmul.mubr.bf16.gmra.mxu0 %v422
        %v1395 = vpop.f32.mrf.mxu0
        %v1396 = vadd.f32 %v1313, %v1395
        %v1397 = vpop.f32.mrf.mxu0
        %v1398 = vadd.f32 %v1315, %v1397
        %v1399 = vpop.f32.mrf.mxu0
        %v1400 = vadd.f32 %v1317, %v1399
        %v1401 = vpop.f32.mrf.mxu0
        %v1402 = vadd.f32 %v1319, %v1401
        %1403 = vmatprep.mubr.bf16.mxu0 %v427
        %1404 = vmatmul.mubr.bf16.gmra.mxu0 %v426
        %v1405 = vpop.f32.mrf.mxu0
        %v1406 = vadd.f32 %v1323, %v1405
        %v1407 = vpop.f32.mrf.mxu0
        %v1408 = vadd.f32 %v1325, %v1407
        %v1409 = vpop.f32.mrf.mxu0
        %v1410 = vadd.f32 %v1327, %v1409
        %v1411 = vpop.f32.mrf.mxu0
        %v1412 = vadd.f32 %v1329, %v1411
        %1413 = vmatprep.mubr.bf16.mxu0 %v431
        %1414 = vmatmul.mubr.bf16.gmra.mxu0 %v430
        %v1415 = vpop.f32.mrf.mxu0
        %v1416 = vadd.f32 %v1333, %v1415
        %v1417 = vpop.f32.mrf.mxu0
        %v1418 = vadd.f32 %v1335, %v1417
        %v1419 = vpop.f32.mrf.mxu0
        %v1420 = vadd.f32 %v1337, %v1419
        %v1421 = vpop.f32.mrf.mxu0
        %v1422 = vadd.f32 %v1339, %v1421
        %1423 = vdwg.mxu0
        %v1424 = vmul.f32 %v1210, %v1210
        %v1425 = vmul.f32 %v1212, %v1212
        %v1426 = vmul.f32 %v1376, %v1376
        %v1427 = vmul.f32 %v1378, %v1378
        %v1428 = vmul.f32 %v1214, %v1214
        %v1429 = vmul.f32 %v1216, %v1216
        %v1430 = vmul.f32 %v1380, %v1380
        %v1431 = vmul.f32 %v1382, %v1382
        %v1432 = vmul.f32 %v1220, %v1220
        %v1433 = vmul.f32 %v1222, %v1222
        %v1434 = vmul.f32 %v1386, %v1386
        %v1435 = vmul.f32 %v1388, %v1388
        %v1436 = vmul.f32 %v1224, %v1224
        %v1437 = vmul.f32 %v1226, %v1226
        %v1438 = vmul.f32 %v1390, %v1390
        %v1439 = vmul.f32 %v1392, %v1392
        %v1440 = vmul.f32 %v1230, %v1230
        %v1441 = vmul.f32 %v1232, %v1232
        %v1442 = vmul.f32 %v1396, %v1396
        %v1443 = vmul.f32 %v1398, %v1398
        %v1444 = vmul.f32 %v1234, %v1234
        %v1445 = vmul.f32 %v1236, %v1236
        %v1446 = vmul.f32 %v1400, %v1400
        %v1447 = vmul.f32 %v1402, %v1402
        %v1448 = vmul.f32 %v1240, %v1240
        %v1449 = vmul.f32 %v1242, %v1242
        %v1450 = vmul.f32 %v1406, %v1406
        %v1451 = vmul.f32 %v1408, %v1408
        %v1452 = vmul.f32 %v1244, %v1244
        %v1453 = vmul.f32 %v1246, %v1246
        %v1454 = vmul.f32 %v1410, %v1410
        %v1455 = vmul.f32 %v1412, %v1412
        %v1456 = vmul.f32 %v1250, %v1250
        %v1457 = vmul.f32 %v1252, %v1252
        %v1458 = vmul.f32 %v1416, %v1416
        %v1459 = vmul.f32 %v1418, %v1418
        %v1460 = vmul.f32 %v1254, %v1254
        %v1461 = vmul.f32 %v1256, %v1256
        %v1462 = vmul.f32 %v1420, %v1420
        %v1463 = vmul.f32 %v1422, %v1422
        %v1464 = vadd.f32 %v1424, %v1426
        %v1465 = vadd.f32 %v1425, %v1427
        %v1466 = vadd.f32 %v1428, %v1430
        %v1467 = vadd.f32 %v1429, %v1431
        %v1468 = vadd.f32 %v1432, %v1434
        %v1469 = vadd.f32 %v1433, %v1435
        %v1470 = vadd.f32 %v1436, %v1438
        %v1471 = vadd.f32 %v1437, %v1439
        %v1472 = vadd.f32 %v1440, %v1442
        %v1473 = vadd.f32 %v1441, %v1443
        %v1474 = vadd.f32 %v1444, %v1446
        %v1475 = vadd.f32 %v1445, %v1447
        %v1476 = vadd.f32 %v1448, %v1450
        %v1477 = vadd.f32 %v1449, %v1451
        %v1478 = vadd.f32 %v1452, %v1454
        %v1479 = vadd.f32 %v1453, %v1455
        %v1480 = vadd.f32 %v1456, %v1458
        %v1481 = vadd.f32 %v1457, %v1459
        %v1482 = vadd.f32 %v1460, %v1462
        %v1483 = vadd.f32 %v1461, %v1463
        %v1484 = vsub.f32 %v1464, %v1474
        %v1485 = vsub.f32 %v1465, %v1475
        %v1486 = vsub.f32 %v1466, %v1476
        %v1487 = vsub.f32 %v1467, %v1477
        %v1488 = vsub.f32 %v1468, %v1478
        %v1489 = vsub.f32 %v1469, %v1479
        %v1490 = vsub.f32 %v1470, %v1480
        %v1491 = vsub.f32 %v1471, %v1481
        %v1492 = vsub.f32 %v1472, %v1482
        %v1493 = vsub.f32 %v1473, %v1483
        %v1494 = vand.u32 2147483647, %v1484
        %v1495 = vand.u32 2147483647, %v1485
        %v1496 = vand.u32 2147483647, %v1486
        %v1497 = vand.u32 2147483647, %v1487
        %v1498 = vand.u32 2147483647, %v1488
        %v1499 = vand.u32 2147483647, %v1489
        %v1500 = vand.u32 2147483647, %v1490
        %v1501 = vand.u32 2147483647, %v1491
        %v1502 = vand.u32 2147483647, %v1492
        %v1503 = vand.u32 2147483647, %v1493
        %v1504 = vadd.f32 %v1494, %v1496
        %v1505 = vadd.f32 %v1504, %v1498
        %v1506 = vadd.f32 %v1505, %v1500
        %v1507 = vadd.f32 %v1506, %v1502
        %v1508 = vrot.slane %v1507, 4
        %v1509 = vadd.f32 %v1507, %v1508
        %v1510 = vrot.slane %v1509, 2
        %v1511 = vadd.f32 %v1509, %v1510
        %v1512 = vrot.slane %v1511, 1
        %v1513 = vadd.f32 %v1511, %v1512
        %v1514 = vadd.f32 %v1495, %v1497
        %v1515 = vadd.f32 %v1514, %v1499
        %v1516 = vadd.f32 %v1515, %v1501
        %v1517 = vadd.f32 %v1516, %v1503
        %v1518 = vrot.slane %v1517, 4
        %v1519 = vadd.f32 %v1517, %v1518
        %v1520 = vrot.slane %v1519, 2
        %v1521 = vadd.f32 %v1519, %v1520
        %v1522 = vrot.slane %v1521, 1
        %v1523 = vadd.f32 %v1521, %v1522
        %v1524 = vadd.f32 %v1474, 1e-07
        %v1525 = vadd.f32 %v1475, 1e-07
        %v1526 = vadd.f32 %v1476, 1e-07
        %v1527 = vadd.f32 %v1477, 1e-07
        %v1528 = vadd.f32 %v1478, 1e-07
        %v1529 = vadd.f32 %v1479, 1e-07
        %v1530 = vadd.f32 %v1480, 1e-07
        %v1531 = vadd.f32 %v1481, 1e-07
        %v1532 = vadd.f32 %v1482, 1e-07
        %v1533 = vadd.f32 %v1483, 1e-07
        %v1534 = vadd.f32 %v1464, 1e-07
        %v1535 = vadd.f32 %v1465, 1e-07
        %v1536 = vadd.f32 %v1466, 1e-07
        %v1537 = vadd.f32 %v1467, 1e-07
        %v1538 = vadd.f32 %v1468, 1e-07
        %v1539 = vadd.f32 %v1469, 1e-07
        %v1540 = vadd.f32 %v1470, 1e-07
        %v1541 = vadd.f32 %v1471, 1e-07
        %v1542 = vadd.f32 %v1472, 1e-07
        %v1543 = vadd.f32 %v1473, 1e-07
        %v1544 = vrcp.pop %v1534
        %v1545 = vrcp.pop %v1535
        %v1546 = vrcp.pop %v1536
        %v1547 = vrcp.pop %v1537
        %v1548 = vrcp.pop %v1538
        %v1549 = vrcp.pop %v1539
        %v1550 = vrcp.pop %v1540
        %v1551 = vrcp.pop %v1541
        %v1552 = vrcp.pop %v1542
        %v1553 = vrcp.pop %v1543
        %v1554 = vmul.f32 %v1524, %v1544
        %v1555 = vmul.f32 %v1525, %v1545
        %v1556 = vmul.f32 %v1526, %v1546
        %v1557 = vmul.f32 %v1527, %v1547
        %v1558 = vmul.f32 %v1528, %v1548
        %v1559 = vmul.f32 %v1529, %v1549
        %v1560 = vmul.f32 %v1530, %v1550
        %v1561 = vmul.f32 %v1531, %v1551
        %v1562 = vmul.f32 %v1532, %v1552
        %v1563 = vmul.f32 %v1533, %v1553
        %v1564 = vlog2.pop %v1554
        %v1565 = vmul.f32 %v1564, 0.6931472
        %v1566 = vlog2.pop %v1555
        %v1567 = vmul.f32 %v1566, 0.6931472
        %v1568 = vlog2.pop %v1556
        %v1569 = vmul.f32 %v1568, 0.6931472
        %v1570 = vlog2.pop %v1557
        %v1571 = vmul.f32 %v1570, 0.6931472
        %v1572 = vlog2.pop %v1558
        %v1573 = vmul.f32 %v1572, 0.6931472
        %v1574 = vlog2.pop %v1559
        %v1575 = vmul.f32 %v1574, 0.6931472
        %v1576 = vlog2.pop %v1560
        %v1577 = vmul.f32 %v1576, 0.6931472
        %v1578 = vlog2.pop %v1561
        %v1579 = vmul.f32 %v1578, 0.6931472
        %v1580 = vlog2.pop %v1562
        %v1581 = vmul.f32 %v1580, 0.6931472
        %v1582 = vlog2.pop %v1563
        %v1583 = vmul.f32 %v1582, 0.6931472
        %v1584 = vrcp.pop 0.6931472
        %v1585 = vmul.f32 %v1565, %v1584
        %v1586 = vmul.f32 %v1567, %v1584
        %v1587 = vmul.f32 %v1569, %v1584
        %v1588 = vmul.f32 %v1571, %v1584
        %v1589 = vmul.f32 %v1573, %v1584
        %v1590 = vmul.f32 %v1575, %v1584
        %v1591 = vmul.f32 %v1577, %v1584
        %v1592 = vmul.f32 %v1579, %v1584
        %v1593 = vmul.f32 %v1581, %v1584
        %v1594 = vmul.f32 %v1583, %v1584
        %v1595 = vand.u32 2147483647, %v1585
        %v1596 = vand.u32 2147483647, %v1586
        %v1597 = vand.u32 2147483647, %v1587
        %v1598 = vand.u32 2147483647, %v1588
        %v1599 = vand.u32 2147483647, %v1589
        %v1600 = vand.u32 2147483647, %v1590
        %v1601 = vand.u32 2147483647, %v1591
        %v1602 = vand.u32 2147483647, %v1592
        %v1603 = vand.u32 2147483647, %v1593
        %v1604 = vand.u32 2147483647, %v1594
        %v1605 = vadd.f32 %v1595, %v1597
        %v1606 = vadd.f32 %v1605, %v1599
        %v1607 = vadd.f32 %v1606, %v1601
        %v1608 = vadd.f32 %v1607, %v1603
        %v1609 = vrot.slane %v1608, 4
        %v1610 = vadd.f32 %v1608, %v1609
        %v1611 = vrot.slane %v1610, 2
        %v1612 = vadd.f32 %v1610, %v1611
        %v1613 = vrot.slane %v1612, 1
        %v1614 = vadd.f32 %v1612, %v1613
        %v1615 = vadd.f32 %v1596, %v1598
        %v1616 = vadd.f32 %v1615, %v1600
        %v1617 = vadd.f32 %v1616, %v1602
        %v1618 = vadd.f32 %v1617, %v1604
        %v1619 = vrot.slane %v1618, 4
        %v1620 = vadd.f32 %v1618, %v1619
        %v1621 = vrot.slane %v1620, 2
        %v1622 = vadd.f32 %v1620, %v1621
        %v1623 = vrot.slane %v1622, 1
        %v1624 = vadd.f32 %v1622, %v1623
        %vm1625 = vcmask 1040384
        %v1626 = vsel %vm1625, %v1513, %v1614
        %v1627 = vsel %vm1625, %v1523, %v1624
        %v1630 = vcombine.low %v1626, %v1627
        %v1632 = vunpack.c.l.s4 1983009808
        %v1633 = vunpack.c.0.s8 %v1632
        %v1634 = vlaneseq
        %v1635 = vshrl.u32 %v1634, 7
        %v1636 = vsub.s32 %v1633, %v1635
        %v1637 = vrot.slane %v1630, %v1636
        %1639 = vst [vmem:[%s203] sm:$0xf] %v1637
        %p1640 = scmp.lt.s32.totalorder %s13, 1
        %s1641 = scalar_select %p1640, %s13, 1
        %s1642 = smul.addr %s1641, 2
        %s1643 = smul.addr %s1642, 2
        %s1644 = scalar_lea.vmem %s2, %s1643
        // Predicated region
        $region52: #{mss_loss.3} parent=46 // pred_check
          %p1645 = pneg %p78
        $region53: #{mss_loss.3} parent=46 // pred_check_branch
          %1647 = sbr.rel (%p1645) target = $region55
        $region54: #{mss_loss.3} parent=46 // pred_region
          _
        $region55: #{mss_loss.3} parent=46 // pred_fallthru
          _
      $region47: #{mss_loss.3} parent=5 // pred_fallthru
        _
      %p1648 = scmp.le.s32.totalorder 2, %s8
      // Predicated region
      $region56: #{mss_loss.3} parent=5 // pred_check
        %p1649 = pneg %p1648
      $region57: #{mss_loss.3} parent=5 // pred_check_branch
        %1651 = sbr.rel (%p1649) target = $region59
      $region58: #{mss_loss.3} parent=5 // pred_region
        %s1652 = ssub.s32 %s8, 2
        // Predicated region
        $region60: #{mss_loss.3} parent=58 // pred_check
          %p1653 = pneg %p84
        $region61: #{mss_loss.3} parent=58 // pred_check_branch
          %1655 = sbr.rel (%p1653) target = $region63
        $region62: #{mss_loss.3} parent=58 // pred_region
          %p1656 = scmp.lt.s32.totalorder %s14, 1
          %s1657 = scalar_select %p1656, %s14, 1
          %s1658 = smul.addr %s1657, 2
          %s1659 = smul.addr %s1658, 2
          %s1660 = scalar_lea.vmem %s2, %s1659
        $region63: #{mss_loss.3} parent=58 // pred_fallthru
          _
      $region59: #{mss_loss.3} parent=5 // pred_fallthru
        _
    $region6: #{mss_loss.3} parent=1 // loop_footer
      %s12 = sadd.s32 1, %s8
    $region7: #{mss_loss.3} parent=1 // loop_footer_branch
      %7 = sbr.rel target = $region3
    $region8: #{mss_loss.3} parent=1 // loop_exit
      _

</llo_original>
